<compile_context>
chip_gen: v7x
topology: tpu7x:2x2x1
jax: 0.10.0
libtpu: 0.0.40
codegen_flags: <defaults>
</compile_context>

<pallas_src>
import jax
import jax.numpy as jnp
from jax.experimental import pallas as pl
from jax.experimental.pallas import tpu as pltpu

K = 3  # kernel_size=3, padding=1 (GUpsample with use_conv=True)


def _gupsample_kernel(x_ref, w_ref, b_ref, o_ref, xp_ref):
    # x_ref : (1, C, H, W)         one batch element (NCHW, W on lanes), VMEM
    # w_ref : (Cout*C*K*K,)        flattened OIHW conv weights, SMEM scalars
    # b_ref : (Cout,)              bias, SMEM scalars
    # o_ref : (1, Cout, 2H, 2W)    one batch element of the output (NCHW), VMEM
    # xp_ref: (C, 2H+2, 2W+2)      VMEM scratch: upsampled + zero-padded input
    _, C, H, W = x_ref.shape
    Cout = o_ref.shape[1]
    Ho, Wo = 2 * H, 2 * W
    Hp, Wp = Ho + 2, Wo + 2

    # --- fused nearest-2x upsample + zero pad(1), per channel ----------------
    # padded_up = L @ x @ R with constant 0/1 selection matrices:
    #   L[p, i] = 1  iff  p in {2i+1, 2i+2}   (row doubling; rows 0 and Hp-1 stay 0)
    #   R[j, q] = 1  iff  q in {2j+1, 2j+2}   (col doubling; cols 0 and Wp-1 stay 0)
    rp = jax.lax.broadcasted_iota(jnp.int32, (Hp, H), 0)
    ri = jax.lax.broadcasted_iota(jnp.int32, (Hp, H), 1)
    L = jnp.where((rp == 2 * ri + 1) | (rp == 2 * ri + 2), 1.0, 0.0).astype(jnp.float32)
    cj = jax.lax.broadcasted_iota(jnp.int32, (W, Wp), 0)
    cq = jax.lax.broadcasted_iota(jnp.int32, (W, Wp), 1)
    R = jnp.where((cq == 2 * cj + 1) | (cq == 2 * cj + 2), 1.0, 0.0).astype(jnp.float32)

    for ci in range(C):
        plane = x_ref[0, ci].astype(jnp.float32)                          # (H, W)
        up = jnp.dot(L, plane, preferred_element_type=jnp.float32)        # (Hp, W)
        xp_ref[ci] = jnp.dot(up, R, preferred_element_type=jnp.float32)   # (Hp, Wp)

    # --- 3x3 conv (padding already baked into xp) as VPU shift-and-accumulate
    # bias folded into the accumulator init; weights are SMEM scalars.
    accs = [jnp.full((Ho, Wo), b_ref[co], dtype=jnp.float32) for co in range(Cout)]
    for ci in range(C):
        for kh in range(K):
            for kw in range(K):
                win = xp_ref[ci, pl.ds(kh, Ho), pl.ds(kw, Wo)]            # (Ho, Wo)
                for co in range(Cout):
                    wv = w_ref[((co * C + ci) * K + kh) * K + kw]         # SMEM scalar
                    accs[co] = accs[co] + wv * win

    for co in range(Cout):
        o_ref[0, co] = accs[co]


def gupsample_forward(x_nchw, weight_oihw, bias):
    """GUpsample.forward: nearest 2x upsample then Conv2d(k=3, padding=1), fused."""
    B, C, H, W = x_nchw.shape
    Cout = weight_oihw.shape[0]
    Ho, Wo = 2 * H, 2 * W
    Hp, Wp = Ho + 2, Wo + 2

    # Only wrapper work: fold weights/bias into flat f32 SMEM tables (tiny, one-time).
    w_flat = weight_oihw.reshape(-1).astype(jnp.float32)   # OIHW flattened -> (Cout*C*K*K,)
    b_flat = bias.reshape(-1).astype(jnp.float32)          # (Cout,)

    return pl.pallas_call(
        _gupsample_kernel,
        out_shape=jax.ShapeDtypeStruct((B, Cout, Ho, Wo), jnp.float32),
        grid=(B,),
        in_specs=[
            pl.BlockSpec((1, C, H, W), lambda b: (b, 0, 0, 0)),
            pl.BlockSpec(memory_space=pltpu.MemorySpace.SMEM),
            pl.BlockSpec(memory_space=pltpu.MemorySpace.SMEM),
        ],
        out_specs=pl.BlockSpec((1, Cout, Ho, Wo), lambda b: (b, 0, 0, 0)),
        scratch_shapes=[pltpu.VMEM((C, Hp, Wp), jnp.float32)],
        compiler_params=pltpu.CompilerParams(
            dimension_semantics=("parallel",)),
    )(x_nchw, w_flat, b_flat)


if __name__ == "__main__":
    key = jax.random.PRNGKey(0)
    B, C, H, W = 2, 4, 16, 16
    Cout = C  # out_channels defaults to channels in GUpsample

    k_x, k_w, k_b = jax.random.split(key, 3)
    x = jax.random.normal(k_x, (B, C, H, W), jnp.float32)

    # deterministic nn.Conv2d-style init (uniform in +-1/sqrt(fan_in))
    fan_in = C * K * K
    bound = 1.0 / (fan_in ** 0.5)
    weight = jax.random.uniform(k_w, (Cout, C, K, K), jnp.float32, -bound, bound)
    bias = jax.random.uniform(k_b, (Cout,), jnp.float32, -bound, bound)

    y = gupsample_forward(x, weight, bias)
    y = jax.block_until_ready(y)

    # pure-JAX reference of the same forward pass
    xu_ref = jnp.repeat(jnp.repeat(x, 2, axis=2), 2, axis=3)
    y_ref = jax.lax.conv_general_dilated(
        xu_ref, weight, window_strides=(1, 1), padding=((1, 1), (1, 1)),
        dimension_numbers=("NCHW", "OIHW", "NCHW")) + bias[None, :, None, None]

    assert y.shape == (B, Cout, 2 * H, 2 * W), y.shape
    assert jnp.max(jnp.abs(y - y_ref)) < 1e-4, float(jnp.max(jnp.abs(y - y_ref)))
    print("KERNEL_OK")
</pallas_src>

<mosaic_0001>
module attributes {stable_mosaic.version = 11 : i64} {
  func.func @_gupsample_kernel(%arg0: i32, %arg1: memref<1x4x16x16xf32, #tpu.memory_space<vmem>>, %arg2: memref<144xf32, #tpu.memory_space<smem>>, %arg3: memref<4xf32, #tpu.memory_space<smem>>, %arg4: memref<1x4x32x32xf32, #tpu.memory_space<vmem>>, %arg5: memref<4x34x34xf32, #tpu.memory_space<vmem>>) attributes {dimension_semantics = [#tpu.dimension_semantics<parallel>], iteration_bounds = array<i64: 2>, scalar_prefetch = 0 : i64, scratch_operands = 1 : i64, tpu.core_type = #tpu.core_type<tc>, window_params = [{transform_indices = @transform_0, window_bounds = array<i64: 1, 4, 16, 16>}, {transform_indices = @transform_1, window_bounds = array<i64: 144>}, {transform_indices = @transform_2, window_bounds = array<i64: 4>}, {transform_indices = @transform_3, window_bounds = array<i64: 1, 4, 32, 32>}]} {
    %0 = tpu.iota {dimensions = array<i32: 0>} : vector<34x16xi32>
    %1 = tpu.iota {dimensions = array<i32: 1>} : vector<34x16xi32>
    %c2_i32 = arith.constant 2 : i32
    %2 = vector.broadcast %c2_i32 : i32 to vector<34x16xi32>
    %3 = arith.muli %2, %1 : vector<34x16xi32>
    %c1_i32 = arith.constant 1 : i32
    %4 = vector.broadcast %c1_i32 : i32 to vector<34x16xi32>
    %5 = arith.addi %3, %4 : vector<34x16xi32>
    %6 = arith.cmpi eq, %0, %5 : vector<34x16xi32>
    %c2_i32_0 = arith.constant 2 : i32
    %7 = vector.broadcast %c2_i32_0 : i32 to vector<34x16xi32>
    %8 = arith.muli %7, %1 : vector<34x16xi32>
    %c2_i32_1 = arith.constant 2 : i32
    %9 = vector.broadcast %c2_i32_1 : i32 to vector<34x16xi32>
    %10 = arith.addi %8, %9 : vector<34x16xi32>
    %11 = arith.cmpi eq, %0, %10 : vector<34x16xi32>
    %12 = arith.ori %6, %11 : vector<34x16xi1>
    %cst = arith.constant 1.000000e+00 : f32
    %cst_2 = arith.constant 0.000000e+00 : f32
    %13 = vector.broadcast %cst : f32 to vector<34x16xf32>
    %14 = vector.broadcast %cst_2 : f32 to vector<34x16xf32>
    %15 = arith.select %12, %13, %14 : vector<34x16xi1>, vector<34x16xf32>
    %16 = tpu.iota {dimensions = array<i32: 0>} : vector<16x34xi32>
    %17 = tpu.iota {dimensions = array<i32: 1>} : vector<16x34xi32>
    %c2_i32_3 = arith.constant 2 : i32
    %18 = vector.broadcast %c2_i32_3 : i32 to vector<16x34xi32>
    %19 = arith.muli %18, %16 : vector<16x34xi32>
    %c1_i32_4 = arith.constant 1 : i32
    %20 = vector.broadcast %c1_i32_4 : i32 to vector<16x34xi32>
    %21 = arith.addi %19, %20 : vector<16x34xi32>
    %22 = arith.cmpi eq, %17, %21 : vector<16x34xi32>
    %c2_i32_5 = arith.constant 2 : i32
    %23 = vector.broadcast %c2_i32_5 : i32 to vector<16x34xi32>
    %24 = arith.muli %23, %16 : vector<16x34xi32>
    %c2_i32_6 = arith.constant 2 : i32
    %25 = vector.broadcast %c2_i32_6 : i32 to vector<16x34xi32>
    %26 = arith.addi %24, %25 : vector<16x34xi32>
    %27 = arith.cmpi eq, %17, %26 : vector<16x34xi32>
    %28 = arith.ori %22, %27 : vector<16x34xi1>
    %cst_7 = arith.constant 1.000000e+00 : f32
    %cst_8 = arith.constant 0.000000e+00 : f32
    %29 = vector.broadcast %cst_7 : f32 to vector<16x34xf32>
    %30 = vector.broadcast %cst_8 : f32 to vector<16x34xf32>
    %31 = arith.select %28, %29, %30 : vector<16x34xi1>, vector<16x34xf32>
    %c0 = arith.constant 0 : index
    %c0_9 = arith.constant 0 : index
    %c0_10 = arith.constant 0 : index
    %c0_11 = arith.constant 0 : index
    %32 = vector.load %arg1[%c0, %c0_9, %c0_10, %c0_11] : memref<1x4x16x16xf32, #tpu.memory_space<vmem>>, vector<1x1x16x16xf32>
    %33 = vector.shape_cast %32 : vector<1x1x16x16xf32> to vector<16x16xf32>
    %cst_12 = arith.constant dense<0.000000e+00> : vector<34x16xf32>
    %34 = tpu.matmul %15, %33, %cst_12 {dimension_numbers = #tpu.dot_dimension_numbers<[1], [0], [0], [1], [0, 0, 1, 1], [], []>} : vector<34x16xf32>, vector<16x16xf32>, vector<34x16xf32> -> vector<34x16xf32>
    %cst_13 = arith.constant dense<0.000000e+00> : vector<34x34xf32>
    %35 = tpu.matmul %34, %31, %cst_13 {dimension_numbers = #tpu.dot_dimension_numbers<[1], [0], [0], [1], [0, 0, 1, 1], [], []>} : vector<34x16xf32>, vector<16x34xf32>, vector<34x34xf32> -> vector<34x34xf32>
    %c0_14 = arith.constant 0 : index
    %c0_15 = arith.constant 0 : index
    %c0_16 = arith.constant 0 : index
    %36 = vector.load %arg5[%c0_14, %c0_15, %c0_16] : memref<4x34x34xf32, #tpu.memory_space<vmem>>, vector<1x34x34xf32>
    %37 = vector.shape_cast %36 : vector<1x34x34xf32> to vector<34x34xf32>
    %38 = vector.shape_cast %35 : vector<34x34xf32> to vector<1x34x34xf32>
    tpu.vector_store %arg5[%c0_14, %c0_15, %c0_16], %38 {strides = array<i32>} : memref<4x34x34xf32, #tpu.memory_space<vmem>>, vector<1x34x34xf32>,
    %c0_17 = arith.constant 0 : index
    %c1 = arith.constant 1 : index
    %c0_18 = arith.constant 0 : index
    %c0_19 = arith.constant 0 : index
    %39 = vector.load %arg1[%c0_17, %c1, %c0_18, %c0_19] : memref<1x4x16x16xf32, #tpu.memory_space<vmem>>, vector<1x1x16x16xf32>
    %40 = vector.shape_cast %39 : vector<1x1x16x16xf32> to vector<16x16xf32>
    %cst_20 = arith.constant dense<0.000000e+00> : vector<34x16xf32>
    %41 = tpu.matmul %15, %40, %cst_20 {dimension_numbers = #tpu.dot_dimension_numbers<[1], [0], [0], [1], [0, 0, 1, 1], [], []>} : vector<34x16xf32>, vector<16x16xf32>, vector<34x16xf32> -> vector<34x16xf32>
    %cst_21 = arith.constant dense<0.000000e+00> : vector<34x34xf32>
    %42 = tpu.matmul %41, %31, %cst_21 {dimension_numbers = #tpu.dot_dimension_numbers<[1], [0], [0], [1], [0, 0, 1, 1], [], []>} : vector<34x16xf32>, vector<16x34xf32>, vector<34x34xf32> -> vector<34x34xf32>
    %c1_22 = arith.constant 1 : index
    %c0_23 = arith.constant 0 : index
    %c0_24 = arith.constant 0 : index
    %43 = vector.load %arg5[%c1_22, %c0_23, %c0_24] : memref<4x34x34xf32, #tpu.memory_space<vmem>>, vector<1x34x34xf32>
    %44 = vector.shape_cast %43 : vector<1x34x34xf32> to vector<34x34xf32>
    %45 = vector.shape_cast %42 : vector<34x34xf32> to vector<1x34x34xf32>
    tpu.vector_store %arg5[%c1_22, %c0_23, %c0_24], %45 {strides = array<i32>} : memref<4x34x34xf32, #tpu.memory_space<vmem>>, vector<1x34x34xf32>,
    %c0_25 = arith.constant 0 : index
    %c2 = arith.constant 2 : index
    %c0_26 = arith.constant 0 : index
    %c0_27 = arith.constant 0 : index
    %46 = vector.load %arg1[%c0_25, %c2, %c0_26, %c0_27] : memref<1x4x16x16xf32, #tpu.memory_space<vmem>>, vector<1x1x16x16xf32>
    %47 = vector.shape_cast %46 : vector<1x1x16x16xf32> to vector<16x16xf32>
    %cst_28 = arith.constant dense<0.000000e+00> : vector<34x16xf32>
    %48 = tpu.matmul %15, %47, %cst_28 {dimension_numbers = #tpu.dot_dimension_numbers<[1], [0], [0], [1], [0, 0, 1, 1], [], []>} : vector<34x16xf32>, vector<16x16xf32>, vector<34x16xf32> -> vector<34x16xf32>
    %cst_29 = arith.constant dense<0.000000e+00> : vector<34x34xf32>
    %49 = tpu.matmul %48, %31, %cst_29 {dimension_numbers = #tpu.dot_dimension_numbers<[1], [0], [0], [1], [0, 0, 1, 1], [], []>} : vector<34x16xf32>, vector<16x34xf32>, vector<34x34xf32> -> vector<34x34xf32>
    %c2_30 = arith.constant 2 : index
    %c0_31 = arith.constant 0 : index
    %c0_32 = arith.constant 0 : index
    %50 = vector.load %arg5[%c2_30, %c0_31, %c0_32] : memref<4x34x34xf32, #tpu.memory_space<vmem>>, vector<1x34x34xf32>
    %51 = vector.shape_cast %50 : vector<1x34x34xf32> to vector<34x34xf32>
    %52 = vector.shape_cast %49 : vector<34x34xf32> to vector<1x34x34xf32>
    tpu.vector_store %arg5[%c2_30, %c0_31, %c0_32], %52 {strides = array<i32>} : memref<4x34x34xf32, #tpu.memory_space<vmem>>, vector<1x34x34xf32>,
    %c0_33 = arith.constant 0 : index
    %c3 = arith.constant 3 : index
    %c0_34 = arith.constant 0 : index
    %c0_35 = arith.constant 0 : index
    %53 = vector.load %arg1[%c0_33, %c3, %c0_34, %c0_35] : memref<1x4x16x16xf32, #tpu.memory_space<vmem>>, vector<1x1x16x16xf32>
    %54 = vector.shape_cast %53 : vector<1x1x16x16xf32> to vector<16x16xf32>
    %cst_36 = arith.constant dense<0.000000e+00> : vector<34x16xf32>
    %55 = tpu.matmul %15, %54, %cst_36 {dimension_numbers = #tpu.dot_dimension_numbers<[1], [0], [0], [1], [0, 0, 1, 1], [], []>} : vector<34x16xf32>, vector<16x16xf32>, vector<34x16xf32> -> vector<34x16xf32>
    %cst_37 = arith.constant dense<0.000000e+00> : vector<34x34xf32>
    %56 = tpu.matmul %55, %31, %cst_37 {dimension_numbers = #tpu.dot_dimension_numbers<[1], [0], [0], [1], [0, 0, 1, 1], [], []>} : vector<34x16xf32>, vector<16x34xf32>, vector<34x34xf32> -> vector<34x34xf32>
    %c3_38 = arith.constant 3 : index
    %c0_39 = arith.constant 0 : index
    %c0_40 = arith.constant 0 : index
    %57 = vector.load %arg5[%c3_38, %c0_39, %c0_40] : memref<4x34x34xf32, #tpu.memory_space<vmem>>, vector<1x34x34xf32>
    %58 = vector.shape_cast %57 : vector<1x34x34xf32> to vector<34x34xf32>
    %59 = vector.shape_cast %56 : vector<34x34xf32> to vector<1x34x34xf32>
    tpu.vector_store %arg5[%c3_38, %c0_39, %c0_40], %59 {strides = array<i32>} : memref<4x34x34xf32, #tpu.memory_space<vmem>>, vector<1x34x34xf32>,
    %c0_41 = arith.constant 0 : index
    %60 = memref.load %arg3[%c0_41] : memref<4xf32, #tpu.memory_space<smem>>
    %61 = vector.broadcast %60 : f32 to vector<32x32xf32>
    %c1_42 = arith.constant 1 : index
    %62 = memref.load %arg3[%c1_42] : memref<4xf32, #tpu.memory_space<smem>>
    %63 = vector.broadcast %62 : f32 to vector<32x32xf32>
    %c2_43 = arith.constant 2 : index
    %64 = memref.load %arg3[%c2_43] : memref<4xf32, #tpu.memory_space<smem>>
    %65 = vector.broadcast %64 : f32 to vector<32x32xf32>
    %c3_44 = arith.constant 3 : index
    %66 = memref.load %arg3[%c3_44] : memref<4xf32, #tpu.memory_space<smem>>
    %67 = vector.broadcast %66 : f32 to vector<32x32xf32>
    %c0_45 = arith.constant 0 : index
    %c0_46 = arith.constant 0 : index
    %c0_47 = arith.constant 0 : index
    %68 = vector.load %arg5[%c0_45, %c0_46, %c0_47] : memref<4x34x34xf32, #tpu.memory_space<vmem>>, vector<1x32x32xf32>
    %69 = vector.shape_cast %68 : vector<1x32x32xf32> to vector<32x32xf32>
    %c0_48 = arith.constant 0 : index
    %70 = memref.load %arg2[%c0_48] : memref<144xf32, #tpu.memory_space<smem>>
    %71 = vector.broadcast %70 : f32 to vector<32x32xf32>
    %72 = arith.mulf %71, %69 : vector<32x32xf32>
    %73 = arith.addf %61, %72 : vector<32x32xf32>
    %c36 = arith.constant 36 : index
    %74 = memref.load %arg2[%c36] : memref<144xf32, #tpu.memory_space<smem>>
    %75 = vector.broadcast %74 : f32 to vector<32x32xf32>
    %76 = arith.mulf %75, %69 : vector<32x32xf32>
    %77 = arith.addf %63, %76 : vector<32x32xf32>
    %c72 = arith.constant 72 : index
    %78 = memref.load %arg2[%c72] : memref<144xf32, #tpu.memory_space<smem>>
    %79 = vector.broadcast %78 : f32 to vector<32x32xf32>
    %80 = arith.mulf %79, %69 : vector<32x32xf32>
    %81 = arith.addf %65, %80 : vector<32x32xf32>
    %c108 = arith.constant 108 : index
    %82 = memref.load %arg2[%c108] : memref<144xf32, #tpu.memory_space<smem>>
    %83 = vector.broadcast %82 : f32 to vector<32x32xf32>
    %84 = arith.mulf %83, %69 : vector<32x32xf32>
    %85 = arith.addf %67, %84 : vector<32x32xf32>
    %c0_49 = arith.constant 0 : index
    %c0_50 = arith.constant 0 : index
    %c1_51 = arith.constant 1 : index
    %86 = vector.load %arg5[%c0_49, %c0_50, %c1_51] : memref<4x34x34xf32, #tpu.memory_space<vmem>>, vector<1x32x32xf32>
    %87 = vector.shape_cast %86 : vector<1x32x32xf32> to vector<32x32xf32>
    %c1_52 = arith.constant 1 : index
    %88 = memref.load %arg2[%c1_52] : memref<144xf32, #tpu.memory_space<smem>>
    %89 = vector.broadcast %88 : f32 to vector<32x32xf32>
    %90 = arith.mulf %89, %87 : vector<32x32xf32>
    %91 = arith.addf %73, %90 : vector<32x32xf32>
    %c37 = arith.constant 37 : index
    %92 = memref.load %arg2[%c37] : memref<144xf32, #tpu.memory_space<smem>>
    %93 = vector.broadcast %92 : f32 to vector<32x32xf32>
    %94 = arith.mulf %93, %87 : vector<32x32xf32>
    %95 = arith.addf %77, %94 : vector<32x32xf32>
    %c73 = arith.constant 73 : index
    %96 = memref.load %arg2[%c73] : memref<144xf32, #tpu.memory_space<smem>>
    %97 = vector.broadcast %96 : f32 to vector<32x32xf32>
    %98 = arith.mulf %97, %87 : vector<32x32xf32>
    %99 = arith.addf %81, %98 : vector<32x32xf32>
    %c109 = arith.constant 109 : index
    %100 = memref.load %arg2[%c109] : memref<144xf32, #tpu.memory_space<smem>>
    %101 = vector.broadcast %100 : f32 to vector<32x32xf32>
    %102 = arith.mulf %101, %87 : vector<32x32xf32>
    %103 = arith.addf %85, %102 : vector<32x32xf32>
    %c0_53 = arith.constant 0 : index
    %c0_54 = arith.constant 0 : index
    %c2_55 = arith.constant 2 : index
    %104 = vector.load %arg5[%c0_53, %c0_54, %c2_55] : memref<4x34x34xf32, #tpu.memory_space<vmem>>, vector<1x32x32xf32>
    %105 = vector.shape_cast %104 : vector<1x32x32xf32> to vector<32x32xf32>
    %c2_56 = arith.constant 2 : index
    %106 = memref.load %arg2[%c2_56] : memref<144xf32, #tpu.memory_space<smem>>
    %107 = vector.broadcast %106 : f32 to vector<32x32xf32>
    %108 = arith.mulf %107, %105 : vector<32x32xf32>
    %109 = arith.addf %91, %108 : vector<32x32xf32>
    %c38 = arith.constant 38 : index
    %110 = memref.load %arg2[%c38] : memref<144xf32, #tpu.memory_space<smem>>
    %111 = vector.broadcast %110 : f32 to vector<32x32xf32>
    %112 = arith.mulf %111, %105 : vector<32x32xf32>
    %113 = arith.addf %95, %112 : vector<32x32xf32>
    %c74 = arith.constant 74 : index
    %114 = memref.load %arg2[%c74] : memref<144xf32, #tpu.memory_space<smem>>
    %115 = vector.broadcast %114 : f32 to vector<32x32xf32>
    %116 = arith.mulf %115, %105 : vector<32x32xf32>
    %117 = arith.addf %99, %116 : vector<32x32xf32>
    %c110 = arith.constant 110 : index
    %118 = memref.load %arg2[%c110] : memref<144xf32, #tpu.memory_space<smem>>
    %119 = vector.broadcast %118 : f32 to vector<32x32xf32>
    %120 = arith.mulf %119, %105 : vector<32x32xf32>
    %121 = arith.addf %103, %120 : vector<32x32xf32>
    %c0_57 = arith.constant 0 : index
    %c1_58 = arith.constant 1 : index
    %c0_59 = arith.constant 0 : index
    %122 = vector.load %arg5[%c0_57, %c1_58, %c0_59] : memref<4x34x34xf32, #tpu.memory_space<vmem>>, vector<1x32x32xf32>
    %123 = vector.shape_cast %122 : vector<1x32x32xf32> to vector<32x32xf32>
    %c3_60 = arith.constant 3 : index
    %124 = memref.load %arg2[%c3_60] : memref<144xf32, #tpu.memory_space<smem>>
    %125 = vector.broadcast %124 : f32 to vector<32x32xf32>
    %126 = arith.mulf %125, %123 : vector<32x32xf32>
    %127 = arith.addf %109, %126 : vector<32x32xf32>
    %c39 = arith.constant 39 : index
    %128 = memref.load %arg2[%c39] : memref<144xf32, #tpu.memory_space<smem>>
    %129 = vector.broadcast %128 : f32 to vector<32x32xf32>
    %130 = arith.mulf %129, %123 : vector<32x32xf32>
    %131 = arith.addf %113, %130 : vector<32x32xf32>
    %c75 = arith.constant 75 : index
    %132 = memref.load %arg2[%c75] : memref<144xf32, #tpu.memory_space<smem>>
    %133 = vector.broadcast %132 : f32 to vector<32x32xf32>
    %134 = arith.mulf %133, %123 : vector<32x32xf32>
    %135 = arith.addf %117, %134 : vector<32x32xf32>
    %c111 = arith.constant 111 : index
    %136 = memref.load %arg2[%c111] : memref<144xf32, #tpu.memory_space<smem>>
    %137 = vector.broadcast %136 : f32 to vector<32x32xf32>
    %138 = arith.mulf %137, %123 : vector<32x32xf32>
    %139 = arith.addf %121, %138 : vector<32x32xf32>
    %c0_61 = arith.constant 0 : index
    %c1_62 = arith.constant 1 : index
    %c1_63 = arith.constant 1 : index
    %140 = vector.load %arg5[%c0_61, %c1_62, %c1_63] : memref<4x34x34xf32, #tpu.memory_space<vmem>>, vector<1x32x32xf32>
    %141 = vector.shape_cast %140 : vector<1x32x32xf32> to vector<32x32xf32>
    %c4 = arith.constant 4 : index
    %142 = memref.load %arg2[%c4] : memref<144xf32, #tpu.memory_space<smem>>
    %143 = vector.broadcast %142 : f32 to vector<32x32xf32>
    %144 = arith.mulf %143, %141 : vector<32x32xf32>
    %145 = arith.addf %127, %144 : vector<32x32xf32>
    %c40 = arith.constant 40 : index
    %146 = memref.load %arg2[%c40] : memref<144xf32, #tpu.memory_space<smem>>
    %147 = vector.broadcast %146 : f32 to vector<32x32xf32>
    %148 = arith.mulf %147, %141 : vector<32x32xf32>
    %149 = arith.addf %131, %148 : vector<32x32xf32>
    %c76 = arith.constant 76 : index
    %150 = memref.load %arg2[%c76] : memref<144xf32, #tpu.memory_space<smem>>
    %151 = vector.broadcast %150 : f32 to vector<32x32xf32>
    %152 = arith.mulf %151, %141 : vector<32x32xf32>
    %153 = arith.addf %135, %152 : vector<32x32xf32>
    %c112 = arith.constant 112 : index
    %154 = memref.load %arg2[%c112] : memref<144xf32, #tpu.memory_space<smem>>
    %155 = vector.broadcast %154 : f32 to vector<32x32xf32>
    %156 = arith.mulf %155, %141 : vector<32x32xf32>
    %157 = arith.addf %139, %156 : vector<32x32xf32>
    %c0_64 = arith.constant 0 : index
    %c1_65 = arith.constant 1 : index
    %c2_66 = arith.constant 2 : index
    %158 = vector.load %arg5[%c0_64, %c1_65, %c2_66] : memref<4x34x34xf32, #tpu.memory_space<vmem>>, vector<1x32x32xf32>
    %159 = vector.shape_cast %158 : vector<1x32x32xf32> to vector<32x32xf32>
    %c5 = arith.constant 5 : index
    %160 = memref.load %arg2[%c5] : memref<144xf32, #tpu.memory_space<smem>>
    %161 = vector.broadcast %160 : f32 to vector<32x32xf32>
    %162 = arith.mulf %161, %159 : vector<32x32xf32>
    %163 = arith.addf %145, %162 : vector<32x32xf32>
    %c41 = arith.constant 41 : index
    %164 = memref.load %arg2[%c41] : memref<144xf32, #tpu.memory_space<smem>>
    %165 = vector.broadcast %164 : f32 to vector<32x32xf32>
    %166 = arith.mulf %165, %159 : vector<32x32xf32>
    %167 = arith.addf %149, %166 : vector<32x32xf32>
    %c77 = arith.constant 77 : index
    %168 = memref.load %arg2[%c77] : memref<144xf32, #tpu.memory_space<smem>>
    %169 = vector.broadcast %168 : f32 to vector<32x32xf32>
    %170 = arith.mulf %169, %159 : vector<32x32xf32>
    %171 = arith.addf %153, %170 : vector<32x32xf32>
    %c113 = arith.constant 113 : index
    %172 = memref.load %arg2[%c113] : memref<144xf32, #tpu.memory_space<smem>>
    %173 = vector.broadcast %172 : f32 to vector<32x32xf32>
    %174 = arith.mulf %173, %159 : vector<32x32xf32>
    %175 = arith.addf %157, %174 : vector<32x32xf32>
    %c0_67 = arith.constant 0 : index
    %c2_68 = arith.constant 2 : index
    %c0_69 = arith.constant 0 : index
    %176 = vector.load %arg5[%c0_67, %c2_68, %c0_69] : memref<4x34x34xf32, #tpu.memory_space<vmem>>, vector<1x32x32xf32>
    %177 = vector.shape_cast %176 : vector<1x32x32xf32> to vector<32x32xf32>
    %c6 = arith.constant 6 : index
    %178 = memref.load %arg2[%c6] : memref<144xf32, #tpu.memory_space<smem>>
    %179 = vector.broadcast %178 : f32 to vector<32x32xf32>
    %180 = arith.mulf %179, %177 : vector<32x32xf32>
    %181 = arith.addf %163, %180 : vector<32x32xf32>
    %c42 = arith.constant 42 : index
    %182 = memref.load %arg2[%c42] : memref<144xf32, #tpu.memory_space<smem>>
    %183 = vector.broadcast %182 : f32 to vector<32x32xf32>
    %184 = arith.mulf %183, %177 : vector<32x32xf32>
    %185 = arith.addf %167, %184 : vector<32x32xf32>
    %c78 = arith.constant 78 : index
    %186 = memref.load %arg2[%c78] : memref<144xf32, #tpu.memory_space<smem>>
    %187 = vector.broadcast %186 : f32 to vector<32x32xf32>
    %188 = arith.mulf %187, %177 : vector<32x32xf32>
    %189 = arith.addf %171, %188 : vector<32x32xf32>
    %c114 = arith.constant 114 : index
    %190 = memref.load %arg2[%c114] : memref<144xf32, #tpu.memory_space<smem>>
    %191 = vector.broadcast %190 : f32 to vector<32x32xf32>
    %192 = arith.mulf %191, %177 : vector<32x32xf32>
    %193 = arith.addf %175, %192 : vector<32x32xf32>
    %c0_70 = arith.constant 0 : index
    %c2_71 = arith.constant 2 : index
    %c1_72 = arith.constant 1 : index
    %194 = vector.load %arg5[%c0_70, %c2_71, %c1_72] : memref<4x34x34xf32, #tpu.memory_space<vmem>>, vector<1x32x32xf32>
    %195 = vector.shape_cast %194 : vector<1x32x32xf32> to vector<32x32xf32>
    %c7 = arith.constant 7 : index
    %196 = memref.load %arg2[%c7] : memref<144xf32, #tpu.memory_space<smem>>
    %197 = vector.broadcast %196 : f32 to vector<32x32xf32>
    %198 = arith.mulf %197, %195 : vector<32x32xf32>
    %199 = arith.addf %181, %198 : vector<32x32xf32>
    %c43 = arith.constant 43 : index
    %200 = memref.load %arg2[%c43] : memref<144xf32, #tpu.memory_space<smem>>
    %201 = vector.broadcast %200 : f32 to vector<32x32xf32>
    %202 = arith.mulf %201, %195 : vector<32x32xf32>
    %203 = arith.addf %185, %202 : vector<32x32xf32>
    %c79 = arith.constant 79 : index
    %204 = memref.load %arg2[%c79] : memref<144xf32, #tpu.memory_space<smem>>
    %205 = vector.broadcast %204 : f32 to vector<32x32xf32>
    %206 = arith.mulf %205, %195 : vector<32x32xf32>
    %207 = arith.addf %189, %206 : vector<32x32xf32>
    %c115 = arith.constant 115 : index
    %208 = memref.load %arg2[%c115] : memref<144xf32, #tpu.memory_space<smem>>
    %209 = vector.broadcast %208 : f32 to vector<32x32xf32>
    %210 = arith.mulf %209, %195 : vector<32x32xf32>
    %211 = arith.addf %193, %210 : vector<32x32xf32>
    %c0_73 = arith.constant 0 : index
    %c2_74 = arith.constant 2 : index
    %c2_75 = arith.constant 2 : index
    %212 = vector.load %arg5[%c0_73, %c2_74, %c2_75] : memref<4x34x34xf32, #tpu.memory_space<vmem>>, vector<1x32x32xf32>
    %213 = vector.shape_cast %212 : vector<1x32x32xf32> to vector<32x32xf32>
    %c8 = arith.constant 8 : index
    %214 = memref.load %arg2[%c8] : memref<144xf32, #tpu.memory_space<smem>>
    %215 = vector.broadcast %214 : f32 to vector<32x32xf32>
    %216 = arith.mulf %215, %213 : vector<32x32xf32>
    %217 = arith.addf %199, %216 : vector<32x32xf32>
    %c44 = arith.constant 44 : index
    %218 = memref.load %arg2[%c44] : memref<144xf32, #tpu.memory_space<smem>>
    %219 = vector.broadcast %218 : f32 to vector<32x32xf32>
    %220 = arith.mulf %219, %213 : vector<32x32xf32>
    %221 = arith.addf %203, %220 : vector<32x32xf32>
    %c80 = arith.constant 80 : index
    %222 = memref.load %arg2[%c80] : memref<144xf32, #tpu.memory_space<smem>>
    %223 = vector.broadcast %222 : f32 to vector<32x32xf32>
    %224 = arith.mulf %223, %213 : vector<32x32xf32>
    %225 = arith.addf %207, %224 : vector<32x32xf32>
    %c116 = arith.constant 116 : index
    %226 = memref.load %arg2[%c116] : memref<144xf32, #tpu.memory_space<smem>>
    %227 = vector.broadcast %226 : f32 to vector<32x32xf32>
    %228 = arith.mulf %227, %213 : vector<32x32xf32>
    %229 = arith.addf %211, %228 : vector<32x32xf32>
    %c1_76 = arith.constant 1 : index
    %c0_77 = arith.constant 0 : index
    %c0_78 = arith.constant 0 : index
    %230 = vector.load %arg5[%c1_76, %c0_77, %c0_78] : memref<4x34x34xf32, #tpu.memory_space<vmem>>, vector<1x32x32xf32>
    %231 = vector.shape_cast %230 : vector<1x32x32xf32> to vector<32x32xf32>
    %c9 = arith.constant 9 : index
    %232 = memref.load %arg2[%c9] : memref<144xf32, #tpu.memory_space<smem>>
    %233 = vector.broadcast %232 : f32 to vector<32x32xf32>
    %234 = arith.mulf %233, %231 : vector<32x32xf32>
    %235 = arith.addf %217, %234 : vector<32x32xf32>
    %c45 = arith.constant 45 : index
    %236 = memref.load %arg2[%c45] : memref<144xf32, #tpu.memory_space<smem>>
    %237 = vector.broadcast %236 : f32 to vector<32x32xf32>
    %238 = arith.mulf %237, %231 : vector<32x32xf32>
    %239 = arith.addf %221, %238 : vector<32x32xf32>
    %c81 = arith.constant 81 : index
    %240 = memref.load %arg2[%c81] : memref<144xf32, #tpu.memory_space<smem>>
    %241 = vector.broadcast %240 : f32 to vector<32x32xf32>
    %242 = arith.mulf %241, %231 : vector<32x32xf32>
    %243 = arith.addf %225, %242 : vector<32x32xf32>
    %c117 = arith.constant 117 : index
    %244 = memref.load %arg2[%c117] : memref<144xf32, #tpu.memory_space<smem>>
    %245 = vector.broadcast %244 : f32 to vector<32x32xf32>
    %246 = arith.mulf %245, %231 : vector<32x32xf32>
    %247 = arith.addf %229, %246 : vector<32x32xf32>
    %c1_79 = arith.constant 1 : index
    %c0_80 = arith.constant 0 : index
    %c1_81 = arith.constant 1 : index
    %248 = vector.load %arg5[%c1_79, %c0_80, %c1_81] : memref<4x34x34xf32, #tpu.memory_space<vmem>>, vector<1x32x32xf32>
    %249 = vector.shape_cast %248 : vector<1x32x32xf32> to vector<32x32xf32>
    %c10 = arith.constant 10 : index
    %250 = memref.load %arg2[%c10] : memref<144xf32, #tpu.memory_space<smem>>
    %251 = vector.broadcast %250 : f32 to vector<32x32xf32>
    %252 = arith.mulf %251, %249 : vector<32x32xf32>
    %253 = arith.addf %235, %252 : vector<32x32xf32>
    %c46 = arith.constant 46 : index
    %254 = memref.load %arg2[%c46] : memref<144xf32, #tpu.memory_space<smem>>
    %255 = vector.broadcast %254 : f32 to vector<32x32xf32>
    %256 = arith.mulf %255, %249 : vector<32x32xf32>
    %257 = arith.addf %239, %256 : vector<32x32xf32>
    %c82 = arith.constant 82 : index
    %258 = memref.load %arg2[%c82] : memref<144xf32, #tpu.memory_space<smem>>
    %259 = vector.broadcast %258 : f32 to vector<32x32xf32>
    %260 = arith.mulf %259, %249 : vector<32x32xf32>
    %261 = arith.addf %243, %260 : vector<32x32xf32>
    %c118 = arith.constant 118 : index
    %262 = memref.load %arg2[%c118] : memref<144xf32, #tpu.memory_space<smem>>
    %263 = vector.broadcast %262 : f32 to vector<32x32xf32>
    %264 = arith.mulf %263, %249 : vector<32x32xf32>
    %265 = arith.addf %247, %264 : vector<32x32xf32>
    %c1_82 = arith.constant 1 : index
    %c0_83 = arith.constant 0 : index
    %c2_84 = arith.constant 2 : index
    %266 = vector.load %arg5[%c1_82, %c0_83, %c2_84] : memref<4x34x34xf32, #tpu.memory_space<vmem>>, vector<1x32x32xf32>
    %267 = vector.shape_cast %266 : vector<1x32x32xf32> to vector<32x32xf32>
    %c11 = arith.constant 11 : index
    %268 = memref.load %arg2[%c11] : memref<144xf32, #tpu.memory_space<smem>>
    %269 = vector.broadcast %268 : f32 to vector<32x32xf32>
    %270 = arith.mulf %269, %267 : vector<32x32xf32>
    %271 = arith.addf %253, %270 : vector<32x32xf32>
    %c47 = arith.constant 47 : index
    %272 = memref.load %arg2[%c47] : memref<144xf32, #tpu.memory_space<smem>>
    %273 = vector.broadcast %272 : f32 to vector<32x32xf32>
    %274 = arith.mulf %273, %267 : vector<32x32xf32>
    %275 = arith.addf %257, %274 : vector<32x32xf32>
    %c83 = arith.constant 83 : index
    %276 = memref.load %arg2[%c83] : memref<144xf32, #tpu.memory_space<smem>>
    %277 = vector.broadcast %276 : f32 to vector<32x32xf32>
    %278 = arith.mulf %277, %267 : vector<32x32xf32>
    %279 = arith.addf %261, %278 : vector<32x32xf32>
    %c119 = arith.constant 119 : index
    %280 = memref.load %arg2[%c119] : memref<144xf32, #tpu.memory_space<smem>>
    %281 = vector.broadcast %280 : f32 to vector<32x32xf32>
    %282 = arith.mulf %281, %267 : vector<32x32xf32>
    %283 = arith.addf %265, %282 : vector<32x32xf32>
    %c1_85 = arith.constant 1 : index
    %c1_86 = arith.constant 1 : index
    %c0_87 = arith.constant 0 : index
    %284 = vector.load %arg5[%c1_85, %c1_86, %c0_87] : memref<4x34x34xf32, #tpu.memory_space<vmem>>, vector<1x32x32xf32>
    %285 = vector.shape_cast %284 : vector<1x32x32xf32> to vector<32x32xf32>
    %c12 = arith.constant 12 : index
    %286 = memref.load %arg2[%c12] : memref<144xf32, #tpu.memory_space<smem>>
    %287 = vector.broadcast %286 : f32 to vector<32x32xf32>
    %288 = arith.mulf %287, %285 : vector<32x32xf32>
    %289 = arith.addf %271, %288 : vector<32x32xf32>
    %c48 = arith.constant 48 : index
    %290 = memref.load %arg2[%c48] : memref<144xf32, #tpu.memory_space<smem>>
    %291 = vector.broadcast %290 : f32 to vector<32x32xf32>
    %292 = arith.mulf %291, %285 : vector<32x32xf32>
    %293 = arith.addf %275, %292 : vector<32x32xf32>
    %c84 = arith.constant 84 : index
    %294 = memref.load %arg2[%c84] : memref<144xf32, #tpu.memory_space<smem>>
    %295 = vector.broadcast %294 : f32 to vector<32x32xf32>
    %296 = arith.mulf %295, %285 : vector<32x32xf32>
    %297 = arith.addf %279, %296 : vector<32x32xf32>
    %c120 = arith.constant 120 : index
    %298 = memref.load %arg2[%c120] : memref<144xf32, #tpu.memory_space<smem>>
    %299 = vector.broadcast %298 : f32 to vector<32x32xf32>
    %300 = arith.mulf %299, %285 : vector<32x32xf32>
    %301 = arith.addf %283, %300 : vector<32x32xf32>
    %c1_88 = arith.constant 1 : index
    %c1_89 = arith.constant 1 : index
    %c1_90 = arith.constant 1 : index
    %302 = vector.load %arg5[%c1_88, %c1_89, %c1_90] : memref<4x34x34xf32, #tpu.memory_space<vmem>>, vector<1x32x32xf32>
    %303 = vector.shape_cast %302 : vector<1x32x32xf32> to vector<32x32xf32>
    %c13 = arith.constant 13 : index
    %304 = memref.load %arg2[%c13] : memref<144xf32, #tpu.memory_space<smem>>
    %305 = vector.broadcast %304 : f32 to vector<32x32xf32>
    %306 = arith.mulf %305, %303 : vector<32x32xf32>
    %307 = arith.addf %289, %306 : vector<32x32xf32>
    %c49 = arith.constant 49 : index
    %308 = memref.load %arg2[%c49] : memref<144xf32, #tpu.memory_space<smem>>
    %309 = vector.broadcast %308 : f32 to vector<32x32xf32>
    %310 = arith.mulf %309, %303 : vector<32x32xf32>
    %311 = arith.addf %293, %310 : vector<32x32xf32>
    %c85 = arith.constant 85 : index
    %312 = memref.load %arg2[%c85] : memref<144xf32, #tpu.memory_space<smem>>
    %313 = vector.broadcast %312 : f32 to vector<32x32xf32>
    %314 = arith.mulf %313, %303 : vector<32x32xf32>
    %315 = arith.addf %297, %314 : vector<32x32xf32>
    %c121 = arith.constant 121 : index
    %316 = memref.load %arg2[%c121] : memref<144xf32, #tpu.memory_space<smem>>
    %317 = vector.broadcast %316 : f32 to vector<32x32xf32>
    %318 = arith.mulf %317, %303 : vector<32x32xf32>
    %319 = arith.addf %301, %318 : vector<32x32xf32>
    %c1_91 = arith.constant 1 : index
    %c1_92 = arith.constant 1 : index
    %c2_93 = arith.constant 2 : index
    %320 = vector.load %arg5[%c1_91, %c1_92, %c2_93] : memref<4x34x34xf32, #tpu.memory_space<vmem>>, vector<1x32x32xf32>
    %321 = vector.shape_cast %320 : vector<1x32x32xf32> to vector<32x32xf32>
    %c14 = arith.constant 14 : index
    %322 = memref.load %arg2[%c14] : memref<144xf32, #tpu.memory_space<smem>>
    %323 = vector.broadcast %322 : f32 to vector<32x32xf32>
    %324 = arith.mulf %323, %321 : vector<32x32xf32>
    %325 = arith.addf %307, %324 : vector<32x32xf32>
    %c50 = arith.constant 50 : index
    %326 = memref.load %arg2[%c50] : memref<144xf32, #tpu.memory_space<smem>>
    %327 = vector.broadcast %326 : f32 to vector<32x32xf32>
    %328 = arith.mulf %327, %321 : vector<32x32xf32>
    %329 = arith.addf %311, %328 : vector<32x32xf32>
    %c86 = arith.constant 86 : index
    %330 = memref.load %arg2[%c86] : memref<144xf32, #tpu.memory_space<smem>>
    %331 = vector.broadcast %330 : f32 to vector<32x32xf32>
    %332 = arith.mulf %331, %321 : vector<32x32xf32>
    %333 = arith.addf %315, %332 : vector<32x32xf32>
    %c122 = arith.constant 122 : index
    %334 = memref.load %arg2[%c122] : memref<144xf32, #tpu.memory_space<smem>>
    %335 = vector.broadcast %334 : f32 to vector<32x32xf32>
    %336 = arith.mulf %335, %321 : vector<32x32xf32>
    %337 = arith.addf %319, %336 : vector<32x32xf32>
    %c1_94 = arith.constant 1 : index
    %c2_95 = arith.constant 2 : index
    %c0_96 = arith.constant 0 : index
    %338 = vector.load %arg5[%c1_94, %c2_95, %c0_96] : memref<4x34x34xf32, #tpu.memory_space<vmem>>, vector<1x32x32xf32>
    %339 = vector.shape_cast %338 : vector<1x32x32xf32> to vector<32x32xf32>
    %c15 = arith.constant 15 : index
    %340 = memref.load %arg2[%c15] : memref<144xf32, #tpu.memory_space<smem>>
    %341 = vector.broadcast %340 : f32 to vector<32x32xf32>
    %342 = arith.mulf %341, %339 : vector<32x32xf32>
    %343 = arith.addf %325, %342 : vector<32x32xf32>
    %c51 = arith.constant 51 : index
    %344 = memref.load %arg2[%c51] : memref<144xf32, #tpu.memory_space<smem>>
    %345 = vector.broadcast %344 : f32 to vector<32x32xf32>
    %346 = arith.mulf %345, %339 : vector<32x32xf32>
    %347 = arith.addf %329, %346 : vector<32x32xf32>
    %c87 = arith.constant 87 : index
    %348 = memref.load %arg2[%c87] : memref<144xf32, #tpu.memory_space<smem>>
    %349 = vector.broadcast %348 : f32 to vector<32x32xf32>
    %350 = arith.mulf %349, %339 : vector<32x32xf32>
    %351 = arith.addf %333, %350 : vector<32x32xf32>
    %c123 = arith.constant 123 : index
    %352 = memref.load %arg2[%c123] : memref<144xf32, #tpu.memory_space<smem>>
    %353 = vector.broadcast %352 : f32 to vector<32x32xf32>
    %354 = arith.mulf %353, %339 : vector<32x32xf32>
    %355 = arith.addf %337, %354 : vector<32x32xf32>
    %c1_97 = arith.constant 1 : index
    %c2_98 = arith.constant 2 : index
    %c1_99 = arith.constant 1 : index
    %356 = vector.load %arg5[%c1_97, %c2_98, %c1_99] : memref<4x34x34xf32, #tpu.memory_space<vmem>>, vector<1x32x32xf32>
    %357 = vector.shape_cast %356 : vector<1x32x32xf32> to vector<32x32xf32>
    %c16 = arith.constant 16 : index
    %358 = memref.load %arg2[%c16] : memref<144xf32, #tpu.memory_space<smem>>
    %359 = vector.broadcast %358 : f32 to vector<32x32xf32>
    %360 = arith.mulf %359, %357 : vector<32x32xf32>
    %361 = arith.addf %343, %360 : vector<32x32xf32>
    %c52 = arith.constant 52 : index
    %362 = memref.load %arg2[%c52] : memref<144xf32, #tpu.memory_space<smem>>
    %363 = vector.broadcast %362 : f32 to vector<32x32xf32>
    %364 = arith.mulf %363, %357 : vector<32x32xf32>
    %365 = arith.addf %347, %364 : vector<32x32xf32>
    %c88 = arith.constant 88 : index
    %366 = memref.load %arg2[%c88] : memref<144xf32, #tpu.memory_space<smem>>
    %367 = vector.broadcast %366 : f32 to vector<32x32xf32>
    %368 = arith.mulf %367, %357 : vector<32x32xf32>
    %369 = arith.addf %351, %368 : vector<32x32xf32>
    %c124 = arith.constant 124 : index
    %370 = memref.load %arg2[%c124] : memref<144xf32, #tpu.memory_space<smem>>
    %371 = vector.broadcast %370 : f32 to vector<32x32xf32>
    %372 = arith.mulf %371, %357 : vector<32x32xf32>
    %373 = arith.addf %355, %372 : vector<32x32xf32>
    %c1_100 = arith.constant 1 : index
    %c2_101 = arith.constant 2 : index
    %c2_102 = arith.constant 2 : index
    %374 = vector.load %arg5[%c1_100, %c2_101, %c2_102] : memref<4x34x34xf32, #tpu.memory_space<vmem>>, vector<1x32x32xf32>
    %375 = vector.shape_cast %374 : vector<1x32x32xf32> to vector<32x32xf32>
    %c17 = arith.constant 17 : index
    %376 = memref.load %arg2[%c17] : memref<144xf32, #tpu.memory_space<smem>>
    %377 = vector.broadcast %376 : f32 to vector<32x32xf32>
    %378 = arith.mulf %377, %375 : vector<32x32xf32>
    %379 = arith.addf %361, %378 : vector<32x32xf32>
    %c53 = arith.constant 53 : index
    %380 = memref.load %arg2[%c53] : memref<144xf32, #tpu.memory_space<smem>>
    %381 = vector.broadcast %380 : f32 to vector<32x32xf32>
    %382 = arith.mulf %381, %375 : vector<32x32xf32>
    %383 = arith.addf %365, %382 : vector<32x32xf32>
    %c89 = arith.constant 89 : index
    %384 = memref.load %arg2[%c89] : memref<144xf32, #tpu.memory_space<smem>>
    %385 = vector.broadcast %384 : f32 to vector<32x32xf32>
    %386 = arith.mulf %385, %375 : vector<32x32xf32>
    %387 = arith.addf %369, %386 : vector<32x32xf32>
    %c125 = arith.constant 125 : index
    %388 = memref.load %arg2[%c125] : memref<144xf32, #tpu.memory_space<smem>>
    %389 = vector.broadcast %388 : f32 to vector<32x32xf32>
    %390 = arith.mulf %389, %375 : vector<32x32xf32>
    %391 = arith.addf %373, %390 : vector<32x32xf32>
    %c2_103 = arith.constant 2 : index
    %c0_104 = arith.constant 0 : index
    %c0_105 = arith.constant 0 : index
    %392 = vector.load %arg5[%c2_103, %c0_104, %c0_105] : memref<4x34x34xf32, #tpu.memory_space<vmem>>, vector<1x32x32xf32>
    %393 = vector.shape_cast %392 : vector<1x32x32xf32> to vector<32x32xf32>
    %c18 = arith.constant 18 : index
    %394 = memref.load %arg2[%c18] : memref<144xf32, #tpu.memory_space<smem>>
    %395 = vector.broadcast %394 : f32 to vector<32x32xf32>
    %396 = arith.mulf %395, %393 : vector<32x32xf32>
    %397 = arith.addf %379, %396 : vector<32x32xf32>
    %c54 = arith.constant 54 : index
    %398 = memref.load %arg2[%c54] : memref<144xf32, #tpu.memory_space<smem>>
    %399 = vector.broadcast %398 : f32 to vector<32x32xf32>
    %400 = arith.mulf %399, %393 : vector<32x32xf32>
    %401 = arith.addf %383, %400 : vector<32x32xf32>
    %c90 = arith.constant 90 : index
    %402 = memref.load %arg2[%c90] : memref<144xf32, #tpu.memory_space<smem>>
    %403 = vector.broadcast %402 : f32 to vector<32x32xf32>
    %404 = arith.mulf %403, %393 : vector<32x32xf32>
    %405 = arith.addf %387, %404 : vector<32x32xf32>
    %c126 = arith.constant 126 : index
    %406 = memref.load %arg2[%c126] : memref<144xf32, #tpu.memory_space<smem>>
    %407 = vector.broadcast %406 : f32 to vector<32x32xf32>
    %408 = arith.mulf %407, %393 : vector<32x32xf32>
    %409 = arith.addf %391, %408 : vector<32x32xf32>
    %c2_106 = arith.constant 2 : index
    %c0_107 = arith.constant 0 : index
    %c1_108 = arith.constant 1 : index
    %410 = vector.load %arg5[%c2_106, %c0_107, %c1_108] : memref<4x34x34xf32, #tpu.memory_space<vmem>>, vector<1x32x32xf32>
    %411 = vector.shape_cast %410 : vector<1x32x32xf32> to vector<32x32xf32>
    %c19 = arith.constant 19 : index
    %412 = memref.load %arg2[%c19] : memref<144xf32, #tpu.memory_space<smem>>
    %413 = vector.broadcast %412 : f32 to vector<32x32xf32>
    %414 = arith.mulf %413, %411 : vector<32x32xf32>
    %415 = arith.addf %397, %414 : vector<32x32xf32>
    %c55 = arith.constant 55 : index
    %416 = memref.load %arg2[%c55] : memref<144xf32, #tpu.memory_space<smem>>
    %417 = vector.broadcast %416 : f32 to vector<32x32xf32>
    %418 = arith.mulf %417, %411 : vector<32x32xf32>
    %419 = arith.addf %401, %418 : vector<32x32xf32>
    %c91 = arith.constant 91 : index
    %420 = memref.load %arg2[%c91] : memref<144xf32, #tpu.memory_space<smem>>
    %421 = vector.broadcast %420 : f32 to vector<32x32xf32>
    %422 = arith.mulf %421, %411 : vector<32x32xf32>
    %423 = arith.addf %405, %422 : vector<32x32xf32>
    %c127 = arith.constant 127 : index
    %424 = memref.load %arg2[%c127] : memref<144xf32, #tpu.memory_space<smem>>
    %425 = vector.broadcast %424 : f32 to vector<32x32xf32>
    %426 = arith.mulf %425, %411 : vector<32x32xf32>
    %427 = arith.addf %409, %426 : vector<32x32xf32>
    %c2_109 = arith.constant 2 : index
    %c0_110 = arith.constant 0 : index
    %c2_111 = arith.constant 2 : index
    %428 = vector.load %arg5[%c2_109, %c0_110, %c2_111] : memref<4x34x34xf32, #tpu.memory_space<vmem>>, vector<1x32x32xf32>
    %429 = vector.shape_cast %428 : vector<1x32x32xf32> to vector<32x32xf32>
    %c20 = arith.constant 20 : index
    %430 = memref.load %arg2[%c20] : memref<144xf32, #tpu.memory_space<smem>>
    %431 = vector.broadcast %430 : f32 to vector<32x32xf32>
    %432 = arith.mulf %431, %429 : vector<32x32xf32>
    %433 = arith.addf %415, %432 : vector<32x32xf32>
    %c56 = arith.constant 56 : index
    %434 = memref.load %arg2[%c56] : memref<144xf32, #tpu.memory_space<smem>>
    %435 = vector.broadcast %434 : f32 to vector<32x32xf32>
    %436 = arith.mulf %435, %429 : vector<32x32xf32>
    %437 = arith.addf %419, %436 : vector<32x32xf32>
    %c92 = arith.constant 92 : index
    %438 = memref.load %arg2[%c92] : memref<144xf32, #tpu.memory_space<smem>>
    %439 = vector.broadcast %438 : f32 to vector<32x32xf32>
    %440 = arith.mulf %439, %429 : vector<32x32xf32>
    %441 = arith.addf %423, %440 : vector<32x32xf32>
    %c128 = arith.constant 128 : index
    %442 = memref.load %arg2[%c128] : memref<144xf32, #tpu.memory_space<smem>>
    %443 = vector.broadcast %442 : f32 to vector<32x32xf32>
    %444 = arith.mulf %443, %429 : vector<32x32xf32>
    %445 = arith.addf %427, %444 : vector<32x32xf32>
    %c2_112 = arith.constant 2 : index
    %c1_113 = arith.constant 1 : index
    %c0_114 = arith.constant 0 : index
    %446 = vector.load %arg5[%c2_112, %c1_113, %c0_114] : memref<4x34x34xf32, #tpu.memory_space<vmem>>, vector<1x32x32xf32>
    %447 = vector.shape_cast %446 : vector<1x32x32xf32> to vector<32x32xf32>
    %c21 = arith.constant 21 : index
    %448 = memref.load %arg2[%c21] : memref<144xf32, #tpu.memory_space<smem>>
    %449 = vector.broadcast %448 : f32 to vector<32x32xf32>
    %450 = arith.mulf %449, %447 : vector<32x32xf32>
    %451 = arith.addf %433, %450 : vector<32x32xf32>
    %c57 = arith.constant 57 : index
    %452 = memref.load %arg2[%c57] : memref<144xf32, #tpu.memory_space<smem>>
    %453 = vector.broadcast %452 : f32 to vector<32x32xf32>
    %454 = arith.mulf %453, %447 : vector<32x32xf32>
    %455 = arith.addf %437, %454 : vector<32x32xf32>
    %c93 = arith.constant 93 : index
    %456 = memref.load %arg2[%c93] : memref<144xf32, #tpu.memory_space<smem>>
    %457 = vector.broadcast %456 : f32 to vector<32x32xf32>
    %458 = arith.mulf %457, %447 : vector<32x32xf32>
    %459 = arith.addf %441, %458 : vector<32x32xf32>
    %c129 = arith.constant 129 : index
    %460 = memref.load %arg2[%c129] : memref<144xf32, #tpu.memory_space<smem>>
    %461 = vector.broadcast %460 : f32 to vector<32x32xf32>
    %462 = arith.mulf %461, %447 : vector<32x32xf32>
    %463 = arith.addf %445, %462 : vector<32x32xf32>
    %c2_115 = arith.constant 2 : index
    %c1_116 = arith.constant 1 : index
    %c1_117 = arith.constant 1 : index
    %464 = vector.load %arg5[%c2_115, %c1_116, %c1_117] : memref<4x34x34xf32, #tpu.memory_space<vmem>>, vector<1x32x32xf32>
    %465 = vector.shape_cast %464 : vector<1x32x32xf32> to vector<32x32xf32>
    %c22 = arith.constant 22 : index
    %466 = memref.load %arg2[%c22] : memref<144xf32, #tpu.memory_space<smem>>
    %467 = vector.broadcast %466 : f32 to vector<32x32xf32>
    %468 = arith.mulf %467, %465 : vector<32x32xf32>
    %469 = arith.addf %451, %468 : vector<32x32xf32>
    %c58 = arith.constant 58 : index
    %470 = memref.load %arg2[%c58] : memref<144xf32, #tpu.memory_space<smem>>
    %471 = vector.broadcast %470 : f32 to vector<32x32xf32>
    %472 = arith.mulf %471, %465 : vector<32x32xf32>
    %473 = arith.addf %455, %472 : vector<32x32xf32>
    %c94 = arith.constant 94 : index
    %474 = memref.load %arg2[%c94] : memref<144xf32, #tpu.memory_space<smem>>
    %475 = vector.broadcast %474 : f32 to vector<32x32xf32>
    %476 = arith.mulf %475, %465 : vector<32x32xf32>
    %477 = arith.addf %459, %476 : vector<32x32xf32>
    %c130 = arith.constant 130 : index
    %478 = memref.load %arg2[%c130] : memref<144xf32, #tpu.memory_space<smem>>
    %479 = vector.broadcast %478 : f32 to vector<32x32xf32>
    %480 = arith.mulf %479, %465 : vector<32x32xf32>
    %481 = arith.addf %463, %480 : vector<32x32xf32>
    %c2_118 = arith.constant 2 : index
    %c1_119 = arith.constant 1 : index
    %c2_120 = arith.constant 2 : index
    %482 = vector.load %arg5[%c2_118, %c1_119, %c2_120] : memref<4x34x34xf32, #tpu.memory_space<vmem>>, vector<1x32x32xf32>
    %483 = vector.shape_cast %482 : vector<1x32x32xf32> to vector<32x32xf32>
    %c23 = arith.constant 23 : index
    %484 = memref.load %arg2[%c23] : memref<144xf32, #tpu.memory_space<smem>>
    %485 = vector.broadcast %484 : f32 to vector<32x32xf32>
    %486 = arith.mulf %485, %483 : vector<32x32xf32>
    %487 = arith.addf %469, %486 : vector<32x32xf32>
    %c59 = arith.constant 59 : index
    %488 = memref.load %arg2[%c59] : memref<144xf32, #tpu.memory_space<smem>>
    %489 = vector.broadcast %488 : f32 to vector<32x32xf32>
    %490 = arith.mulf %489, %483 : vector<32x32xf32>
    %491 = arith.addf %473, %490 : vector<32x32xf32>
    %c95 = arith.constant 95 : index
    %492 = memref.load %arg2[%c95] : memref<144xf32, #tpu.memory_space<smem>>
    %493 = vector.broadcast %492 : f32 to vector<32x32xf32>
    %494 = arith.mulf %493, %483 : vector<32x32xf32>
    %495 = arith.addf %477, %494 : vector<32x32xf32>
    %c131 = arith.constant 131 : index
    %496 = memref.load %arg2[%c131] : memref<144xf32, #tpu.memory_space<smem>>
    %497 = vector.broadcast %496 : f32 to vector<32x32xf32>
    %498 = arith.mulf %497, %483 : vector<32x32xf32>
    %499 = arith.addf %481, %498 : vector<32x32xf32>
    %c2_121 = arith.constant 2 : index
    %c2_122 = arith.constant 2 : index
    %c0_123 = arith.constant 0 : index
    %500 = vector.load %arg5[%c2_121, %c2_122, %c0_123] : memref<4x34x34xf32, #tpu.memory_space<vmem>>, vector<1x32x32xf32>
    %501 = vector.shape_cast %500 : vector<1x32x32xf32> to vector<32x32xf32>
    %c24 = arith.constant 24 : index
    %502 = memref.load %arg2[%c24] : memref<144xf32, #tpu.memory_space<smem>>
    %503 = vector.broadcast %502 : f32 to vector<32x32xf32>
    %504 = arith.mulf %503, %501 : vector<32x32xf32>
    %505 = arith.addf %487, %504 : vector<32x32xf32>
    %c60 = arith.constant 60 : index
    %506 = memref.load %arg2[%c60] : memref<144xf32, #tpu.memory_space<smem>>
    %507 = vector.broadcast %506 : f32 to vector<32x32xf32>
    %508 = arith.mulf %507, %501 : vector<32x32xf32>
    %509 = arith.addf %491, %508 : vector<32x32xf32>
    %c96 = arith.constant 96 : index
    %510 = memref.load %arg2[%c96] : memref<144xf32, #tpu.memory_space<smem>>
    %511 = vector.broadcast %510 : f32 to vector<32x32xf32>
    %512 = arith.mulf %511, %501 : vector<32x32xf32>
    %513 = arith.addf %495, %512 : vector<32x32xf32>
    %c132 = arith.constant 132 : index
    %514 = memref.load %arg2[%c132] : memref<144xf32, #tpu.memory_space<smem>>
    %515 = vector.broadcast %514 : f32 to vector<32x32xf32>
    %516 = arith.mulf %515, %501 : vector<32x32xf32>
    %517 = arith.addf %499, %516 : vector<32x32xf32>
    %c2_124 = arith.constant 2 : index
    %c2_125 = arith.constant 2 : index
    %c1_126 = arith.constant 1 : index
    %518 = vector.load %arg5[%c2_124, %c2_125, %c1_126] : memref<4x34x34xf32, #tpu.memory_space<vmem>>, vector<1x32x32xf32>
    %519 = vector.shape_cast %518 : vector<1x32x32xf32> to vector<32x32xf32>
    %c25 = arith.constant 25 : index
    %520 = memref.load %arg2[%c25] : memref<144xf32, #tpu.memory_space<smem>>
    %521 = vector.broadcast %520 : f32 to vector<32x32xf32>
    %522 = arith.mulf %521, %519 : vector<32x32xf32>
    %523 = arith.addf %505, %522 : vector<32x32xf32>
    %c61 = arith.constant 61 : index
    %524 = memref.load %arg2[%c61] : memref<144xf32, #tpu.memory_space<smem>>
    %525 = vector.broadcast %524 : f32 to vector<32x32xf32>
    %526 = arith.mulf %525, %519 : vector<32x32xf32>
    %527 = arith.addf %509, %526 : vector<32x32xf32>
    %c97 = arith.constant 97 : index
    %528 = memref.load %arg2[%c97] : memref<144xf32, #tpu.memory_space<smem>>
    %529 = vector.broadcast %528 : f32 to vector<32x32xf32>
    %530 = arith.mulf %529, %519 : vector<32x32xf32>
    %531 = arith.addf %513, %530 : vector<32x32xf32>
    %c133 = arith.constant 133 : index
    %532 = memref.load %arg2[%c133] : memref<144xf32, #tpu.memory_space<smem>>
    %533 = vector.broadcast %532 : f32 to vector<32x32xf32>
    %534 = arith.mulf %533, %519 : vector<32x32xf32>
    %535 = arith.addf %517, %534 : vector<32x32xf32>
    %c2_127 = arith.constant 2 : index
    %c2_128 = arith.constant 2 : index
    %c2_129 = arith.constant 2 : index
    %536 = vector.load %arg5[%c2_127, %c2_128, %c2_129] : memref<4x34x34xf32, #tpu.memory_space<vmem>>, vector<1x32x32xf32>
    %537 = vector.shape_cast %536 : vector<1x32x32xf32> to vector<32x32xf32>
    %c26 = arith.constant 26 : index
    %538 = memref.load %arg2[%c26] : memref<144xf32, #tpu.memory_space<smem>>
    %539 = vector.broadcast %538 : f32 to vector<32x32xf32>
    %540 = arith.mulf %539, %537 : vector<32x32xf32>
    %541 = arith.addf %523, %540 : vector<32x32xf32>
    %c62 = arith.constant 62 : index
    %542 = memref.load %arg2[%c62] : memref<144xf32, #tpu.memory_space<smem>>
    %543 = vector.broadcast %542 : f32 to vector<32x32xf32>
    %544 = arith.mulf %543, %537 : vector<32x32xf32>
    %545 = arith.addf %527, %544 : vector<32x32xf32>
    %c98 = arith.constant 98 : index
    %546 = memref.load %arg2[%c98] : memref<144xf32, #tpu.memory_space<smem>>
    %547 = vector.broadcast %546 : f32 to vector<32x32xf32>
    %548 = arith.mulf %547, %537 : vector<32x32xf32>
    %549 = arith.addf %531, %548 : vector<32x32xf32>
    %c134 = arith.constant 134 : index
    %550 = memref.load %arg2[%c134] : memref<144xf32, #tpu.memory_space<smem>>
    %551 = vector.broadcast %550 : f32 to vector<32x32xf32>
    %552 = arith.mulf %551, %537 : vector<32x32xf32>
    %553 = arith.addf %535, %552 : vector<32x32xf32>
    %c3_130 = arith.constant 3 : index
    %c0_131 = arith.constant 0 : index
    %c0_132 = arith.constant 0 : index
    %554 = vector.load %arg5[%c3_130, %c0_131, %c0_132] : memref<4x34x34xf32, #tpu.memory_space<vmem>>, vector<1x32x32xf32>
    %555 = vector.shape_cast %554 : vector<1x32x32xf32> to vector<32x32xf32>
    %c27 = arith.constant 27 : index
    %556 = memref.load %arg2[%c27] : memref<144xf32, #tpu.memory_space<smem>>
    %557 = vector.broadcast %556 : f32 to vector<32x32xf32>
    %558 = arith.mulf %557, %555 : vector<32x32xf32>
    %559 = arith.addf %541, %558 : vector<32x32xf32>
    %c63 = arith.constant 63 : index
    %560 = memref.load %arg2[%c63] : memref<144xf32, #tpu.memory_space<smem>>
    %561 = vector.broadcast %560 : f32 to vector<32x32xf32>
    %562 = arith.mulf %561, %555 : vector<32x32xf32>
    %563 = arith.addf %545, %562 : vector<32x32xf32>
    %c99 = arith.constant 99 : index
    %564 = memref.load %arg2[%c99] : memref<144xf32, #tpu.memory_space<smem>>
    %565 = vector.broadcast %564 : f32 to vector<32x32xf32>
    %566 = arith.mulf %565, %555 : vector<32x32xf32>
    %567 = arith.addf %549, %566 : vector<32x32xf32>
    %c135 = arith.constant 135 : index
    %568 = memref.load %arg2[%c135] : memref<144xf32, #tpu.memory_space<smem>>
    %569 = vector.broadcast %568 : f32 to vector<32x32xf32>
    %570 = arith.mulf %569, %555 : vector<32x32xf32>
    %571 = arith.addf %553, %570 : vector<32x32xf32>
    %c3_133 = arith.constant 3 : index
    %c0_134 = arith.constant 0 : index
    %c1_135 = arith.constant 1 : index
    %572 = vector.load %arg5[%c3_133, %c0_134, %c1_135] : memref<4x34x34xf32, #tpu.memory_space<vmem>>, vector<1x32x32xf32>
    %573 = vector.shape_cast %572 : vector<1x32x32xf32> to vector<32x32xf32>
    %c28 = arith.constant 28 : index
    %574 = memref.load %arg2[%c28] : memref<144xf32, #tpu.memory_space<smem>>
    %575 = vector.broadcast %574 : f32 to vector<32x32xf32>
    %576 = arith.mulf %575, %573 : vector<32x32xf32>
    %577 = arith.addf %559, %576 : vector<32x32xf32>
    %c64 = arith.constant 64 : index
    %578 = memref.load %arg2[%c64] : memref<144xf32, #tpu.memory_space<smem>>
    %579 = vector.broadcast %578 : f32 to vector<32x32xf32>
    %580 = arith.mulf %579, %573 : vector<32x32xf32>
    %581 = arith.addf %563, %580 : vector<32x32xf32>
    %c100 = arith.constant 100 : index
    %582 = memref.load %arg2[%c100] : memref<144xf32, #tpu.memory_space<smem>>
    %583 = vector.broadcast %582 : f32 to vector<32x32xf32>
    %584 = arith.mulf %583, %573 : vector<32x32xf32>
    %585 = arith.addf %567, %584 : vector<32x32xf32>
    %c136 = arith.constant 136 : index
    %586 = memref.load %arg2[%c136] : memref<144xf32, #tpu.memory_space<smem>>
    %587 = vector.broadcast %586 : f32 to vector<32x32xf32>
    %588 = arith.mulf %587, %573 : vector<32x32xf32>
    %589 = arith.addf %571, %588 : vector<32x32xf32>
    %c3_136 = arith.constant 3 : index
    %c0_137 = arith.constant 0 : index
    %c2_138 = arith.constant 2 : index
    %590 = vector.load %arg5[%c3_136, %c0_137, %c2_138] : memref<4x34x34xf32, #tpu.memory_space<vmem>>, vector<1x32x32xf32>
    %591 = vector.shape_cast %590 : vector<1x32x32xf32> to vector<32x32xf32>
    %c29 = arith.constant 29 : index
    %592 = memref.load %arg2[%c29] : memref<144xf32, #tpu.memory_space<smem>>
    %593 = vector.broadcast %592 : f32 to vector<32x32xf32>
    %594 = arith.mulf %593, %591 : vector<32x32xf32>
    %595 = arith.addf %577, %594 : vector<32x32xf32>
    %c65 = arith.constant 65 : index
    %596 = memref.load %arg2[%c65] : memref<144xf32, #tpu.memory_space<smem>>
    %597 = vector.broadcast %596 : f32 to vector<32x32xf32>
    %598 = arith.mulf %597, %591 : vector<32x32xf32>
    %599 = arith.addf %581, %598 : vector<32x32xf32>
    %c101 = arith.constant 101 : index
    %600 = memref.load %arg2[%c101] : memref<144xf32, #tpu.memory_space<smem>>
    %601 = vector.broadcast %600 : f32 to vector<32x32xf32>
    %602 = arith.mulf %601, %591 : vector<32x32xf32>
    %603 = arith.addf %585, %602 : vector<32x32xf32>
    %c137 = arith.constant 137 : index
    %604 = memref.load %arg2[%c137] : memref<144xf32, #tpu.memory_space<smem>>
    %605 = vector.broadcast %604 : f32 to vector<32x32xf32>
    %606 = arith.mulf %605, %591 : vector<32x32xf32>
    %607 = arith.addf %589, %606 : vector<32x32xf32>
    %c3_139 = arith.constant 3 : index
    %c1_140 = arith.constant 1 : index
    %c0_141 = arith.constant 0 : index
    %608 = vector.load %arg5[%c3_139, %c1_140, %c0_141] : memref<4x34x34xf32, #tpu.memory_space<vmem>>, vector<1x32x32xf32>
    %609 = vector.shape_cast %608 : vector<1x32x32xf32> to vector<32x32xf32>
    %c30 = arith.constant 30 : index
    %610 = memref.load %arg2[%c30] : memref<144xf32, #tpu.memory_space<smem>>
    %611 = vector.broadcast %610 : f32 to vector<32x32xf32>
    %612 = arith.mulf %611, %609 : vector<32x32xf32>
    %613 = arith.addf %595, %612 : vector<32x32xf32>
    %c66 = arith.constant 66 : index
    %614 = memref.load %arg2[%c66] : memref<144xf32, #tpu.memory_space<smem>>
    %615 = vector.broadcast %614 : f32 to vector<32x32xf32>
    %616 = arith.mulf %615, %609 : vector<32x32xf32>
    %617 = arith.addf %599, %616 : vector<32x32xf32>
    %c102 = arith.constant 102 : index
    %618 = memref.load %arg2[%c102] : memref<144xf32, #tpu.memory_space<smem>>
    %619 = vector.broadcast %618 : f32 to vector<32x32xf32>
    %620 = arith.mulf %619, %609 : vector<32x32xf32>
    %621 = arith.addf %603, %620 : vector<32x32xf32>
    %c138 = arith.constant 138 : index
    %622 = memref.load %arg2[%c138] : memref<144xf32, #tpu.memory_space<smem>>
    %623 = vector.broadcast %622 : f32 to vector<32x32xf32>
    %624 = arith.mulf %623, %609 : vector<32x32xf32>
    %625 = arith.addf %607, %624 : vector<32x32xf32>
    %c3_142 = arith.constant 3 : index
    %c1_143 = arith.constant 1 : index
    %c1_144 = arith.constant 1 : index
    %626 = vector.load %arg5[%c3_142, %c1_143, %c1_144] : memref<4x34x34xf32, #tpu.memory_space<vmem>>, vector<1x32x32xf32>
    %627 = vector.shape_cast %626 : vector<1x32x32xf32> to vector<32x32xf32>
    %c31 = arith.constant 31 : index
    %628 = memref.load %arg2[%c31] : memref<144xf32, #tpu.memory_space<smem>>
    %629 = vector.broadcast %628 : f32 to vector<32x32xf32>
    %630 = arith.mulf %629, %627 : vector<32x32xf32>
    %631 = arith.addf %613, %630 : vector<32x32xf32>
    %c67 = arith.constant 67 : index
    %632 = memref.load %arg2[%c67] : memref<144xf32, #tpu.memory_space<smem>>
    %633 = vector.broadcast %632 : f32 to vector<32x32xf32>
    %634 = arith.mulf %633, %627 : vector<32x32xf32>
    %635 = arith.addf %617, %634 : vector<32x32xf32>
    %c103 = arith.constant 103 : index
    %636 = memref.load %arg2[%c103] : memref<144xf32, #tpu.memory_space<smem>>
    %637 = vector.broadcast %636 : f32 to vector<32x32xf32>
    %638 = arith.mulf %637, %627 : vector<32x32xf32>
    %639 = arith.addf %621, %638 : vector<32x32xf32>
    %c139 = arith.constant 139 : index
    %640 = memref.load %arg2[%c139] : memref<144xf32, #tpu.memory_space<smem>>
    %641 = vector.broadcast %640 : f32 to vector<32x32xf32>
    %642 = arith.mulf %641, %627 : vector<32x32xf32>
    %643 = arith.addf %625, %642 : vector<32x32xf32>
    %c3_145 = arith.constant 3 : index
    %c1_146 = arith.constant 1 : index
    %c2_147 = arith.constant 2 : index
    %644 = vector.load %arg5[%c3_145, %c1_146, %c2_147] : memref<4x34x34xf32, #tpu.memory_space<vmem>>, vector<1x32x32xf32>
    %645 = vector.shape_cast %644 : vector<1x32x32xf32> to vector<32x32xf32>
    %c32 = arith.constant 32 : index
    %646 = memref.load %arg2[%c32] : memref<144xf32, #tpu.memory_space<smem>>
    %647 = vector.broadcast %646 : f32 to vector<32x32xf32>
    %648 = arith.mulf %647, %645 : vector<32x32xf32>
    %649 = arith.addf %631, %648 : vector<32x32xf32>
    %c68 = arith.constant 68 : index
    %650 = memref.load %arg2[%c68] : memref<144xf32, #tpu.memory_space<smem>>
    %651 = vector.broadcast %650 : f32 to vector<32x32xf32>
    %652 = arith.mulf %651, %645 : vector<32x32xf32>
    %653 = arith.addf %635, %652 : vector<32x32xf32>
    %c104 = arith.constant 104 : index
    %654 = memref.load %arg2[%c104] : memref<144xf32, #tpu.memory_space<smem>>
    %655 = vector.broadcast %654 : f32 to vector<32x32xf32>
    %656 = arith.mulf %655, %645 : vector<32x32xf32>
    %657 = arith.addf %639, %656 : vector<32x32xf32>
    %c140 = arith.constant 140 : index
    %658 = memref.load %arg2[%c140] : memref<144xf32, #tpu.memory_space<smem>>
    %659 = vector.broadcast %658 : f32 to vector<32x32xf32>
    %660 = arith.mulf %659, %645 : vector<32x32xf32>
    %661 = arith.addf %643, %660 : vector<32x32xf32>
    %c3_148 = arith.constant 3 : index
    %c2_149 = arith.constant 2 : index
    %c0_150 = arith.constant 0 : index
    %662 = vector.load %arg5[%c3_148, %c2_149, %c0_150] : memref<4x34x34xf32, #tpu.memory_space<vmem>>, vector<1x32x32xf32>
    %663 = vector.shape_cast %662 : vector<1x32x32xf32> to vector<32x32xf32>
    %c33 = arith.constant 33 : index
    %664 = memref.load %arg2[%c33] : memref<144xf32, #tpu.memory_space<smem>>
    %665 = vector.broadcast %664 : f32 to vector<32x32xf32>
    %666 = arith.mulf %665, %663 : vector<32x32xf32>
    %667 = arith.addf %649, %666 : vector<32x32xf32>
    %c69 = arith.constant 69 : index
    %668 = memref.load %arg2[%c69] : memref<144xf32, #tpu.memory_space<smem>>
    %669 = vector.broadcast %668 : f32 to vector<32x32xf32>
    %670 = arith.mulf %669, %663 : vector<32x32xf32>
    %671 = arith.addf %653, %670 : vector<32x32xf32>
    %c105 = arith.constant 105 : index
    %672 = memref.load %arg2[%c105] : memref<144xf32, #tpu.memory_space<smem>>
    %673 = vector.broadcast %672 : f32 to vector<32x32xf32>
    %674 = arith.mulf %673, %663 : vector<32x32xf32>
    %675 = arith.addf %657, %674 : vector<32x32xf32>
    %c141 = arith.constant 141 : index
    %676 = memref.load %arg2[%c141] : memref<144xf32, #tpu.memory_space<smem>>
    %677 = vector.broadcast %676 : f32 to vector<32x32xf32>
    %678 = arith.mulf %677, %663 : vector<32x32xf32>
    %679 = arith.addf %661, %678 : vector<32x32xf32>
    %c3_151 = arith.constant 3 : index
    %c2_152 = arith.constant 2 : index
    %c1_153 = arith.constant 1 : index
    %680 = vector.load %arg5[%c3_151, %c2_152, %c1_153] : memref<4x34x34xf32, #tpu.memory_space<vmem>>, vector<1x32x32xf32>
    %681 = vector.shape_cast %680 : vector<1x32x32xf32> to vector<32x32xf32>
    %c34 = arith.constant 34 : index
    %682 = memref.load %arg2[%c34] : memref<144xf32, #tpu.memory_space<smem>>
    %683 = vector.broadcast %682 : f32 to vector<32x32xf32>
    %684 = arith.mulf %683, %681 : vector<32x32xf32>
    %685 = arith.addf %667, %684 : vector<32x32xf32>
    %c70 = arith.constant 70 : index
    %686 = memref.load %arg2[%c70] : memref<144xf32, #tpu.memory_space<smem>>
    %687 = vector.broadcast %686 : f32 to vector<32x32xf32>
    %688 = arith.mulf %687, %681 : vector<32x32xf32>
    %689 = arith.addf %671, %688 : vector<32x32xf32>
    %c106 = arith.constant 106 : index
    %690 = memref.load %arg2[%c106] : memref<144xf32, #tpu.memory_space<smem>>
    %691 = vector.broadcast %690 : f32 to vector<32x32xf32>
    %692 = arith.mulf %691, %681 : vector<32x32xf32>
    %693 = arith.addf %675, %692 : vector<32x32xf32>
    %c142 = arith.constant 142 : index
    %694 = memref.load %arg2[%c142] : memref<144xf32, #tpu.memory_space<smem>>
    %695 = vector.broadcast %694 : f32 to vector<32x32xf32>
    %696 = arith.mulf %695, %681 : vector<32x32xf32>
    %697 = arith.addf %679, %696 : vector<32x32xf32>
    %c3_154 = arith.constant 3 : index
    %c2_155 = arith.constant 2 : index
    %c2_156 = arith.constant 2 : index
    %698 = vector.load %arg5[%c3_154, %c2_155, %c2_156] : memref<4x34x34xf32, #tpu.memory_space<vmem>>, vector<1x32x32xf32>
    %699 = vector.shape_cast %698 : vector<1x32x32xf32> to vector<32x32xf32>
    %c35 = arith.constant 35 : index
    %700 = memref.load %arg2[%c35] : memref<144xf32, #tpu.memory_space<smem>>
    %701 = vector.broadcast %700 : f32 to vector<32x32xf32>
    %702 = arith.mulf %701, %699 : vector<32x32xf32>
    %703 = arith.addf %685, %702 : vector<32x32xf32>
    %c71 = arith.constant 71 : index
    %704 = memref.load %arg2[%c71] : memref<144xf32, #tpu.memory_space<smem>>
    %705 = vector.broadcast %704 : f32 to vector<32x32xf32>
    %706 = arith.mulf %705, %699 : vector<32x32xf32>
    %707 = arith.addf %689, %706 : vector<32x32xf32>
    %c107 = arith.constant 107 : index
    %708 = memref.load %arg2[%c107] : memref<144xf32, #tpu.memory_space<smem>>
    %709 = vector.broadcast %708 : f32 to vector<32x32xf32>
    %710 = arith.mulf %709, %699 : vector<32x32xf32>
    %711 = arith.addf %693, %710 : vector<32x32xf32>
    %c143 = arith.constant 143 : index
    %712 = memref.load %arg2[%c143] : memref<144xf32, #tpu.memory_space<smem>>
    %713 = vector.broadcast %712 : f32 to vector<32x32xf32>
    %714 = arith.mulf %713, %699 : vector<32x32xf32>
    %715 = arith.addf %697, %714 : vector<32x32xf32>
    %c0_157 = arith.constant 0 : index
    %c0_158 = arith.constant 0 : index
    %c0_159 = arith.constant 0 : index
    %c0_160 = arith.constant 0 : index
    %716 = vector.load %arg4[%c0_157, %c0_158, %c0_159, %c0_160] : memref<1x4x32x32xf32, #tpu.memory_space<vmem>>, vector<1x1x32x32xf32>
    %717 = vector.shape_cast %716 : vector<1x1x32x32xf32> to vector<32x32xf32>
    %718 = vector.shape_cast %703 : vector<32x32xf32> to vector<1x1x32x32xf32>
    tpu.vector_store %arg4[%c0_157, %c0_158, %c0_159, %c0_160], %718 {strides = array<i32>} : memref<1x4x32x32xf32, #tpu.memory_space<vmem>>, vector<1x1x32x32xf32>,
    %c0_161 = arith.constant 0 : index
    %c1_162 = arith.constant 1 : index
    %c0_163 = arith.constant 0 : index
    %c0_164 = arith.constant 0 : index
    %719 = vector.load %arg4[%c0_161, %c1_162, %c0_163, %c0_164] : memref<1x4x32x32xf32, #tpu.memory_space<vmem>>, vector<1x1x32x32xf32>
    %720 = vector.shape_cast %719 : vector<1x1x32x32xf32> to vector<32x32xf32>
    %721 = vector.shape_cast %707 : vector<32x32xf32> to vector<1x1x32x32xf32>
    tpu.vector_store %arg4[%c0_161, %c1_162, %c0_163, %c0_164], %721 {strides = array<i32>} : memref<1x4x32x32xf32, #tpu.memory_space<vmem>>, vector<1x1x32x32xf32>,
    %c0_165 = arith.constant 0 : index
    %c2_166 = arith.constant 2 : index
    %c0_167 = arith.constant 0 : index
    %c0_168 = arith.constant 0 : index
    %722 = vector.load %arg4[%c0_165, %c2_166, %c0_167, %c0_168] : memref<1x4x32x32xf32, #tpu.memory_space<vmem>>, vector<1x1x32x32xf32>
    %723 = vector.shape_cast %722 : vector<1x1x32x32xf32> to vector<32x32xf32>
    %724 = vector.shape_cast %711 : vector<32x32xf32> to vector<1x1x32x32xf32>
    tpu.vector_store %arg4[%c0_165, %c2_166, %c0_167, %c0_168], %724 {strides = array<i32>} : memref<1x4x32x32xf32, #tpu.memory_space<vmem>>, vector<1x1x32x32xf32>,
    %c0_169 = arith.constant 0 : index
    %c3_170 = arith.constant 3 : index
    %c0_171 = arith.constant 0 : index
    %c0_172 = arith.constant 0 : index
    %725 = vector.load %arg4[%c0_169, %c3_170, %c0_171, %c0_172] : memref<1x4x32x32xf32, #tpu.memory_space<vmem>>, vector<1x1x32x32xf32>
    %726 = vector.shape_cast %725 : vector<1x1x32x32xf32> to vector<32x32xf32>
    %727 = vector.shape_cast %715 : vector<32x32xf32> to vector<1x1x32x32xf32>
    tpu.vector_store %arg4[%c0_169, %c3_170, %c0_171, %c0_172], %727 {strides = array<i32>} : memref<1x4x32x32xf32, #tpu.memory_space<vmem>>, vector<1x1x32x32xf32>,
    return
  }
  func.func @transform_0(%arg0: i32) -> (i32, i32, i32, i32) {
    %c0_i32 = arith.constant 0 : i32
    %c0_i32_0 = arith.constant 0 : i32
    %c0_i32_1 = arith.constant 0 : i32
    %c0_i32_2 = arith.constant 0 : i32
    return %arg0, %c0_i32, %c0_i32_0, %c0_i32_1 : i32, i32, i32, i32
  }
  func.func @transform_1(%arg0: i32) -> i32 {
    %c0_i32 = arith.constant 0 : i32
    %c0_i32_0 = arith.constant 0 : i32
    return %c0_i32 : i32
  }
  func.func @transform_2(%arg0: i32) -> i32 {
    %c0_i32 = arith.constant 0 : i32
    %c0_i32_0 = arith.constant 0 : i32
    return %c0_i32 : i32
  }
  func.func @transform_3(%arg0: i32) -> (i32, i32, i32, i32) {
    %c0_i32 = arith.constant 0 : i32
    %c0_i32_0 = arith.constant 0 : i32
    %c0_i32_1 = arith.constant 0 : i32
    %c0_i32_2 = arith.constant 0 : i32
    return %arg0, %c0_i32, %c0_i32_0, %c0_i32_1 : i32, i32, i32, i32
  }
}

</mosaic_0001>

<llo_original>
// kernel: tpu_custom_call.1
$region0: #{tpu_custom_call.1}
  #allocation0 [shape = 'u32[]', space=smem, size = 0x4, offset = 0x4, fixed_abs, tag = 'smem constant byte address 0x4 - core index']
  #allocation1 [shape = 'u32[144,128]{1,0:T(1,128)}', space=vmem, size = 0x12000, scoped, tag = 'internal scratch']
  #allocation2 [shape = 'f32[4,34,34]{2,1,0:T(8,128)}', space=vmem, size = 0x14000, scoped, tag = 'scratch operand']
  %s0 = inlined_call_operand.hbm [shape: f32[2,4,16,16], index: 0, kind: input, shape index: {}]
  %s1 = inlined_call_operand.vmem [shape: f32[144], index: 1, kind: input, shape index: {}]
  %s2 = inlined_call_operand.vmem [shape: f32[4], index: 2, kind: input, shape index: {}]
  %s3 = inlined_call_operand.hbm [shape: f32[2,4,32,32], index: 3, kind: output, shape index: {}]
  %s4 = sld [smem:[#allocation0]]
  $region57: #{tpu_custom_call.1} parent=0
    _
  %s6 = ssub.s32 1, %s4
  %s7 = scalar_select 0, %s6, %s4
  $region1: #{tpu_custom_call.1} parent=0
    #allocation3 [shape = 'u8[65536]{0}', space=vmem, size = 0x10000, scoped, tag = 'input window, operand 0']
    #allocation4 [shape = 's32[2]{0}', space=sflag, size = 0x8, scoped, tag = 'scoped memory for tpu_custom_call.1']
    #allocation5 [shape = 's32[2]{0}', space=sflag, size = 0x8, scoped, tag = 'scoped memory for tpu_custom_call.1']
    #allocation6 [shape = 's32[2]{0}', space=sflag, size = 0x8, scoped, tag = 'scoped memory for tpu_custom_call.1']
    #allocation7 [shape = 'u8[1024]{0}', space=smem, size = 0x400, scoped, tag = 'input window, operand 1, single buffered']
    #allocation8 [shape = 'u8[512]{0}', space=smem, size = 0x200, scoped, tag = 'input window, operand 2, single buffered']
    #allocation9 [shape = 's32[1]{0}', space=sflag, size = 0x4, scoped, tag = 'scoped memory for tpu_custom_call.1']
    #allocation10 [shape = 'u8[131072]{0}', space=vmem, size = 0x20000, scoped, tag = 'output window, operand 0']
    %8 = vsyncpa [#allocation4], 0
    %s9 = scalar_lea.sflag [#allocation4], 1
    %10 = vsyncpa %s9, 0
    %11 = vsyncpa [#allocation6], 0
    %12 = vsyncpa [#allocation9], 0
    %13 = vsyncpa [#allocation5], 0
    %s14 = scalar_lea.sflag [#allocation5], 1
    %15 = vsyncpa %s14, 0
    loop: start=0, step=1, limit=4
    $region2: #{tpu_custom_call.1} parent=1 // loop_pre_header
      _
    $region3: #{tpu_custom_call.1} parent=1 // loop_header
      %s17 = sphi 0, %s21
      %p18 = scmp.ge.s32.totalorder %s17, 4
      %s27 = sphi 0, %s29
      %s30 = sphi 0, %s27
      %s31 = sphi 0, %s30
      %s47 = sphi 0, %s31
      %s51 = sphi 0, %s51
      %s53 = sphi 0, %s51
      %s54 = sphi 0, %s53
      %s68 = sphi 0, %s54
      %s72 = sphi 0, %s72
      %s74 = sphi 0, %s72
      %s75 = sphi 0, %s74
      %s89 = sphi 0, %s75
      %s95 = sphi 0, %s97
      %s98 = sphi 0, %s95
      %s99 = sphi 0, %s98
      %s115 = sphi 0, %s99
    $region4: #{tpu_custom_call.1} parent=1 // loop_header_branch
      %20 = sbr.rel (%p18) target = $region8
    $region5: #{tpu_custom_call.1} parent=1 // loop_body
      %s22 = ssub.s32 %s17, 1
      %s23 = ssub.s32 %s17, 2
      %s24 = sadd.s32 %s17, 1
      %s25 = ssub.s32 %s17, %s24
      %p26 = scmp.eq.s32.totalorder %s25, 0
      %s28 = sadd.s32 %s27, 1
      %s29 = scalar_select %p26, %s27, %s28
      %p32 = pneg %p26
      %p33 = scmp.eq.s32.totalorder %s17, 1
      %p34 = por %p32, %p33
      %p35 = scmp.ne.s32.totalorder %s27, %s30
      %p36 = scmp.eq.s32.totalorder %s17, 0
      %p37 = por %p35, %p36
      %p38 = scmp.ne.s32.totalorder %s27, %s30
      %p39 = scmp.eq.s32.totalorder %s22, 1
      %p40 = por %p38, %p39
      %p41 = scmp.ne.s32.totalorder %s30, %s31
      %p42 = scmp.eq.s32.totalorder %s22, 0
      %p43 = por %p41, %p42
      %p44 = scmp.ne.s32.totalorder %s30, %s31
      %p45 = scmp.eq.s32.totalorder %s23, 1
      %p46 = por %p44, %p45
      %p48 = scmp.ne.s32.totalorder %s31, %s47
      %p49 = scmp.eq.s32.totalorder %s23, 0
      %p50 = por %p48, %p49
      %s52 = sadd.s32 %s51, 1
      %p55 = scmp.eq.s32.totalorder %s17, 1
      %p56 = scmp.ne.s32.totalorder %s51, %s53
      %p57 = scmp.eq.s32.totalorder %s17, 0
      %p58 = por %p56, %p57
      %p59 = scmp.ne.s32.totalorder %s51, %s53
      %p60 = scmp.eq.s32.totalorder %s22, 1
      %p61 = por %p59, %p60
      %p62 = scmp.ne.s32.totalorder %s53, %s54
      %p63 = scmp.eq.s32.totalorder %s22, 0
      %p64 = por %p62, %p63
      %p65 = scmp.ne.s32.totalorder %s53, %s54
      %p66 = scmp.eq.s32.totalorder %s23, 1
      %p67 = por %p65, %p66
      %p69 = scmp.ne.s32.totalorder %s54, %s68
      %p70 = scmp.eq.s32.totalorder %s23, 0
      %p71 = por %p69, %p70
      %s73 = sadd.s32 %s72, 1
      %p76 = scmp.eq.s32.totalorder %s17, 1
      %p77 = scmp.ne.s32.totalorder %s72, %s74
      %p78 = scmp.eq.s32.totalorder %s17, 0
      %p79 = por %p77, %p78
      %p80 = scmp.ne.s32.totalorder %s72, %s74
      %p81 = scmp.eq.s32.totalorder %s22, 1
      %p82 = por %p80, %p81
      %p83 = scmp.ne.s32.totalorder %s74, %s75
      %p84 = scmp.eq.s32.totalorder %s22, 0
      %p85 = por %p83, %p84
      %p86 = scmp.ne.s32.totalorder %s74, %s75
      %p87 = scmp.eq.s32.totalorder %s23, 1
      %p88 = por %p86, %p87
      %p90 = scmp.ne.s32.totalorder %s75, %s89
      %p91 = scmp.eq.s32.totalorder %s23, 0
      %p92 = por %p90, %p91
      %s93 = ssub.s32 %s17, %s24
      %p94 = scmp.eq.s32.totalorder %s93, 0
      %s96 = sadd.s32 %s95, 1
      %s97 = scalar_select %p94, %s95, %s96
      %p100 = pneg %p94
      %p101 = scmp.eq.s32.totalorder %s17, 1
      %p102 = por %p100, %p101
      %p103 = scmp.ne.s32.totalorder %s95, %s98
      %p104 = scmp.eq.s32.totalorder %s17, 0
      %p105 = por %p103, %p104
      %p106 = scmp.ne.s32.totalorder %s95, %s98
      %p107 = scmp.eq.s32.totalorder %s22, 1
      %p108 = por %p106, %p107
      %p109 = scmp.ne.s32.totalorder %s98, %s99
      %p110 = scmp.eq.s32.totalorder %s22, 0
      %p111 = por %p109, %p110
      %p112 = scmp.ne.s32.totalorder %s98, %s99
      %p113 = scmp.eq.s32.totalorder %s23, 1
      %p114 = por %p112, %p113
      %p116 = scmp.ne.s32.totalorder %s99, %s115
      %p117 = scmp.eq.s32.totalorder %s23, 0
      %p118 = por %p116, %p117
      %p119 = scmp.le.s32.totalorder 1, %s17
      %p120 = scmp.lt.s32.totalorder %s17, 3
      %p121 = pnand %p119, %p120
      %p122 = pneg %p121
      // Predicated region
      $region9: #{tpu_custom_call.1} parent=5 // pred_check
        _
      $region10: #{tpu_custom_call.1} parent=5 // pred_check_branch
        %124 = sbr.rel (%p121) target = $region12
      $region11: #{tpu_custom_call.1} parent=5 // pred_region
        %s125 = ssub.s32 %s17, 1
        // Predicated region
        $region13: #{tpu_custom_call.1} parent=11 // pred_check
          %p126 = pneg %p64
        $region14: #{tpu_custom_call.1} parent=11 // pred_check_branch
          %128 = sbr.rel (%p126) target = $region16
        $region15: #{tpu_custom_call.1} parent=11 // pred_region
          %s130 = ssub.s32 32, 32
          %131 = vsyncadd [#allocation6], %s130
          %s133 = sshll.u32 %s1, 4
          %s134 = int_to_ptr.vmem [resolvable:$true] %s133
          %136 = dma.vmem_to_smem %s134, 32, [#allocation7], [#allocation6]
        $region16: #{tpu_custom_call.1} parent=11 // pred_fallthru
          _
        // Predicated region
        $region17: #{tpu_custom_call.1} parent=11 // pred_check
          %p137 = pneg %p85
        $region18: #{tpu_custom_call.1} parent=11 // pred_check_branch
          %139 = sbr.rel (%p137) target = $region20
        $region19: #{tpu_custom_call.1} parent=11 // pred_region
          %s141 = ssub.s32 16, 16
          %142 = vsyncadd [#allocation9], %s141
          %s144 = sshll.u32 %s2, 4
          %s145 = int_to_ptr.vmem [resolvable:$true] %s144
          %147 = dma.vmem_to_smem %s145, 16, [#allocation8], [#allocation9]
        $region20: #{tpu_custom_call.1} parent=11 // pred_fallthru
          _
      $region12: #{tpu_custom_call.1} parent=5 // pred_fallthru
        _
      %p148 = scmp.lt.s32.totalorder %s17, 2
      // Predicated region
      $region21: #{tpu_custom_call.1} parent=5 // pred_check
        %p149 = pneg %p148
      $region22: #{tpu_custom_call.1} parent=5 // pred_check_branch
        %151 = sbr.rel (%p149) target = $region24
      $region23: #{tpu_custom_call.1} parent=5 // pred_region
        // Predicated region
        $region25: #{tpu_custom_call.1} parent=23 // pred_check
          %p152 = pneg %p37
        $region26: #{tpu_custom_call.1} parent=23 // pred_check_branch
          %154 = sbr.rel (%p152) target = $region28
        $region27: #{tpu_custom_call.1} parent=23 // pred_region
          %s155 = sand.u32 %s27, 1
          %s156 = scalar_lea.sflag [#allocation4], %s155
          %s157 = sand.u32 %s27, 1
          %s158 = smul.addr %s157, 64
          %s159 = scalar_lea.vmem [#allocation3], %s158
          %s161 = ssub.s32 1024, 1024
          %162 = vsyncadd %s156, %s161
          %s163 = smul.addr %s17, 8
          %s164 = smul.addr %s163, 128
          %s165 = scalar_lea.hbm %s0, %s164
          %s166 = sshll.u32 %s159, 4
          %s167 = int_to_ptr.vmem [resolvable:$true] %s166
          %172 = dma.hbm_to_vmem [thread:$0]  %s165, 1024, %s167, %s156, 128, 128, 8
        $region28: #{tpu_custom_call.1} parent=23 // pred_fallthru
          _
      $region24: #{tpu_custom_call.1} parent=5 // pred_fallthru
        _
      %p173 = scmp.le.s32.totalorder 1, %s17
      %p174 = scmp.lt.s32.totalorder %s17, 3
      %p175 = pnand %p173, %p174
      %p176 = pneg %p175
      // Predicated region
      $region29: #{tpu_custom_call.1} parent=5 // pred_check
        _
      $region30: #{tpu_custom_call.1} parent=5 // pred_check_branch
        %178 = sbr.rel (%p175) target = $region32
      $region31: #{tpu_custom_call.1} parent=5 // pred_region
        %s179 = ssub.s32 %s17, 1
        %s180 = sand.u32 %s30, 1
        %s181 = scalar_lea.sflag [#allocation4], %s180
        %s182 = sand.u32 %s30, 1
        %s183 = smul.addr %s182, 64
        %s184 = scalar_lea.vmem [#allocation3], %s183
        // Predicated region
        $region33: #{tpu_custom_call.1} parent=31 // pred_check
          %p185 = pneg %p43
        $region34: #{tpu_custom_call.1} parent=31 // pred_check_branch
          %187 = sbr.rel (%p185) target = $region36
        $region35: #{tpu_custom_call.1} parent=31 // pred_region
          %188 = dma.done %s181, 1024
        $region36: #{tpu_custom_call.1} parent=31 // pred_fallthru
          _
        // Predicated region
        $region37: #{tpu_custom_call.1} parent=31 // pred_check
          %p189 = pneg %p64
        $region38: #{tpu_custom_call.1} parent=31 // pred_check_branch
          %191 = sbr.rel (%p189) target = $region40
        $region39: #{tpu_custom_call.1} parent=31 // pred_region
          %192 = dma.done [#allocation6], 32
        $region40: #{tpu_custom_call.1} parent=31 // pred_fallthru
          _
        // Predicated region
        $region41: #{tpu_custom_call.1} parent=31 // pred_check
          %p193 = pneg %p85
        $region42: #{tpu_custom_call.1} parent=31 // pred_check_branch
          %195 = sbr.rel (%p193) target = $region44
        $region43: #{tpu_custom_call.1} parent=31 // pred_region
          %196 = dma.done [#allocation9], 16
        $region44: #{tpu_custom_call.1} parent=31 // pred_fallthru
          _
        %197 = sfence
        %s198 = sand.u32 %s30, 1
        %s199 = scalar_lea.sflag [#allocation4], %s198
        %s200 = sand.u32 %s30, 1
        %s201 = smul.addr %s200, 64
        %s202 = scalar_lea.vmem [#allocation3], %s201
        %p203 = pneg %p43
        %p204 = pneg %p40
        %p205 = pneg %p64
        %p206 = pneg %p61
        %p207 = pneg %p85
        %p208 = pneg %p82
        %p209 = pneg %p111
        %p210 = pneg %p108
        %s211 = sand.u32 %s98, 1
        %s212 = scalar_lea.sflag [#allocation5], %s211
        %s213 = sand.u32 %s98, 1
        %s214 = smul.addr %s213, 128
        %s215 = scalar_lea.vmem [#allocation10], %s214
        %v216 = vlaneseq
        %v217 = vshrl.u32 %v216, 7
        %v218 = vadd.s32 %v217, 8
        %v219 = vadd.s32 %v217, 16
        %v220 = vadd.s32 %v217, 24
        %v221 = vadd.s32 %v217, 32
        %v222 = vlaneseq
        %v223 = vand.u32 %v222, 127
        %v224 = vmul.u32 %v223, 2
        %v225 = vadd.s32 %v224, 1
        %vm226 = vcmp.eq.s32.totalorder %v217, %v225
        %vm227 = vcmp.eq.s32.totalorder %v218, %v225
        %vm228 = vcmp.eq.s32.totalorder %v219, %v225
        %vm229 = vcmp.eq.s32.totalorder %v220, %v225
        %vm230 = vcmp.eq.s32.totalorder %v221, %v225
        %v231 = vadd.s32 %v224, 2
        %vm232 = vcmp.eq.s32.totalorder %v217, %v231
        %vm233 = vcmp.eq.s32.totalorder %v218, %v231
        %vm234 = vcmp.eq.s32.totalorder %v219, %v231
        %vm235 = vcmp.eq.s32.totalorder %v220, %v231
        %vm236 = vcmp.eq.s32.totalorder %v221, %v231
        %vm237 = vmor %vm226, %vm232
        %vm238 = vmor %vm227, %vm233
        %vm239 = vmor %vm228, %vm234
        %vm240 = vmor %vm229, %vm235
        %vm241 = vmor %vm230, %vm236
        %v242 = vsel %vm237, 1.0, 0.0
        %v243 = vsel %vm238, 1.0, 0.0
        %v244 = vsel %vm239, 1.0, 0.0
        %v245 = vsel %vm240, 1.0, 0.0
        %v246 = vsel %vm241, 1.0, 0.0
        %v247 = vmul.u32 %v217, 2
        %v248 = vmul.u32 %v218, 2
        %v249 = vadd.s32 %v247, 1
        %v250 = vadd.s32 %v248, 1
        %vm251 = vcmp.eq.s32.totalorder %v223, %v249
        %vm252 = vcmp.eq.s32.totalorder %v223, %v250
        %v253 = vadd.s32 %v247, 2
        %v254 = vadd.s32 %v248, 2
        %vm255 = vcmp.eq.s32.totalorder %v223, %v253
        %vm256 = vcmp.eq.s32.totalorder %v223, %v254
        %vm257 = vmor %vm251, %vm255
        %vm258 = vmor %vm252, %vm256
        %v259 = vsel %vm257, 1.0, 0.0
        %v260 = vsel %vm258, 1.0, 0.0
        %v261 = vld [vmem:[%s184] sm:$0xff]
        %v262 = vld [vmem:[%s184 + $0x8] sm:$0xff]
        %vm263 = vcmask 130048
        %v265 = vsel %vm263, %v242, 0
        %v268 = vsel %vm263, %v243, 0
        %v271 = vsel %vm263, %v244, 0
        %v274 = vsel %vm263, %v245, 0
        %v277 = vsel %vm263, %v246, 0
        %279 = vmatprep.subr.mxu0 0.0
        %280 = vmatpush1.msra.mxu0 %v261
        %281 = vmatprep.subr.mxu0 0.0
        %282 = vmatpush1.msra.mxu0 %v262
        %283 = vmatprep.subr.mxu0 0.0
        %284 = vmatpush1.msra.mxu0 0.0
        %285 = vmatprep.subr.mxu0 0.0
        %286 = vmatpush1.msra.mxu0 0.0
        %287 = vmatprep.subr.mxu0 0.0
        %288 = vmatpush1.msra.mxu0 0.0
        %289 = vmatprep.subr.mxu0 0.0
        %290 = vmatpush1.msra.mxu0 0.0
        %291 = vmatprep.subr.mxu0 0.0
        %292 = vmatpush1.msra.mxu0 0.0
        %293 = vmatprep.subr.mxu0 0.0
        %294 = vmatpush1.msra.mxu0 0.0
        %295 = vmatprep.subr.mxu0 0.0
        %296 = vmatpush1.msra.mxu0 0.0
        %297 = vmatprep.subr.mxu0 0.0
        %298 = vmatpush1.msra.mxu0 0.0
        %299 = vmatprep.subr.mxu0 0.0
        %300 = vmatpush1.msra.mxu0 0.0
        %301 = vmatprep.subr.mxu0 0.0
        %302 = vmatpush1.msra.mxu0 0.0
        %303 = vmatprep.subr.mxu0 0.0
        %304 = vmatpush1.msra.mxu0 0.0
        %305 = vmatprep.subr.mxu0 0.0
        %306 = vmatpush1.msra.mxu0 0.0
        %307 = vmatprep.subr.mxu0 0.0
        %308 = vmatpush1.msra.mxu0 0.0
        %309 = vmatprep.subr.mxu0 0.0
        %310 = vmatpush1.msra.mxu0 0.0
        %311 = vmatprep.subr.mxu0 0.0
        %312 = vmatpush1.msra.mxu0 0.0
        %313 = vmatprep.subr.mxu0 0.0
        %314 = vmatpush1.msra.mxu0 0.0
        %315 = vmatprep.subr.mxu0 0.0
        %316 = vmatpush1.msra.mxu0 0.0
        %317 = vmatprep.subr.mxu0 0.0
        %318 = vmatpush1.msra.mxu0 0.0
        %319 = vmatprep.subr.mxu0 0.0
        %320 = vmatpush1.msra.mxu0 0.0
        %321 = vmatprep.subr.mxu0 0.0
        %322 = vmatpush1.msra.mxu0 0.0
        %323 = vmatprep.subr.mxu0 0.0
        %324 = vmatpush1.msra.mxu0 0.0
        %325 = vmatprep.subr.mxu0 0.0
        %326 = vmatpush1.msra.mxu0 0.0
        %327 = vmatprep.subr.mxu0 0.0
        %328 = vmatpush1.msra.mxu0 0.0
        %329 = vmatprep.subr.mxu0 0.0
        %330 = vmatpush1.msra.mxu0 0.0
        %331 = vmatprep.subr.mxu0 0.0
        %332 = vmatpush1.msra.mxu0 0.0
        %333 = vmatprep.subr.mxu0 0.0
        %334 = vmatpush1.msra.mxu0 0.0
        %335 = vmatprep.subr.mxu0 0.0
        %336 = vmatpush1.msra.mxu0 0.0
        %337 = vmatprep.subr.mxu0 0.0
        %338 = vmatpush1.msra.mxu0 0.0
        %339 = vmatprep.subr.mxu0 0.0
        %340 = vmatpush1.msra.mxu0 0.0
        %341 = vmatprep.subr.mxu0 0.0
        %342 = vmatpush1.msra.mxu0 0.0
        %343 = vmatprep.mubr.f32.mxu0 0.0
        %344 = vmatmul.mubr.f32.gmra.mrb[0].mxu0 %v265
        %v345 = vpop.f32.mrb[0].mxu0
        %v346 = vadd.f32 0.0, %v345
        %v347 = vpop.f32.mrb[0].mxu0
        %348 = vmatprep.mubr.f32.mxu0 0.0
        %349 = vmatmul.mubr.f32.gmra.mrb[0].mxu0 %v268
        %v350 = vpop.f32.mrb[0].mxu0
        %v351 = vadd.f32 0.0, %v350
        %v352 = vpop.f32.mrb[0].mxu0
        %353 = vmatprep.mubr.f32.mxu0 0.0
        %354 = vmatmul.mubr.f32.gmra.mrb[0].mxu0 %v271
        %v355 = vpop.f32.mrb[0].mxu0
        %v356 = vadd.f32 0.0, %v355
        %v357 = vpop.f32.mrb[0].mxu0
        %358 = vmatprep.mubr.f32.mxu0 0.0
        %359 = vmatmul.mubr.f32.gmra.mrb[0].mxu0 %v274
        %v360 = vpop.f32.mrb[0].mxu0
        %v361 = vadd.f32 0.0, %v360
        %v362 = vpop.f32.mrb[0].mxu0
        %363 = vmatprep.mubr.f32.mxu0 0.0
        %364 = vmatmul.mubr.f32.gmra.mrb[0].mxu0 %v277
        %v365 = vpop.f32.mrb[0].mxu0
        %v366 = vadd.f32 0.0, %v365
        %v367 = vpop.f32.mrb[0].mxu0
        %368 = vdwg.mxu0
        %v370 = vsel %vm263, %v346, 0
        %v373 = vsel %vm263, %v351, 0
        %v376 = vsel %vm263, %v356, 0
        %v379 = vsel %vm263, %v361, 0
        %v382 = vsel %vm263, %v366, 0
        %384 = vmatprep.subr.mxu0 0.0
        %385 = vmatpush1.msra.mxu0 %v259
        %386 = vmatprep.subr.mxu0 0.0
        %387 = vmatpush1.msra.mxu0 %v260
        %388 = vmatprep.subr.mxu0 0.0
        %389 = vmatpush1.msra.mxu0 0.0
        %390 = vmatprep.subr.mxu0 0.0
        %391 = vmatpush1.msra.mxu0 0.0
        %392 = vmatprep.subr.mxu0 0.0
        %393 = vmatpush1.msra.mxu0 0.0
        %394 = vmatprep.subr.mxu0 0.0
        %395 = vmatpush1.msra.mxu0 0.0
        %396 = vmatprep.subr.mxu0 0.0
        %397 = vmatpush1.msra.mxu0 0.0
        %398 = vmatprep.subr.mxu0 0.0
        %399 = vmatpush1.msra.mxu0 0.0
        %400 = vmatprep.subr.mxu0 0.0
        %401 = vmatpush1.msra.mxu0 0.0
        %402 = vmatprep.subr.mxu0 0.0
        %403 = vmatpush1.msra.mxu0 0.0
        %404 = vmatprep.subr.mxu0 0.0
        %405 = vmatpush1.msra.mxu0 0.0
        %406 = vmatprep.subr.mxu0 0.0
        %407 = vmatpush1.msra.mxu0 0.0
        %408 = vmatprep.subr.mxu0 0.0
        %409 = vmatpush1.msra.mxu0 0.0
        %410 = vmatprep.subr.mxu0 0.0
        %411 = vmatpush1.msra.mxu0 0.0
        %412 = vmatprep.subr.mxu0 0.0
        %413 = vmatpush1.msra.mxu0 0.0
        %414 = vmatprep.subr.mxu0 0.0
        %415 = vmatpush1.msra.mxu0 0.0
        %416 = vmatprep.subr.mxu0 0.0
        %417 = vmatpush1.msra.mxu0 0.0
        %418 = vmatprep.subr.mxu0 0.0
        %419 = vmatpush1.msra.mxu0 0.0
        %420 = vmatprep.subr.mxu0 0.0
        %421 = vmatpush1.msra.mxu0 0.0
        %422 = vmatprep.subr.mxu0 0.0
        %423 = vmatpush1.msra.mxu0 0.0
        %424 = vmatprep.subr.mxu0 0.0
        %425 = vmatpush1.msra.mxu0 0.0
        %426 = vmatprep.subr.mxu0 0.0
        %427 = vmatpush1.msra.mxu0 0.0
        %428 = vmatprep.subr.mxu0 0.0
        %429 = vmatpush1.msra.mxu0 0.0
        %430 = vmatprep.subr.mxu0 0.0
        %431 = vmatpush1.msra.mxu0 0.0
        %432 = vmatprep.subr.mxu0 0.0
        %433 = vmatpush1.msra.mxu0 0.0
        %434 = vmatprep.subr.mxu0 0.0
        %435 = vmatpush1.msra.mxu0 0.0
        %436 = vmatprep.subr.mxu0 0.0
        %437 = vmatpush1.msra.mxu0 0.0
        %438 = vmatprep.subr.mxu0 0.0
        %439 = vmatpush1.msra.mxu0 0.0
        %440 = vmatprep.subr.mxu0 0.0
        %441 = vmatpush1.msra.mxu0 0.0
        %442 = vmatprep.subr.mxu0 0.0
        %443 = vmatpush1.msra.mxu0 0.0
        %444 = vmatprep.subr.mxu0 0.0
        %445 = vmatpush1.msra.mxu0 0.0
        %446 = vmatprep.subr.mxu0 0.0
        %447 = vmatpush1.msra.mxu0 0.0
        %448 = vmatprep.mubr.f32.mxu0 0.0
        %449 = vmatmul.mubr.f32.gmra.mrb[0].mxu0 %v370
        %v450 = vpop.f32.mrb[0].mxu0
        %v451 = vadd.f32 0.0, %v450
        %v452 = vpop.f32.mrb[0].mxu0
        %453 = vmatprep.mubr.f32.mxu0 0.0
        %454 = vmatmul.mubr.f32.gmra.mrb[0].mxu0 %v373
        %v455 = vpop.f32.mrb[0].mxu0
        %v456 = vadd.f32 0.0, %v455
        %v457 = vpop.f32.mrb[0].mxu0
        %458 = vmatprep.mubr.f32.mxu0 0.0
        %459 = vmatmul.mubr.f32.gmra.mrb[0].mxu0 %v376
        %v460 = vpop.f32.mrb[0].mxu0
        %v461 = vadd.f32 0.0, %v460
        %v462 = vpop.f32.mrb[0].mxu0
        %463 = vmatprep.mubr.f32.mxu0 0.0
        %464 = vmatmul.mubr.f32.gmra.mrb[0].mxu0 %v379
        %v465 = vpop.f32.mrb[0].mxu0
        %v466 = vadd.f32 0.0, %v465
        %v467 = vpop.f32.mrb[0].mxu0
        %468 = vmatprep.mubr.f32.mxu0 0.0
        %469 = vmatmul.mubr.f32.gmra.mrb[0].mxu0 %v382
        %v470 = vpop.f32.mrb[0].mxu0
        %v471 = vadd.f32 0.0, %v470
        %v472 = vpop.f32.mrb[0].mxu0
        %473 = vdwg.mxu0
        %vm474 = vcmask 277504
        %475 = vst.msk [vmem:[#allocation2] sm:$0xff] %vm474, %v451
        %476 = vst.msk [vmem:[#allocation2 + $0x8] sm:$0xff] %vm474, %v456
        %477 = vst.msk [vmem:[#allocation2 + $0x10] sm:$0xff] %vm474, %v461
        %478 = vst.msk [vmem:[#allocation2 + $0x18] sm:$0xff] %vm474, %v466
        %vm479 = vcmask 271360
        %480 = vst.msk [vmem:[#allocation2 + $0x20] sm:$0x3] %vm479, %v471
        %s481 = scalar_lea.vmem %s184, 16 [#allocation3]
        %v482 = vld [vmem:[%s481] sm:$0xff]
        %v483 = vld [vmem:[%s481 + $0x8] sm:$0xff]
        %484 = vmatprep.subr.mxu0 0.0
        %485 = vmatpush1.msra.mxu0 %v482
        %486 = vmatprep.subr.mxu0 0.0
        %487 = vmatpush1.msra.mxu0 %v483
        %488 = vmatprep.subr.mxu0 0.0
        %489 = vmatpush1.msra.mxu0 0.0
        %490 = vmatprep.subr.mxu0 0.0
        %491 = vmatpush1.msra.mxu0 0.0
        %492 = vmatprep.subr.mxu0 0.0
        %493 = vmatpush1.msra.mxu0 0.0
        %494 = vmatprep.subr.mxu0 0.0
        %495 = vmatpush1.msra.mxu0 0.0
        %496 = vmatprep.subr.mxu0 0.0
        %497 = vmatpush1.msra.mxu0 0.0
        %498 = vmatprep.subr.mxu0 0.0
        %499 = vmatpush1.msra.mxu0 0.0
        %500 = vmatprep.subr.mxu0 0.0
        %501 = vmatpush1.msra.mxu0 0.0
        %502 = vmatprep.subr.mxu0 0.0
        %503 = vmatpush1.msra.mxu0 0.0
        %504 = vmatprep.subr.mxu0 0.0
        %505 = vmatpush1.msra.mxu0 0.0
        %506 = vmatprep.subr.mxu0 0.0
        %507 = vmatpush1.msra.mxu0 0.0
        %508 = vmatprep.subr.mxu0 0.0
        %509 = vmatpush1.msra.mxu0 0.0
        %510 = vmatprep.subr.mxu0 0.0
        %511 = vmatpush1.msra.mxu0 0.0
        %512 = vmatprep.subr.mxu0 0.0
        %513 = vmatpush1.msra.mxu0 0.0
        %514 = vmatprep.subr.mxu0 0.0
        %515 = vmatpush1.msra.mxu0 0.0
        %516 = vmatprep.subr.mxu0 0.0
        %517 = vmatpush1.msra.mxu0 0.0
        %518 = vmatprep.subr.mxu0 0.0
        %519 = vmatpush1.msra.mxu0 0.0
        %520 = vmatprep.subr.mxu0 0.0
        %521 = vmatpush1.msra.mxu0 0.0
        %522 = vmatprep.subr.mxu0 0.0
        %523 = vmatpush1.msra.mxu0 0.0
        %524 = vmatprep.subr.mxu0 0.0
        %525 = vmatpush1.msra.mxu0 0.0
        %526 = vmatprep.subr.mxu0 0.0
        %527 = vmatpush1.msra.mxu0 0.0
        %528 = vmatprep.subr.mxu0 0.0
        %529 = vmatpush1.msra.mxu0 0.0
        %530 = vmatprep.subr.mxu0 0.0
        %531 = vmatpush1.msra.mxu0 0.0
        %532 = vmatprep.subr.mxu0 0.0
        %533 = vmatpush1.msra.mxu0 0.0
        %534 = vmatprep.subr.mxu0 0.0
        %535 = vmatpush1.msra.mxu0 0.0
        %536 = vmatprep.subr.mxu0 0.0
        %537 = vmatpush1.msra.mxu0 0.0
        %538 = vmatprep.subr.mxu0 0.0
        %539 = vmatpush1.msra.mxu0 0.0
        %540 = vmatprep.subr.mxu0 0.0
        %541 = vmatpush1.msra.mxu0 0.0
        %542 = vmatprep.subr.mxu0 0.0
        %543 = vmatpush1.msra.mxu0 0.0
        %544 = vmatprep.subr.mxu0 0.0
        %545 = vmatpush1.msra.mxu0 0.0
        %546 = vmatprep.subr.mxu0 0.0
        %547 = vmatpush1.msra.mxu0 0.0
        %548 = vmatprep.mubr.f32.mxu0 0.0
        %549 = vmatmul.mubr.f32.gmra.mrb[0].mxu0 %v265
        %v550 = vpop.f32.mrb[0].mxu0
        %v551 = vadd.f32 0.0, %v550
        %v552 = vpop.f32.mrb[0].mxu0
        %553 = vmatprep.mubr.f32.mxu0 0.0
        %554 = vmatmul.mubr.f32.gmra.mrb[0].mxu0 %v268
        %v555 = vpop.f32.mrb[0].mxu0
        %v556 = vadd.f32 0.0, %v555
        %v557 = vpop.f32.mrb[0].mxu0
        %558 = vmatprep.mubr.f32.mxu0 0.0
        %559 = vmatmul.mubr.f32.gmra.mrb[0].mxu0 %v271
        %v560 = vpop.f32.mrb[0].mxu0
        %v561 = vadd.f32 0.0, %v560
        %v562 = vpop.f32.mrb[0].mxu0
        %563 = vmatprep.mubr.f32.mxu0 0.0
        %564 = vmatmul.mubr.f32.gmra.mrb[0].mxu0 %v274
        %v565 = vpop.f32.mrb[0].mxu0
        %v566 = vadd.f32 0.0, %v565
        %v567 = vpop.f32.mrb[0].mxu0
        %568 = vmatprep.mubr.f32.mxu0 0.0
        %569 = vmatmul.mubr.f32.gmra.mrb[0].mxu0 %v277
        %v570 = vpop.f32.mrb[0].mxu0
        %v571 = vadd.f32 0.0, %v570
        %v572 = vpop.f32.mrb[0].mxu0
        %573 = vdwg.mxu0
        %v575 = vsel %vm263, %v551, 0
        %v578 = vsel %vm263, %v556, 0
        %v581 = vsel %vm263, %v561, 0
        %v584 = vsel %vm263, %v566, 0
        %v587 = vsel %vm263, %v571, 0
        %589 = vmatprep.subr.mxu0 0.0
        %590 = vmatpush1.msra.mxu0 %v259
        %591 = vmatprep.subr.mxu0 0.0
        %592 = vmatpush1.msra.mxu0 %v260
        %593 = vmatprep.subr.mxu0 0.0
        %594 = vmatpush1.msra.mxu0 0.0
        %595 = vmatprep.subr.mxu0 0.0
        %596 = vmatpush1.msra.mxu0 0.0
        %597 = vmatprep.subr.mxu0 0.0
        %598 = vmatpush1.msra.mxu0 0.0
        %599 = vmatprep.subr.mxu0 0.0
        %600 = vmatpush1.msra.mxu0 0.0
        %601 = vmatprep.subr.mxu0 0.0
        %602 = vmatpush1.msra.mxu0 0.0
        %603 = vmatprep.subr.mxu0 0.0
        %604 = vmatpush1.msra.mxu0 0.0
        %605 = vmatprep.subr.mxu0 0.0
        %606 = vmatpush1.msra.mxu0 0.0
        %607 = vmatprep.subr.mxu0 0.0
        %608 = vmatpush1.msra.mxu0 0.0
        %609 = vmatprep.subr.mxu0 0.0
        %610 = vmatpush1.msra.mxu0 0.0
        %611 = vmatprep.subr.mxu0 0.0
        %612 = vmatpush1.msra.mxu0 0.0
        %613 = vmatprep.subr.mxu0 0.0
        %614 = vmatpush1.msra.mxu0 0.0
        %615 = vmatprep.subr.mxu0 0.0
        %616 = vmatpush1.msra.mxu0 0.0
        %617 = vmatprep.subr.mxu0 0.0
        %618 = vmatpush1.msra.mxu0 0.0
        %619 = vmatprep.subr.mxu0 0.0
        %620 = vmatpush1.msra.mxu0 0.0
        %621 = vmatprep.subr.mxu0 0.0
        %622 = vmatpush1.msra.mxu0 0.0
        %623 = vmatprep.subr.mxu0 0.0
        %624 = vmatpush1.msra.mxu0 0.0
        %625 = vmatprep.subr.mxu0 0.0
        %626 = vmatpush1.msra.mxu0 0.0
        %627 = vmatprep.subr.mxu0 0.0
        %628 = vmatpush1.msra.mxu0 0.0
        %629 = vmatprep.subr.mxu0 0.0
        %630 = vmatpush1.msra.mxu0 0.0
        %631 = vmatprep.subr.mxu0 0.0
        %632 = vmatpush1.msra.mxu0 0.0
        %633 = vmatprep.subr.mxu0 0.0
        %634 = vmatpush1.msra.mxu0 0.0
        %635 = vmatprep.subr.mxu0 0.0
        %636 = vmatpush1.msra.mxu0 0.0
        %637 = vmatprep.subr.mxu0 0.0
        %638 = vmatpush1.msra.mxu0 0.0
        %639 = vmatprep.subr.mxu0 0.0
        %640 = vmatpush1.msra.mxu0 0.0
        %641 = vmatprep.subr.mxu0 0.0
        %642 = vmatpush1.msra.mxu0 0.0
        %643 = vmatprep.subr.mxu0 0.0
        %644 = vmatpush1.msra.mxu0 0.0
        %645 = vmatprep.subr.mxu0 0.0
        %646 = vmatpush1.msra.mxu0 0.0
        %647 = vmatprep.subr.mxu0 0.0
        %648 = vmatpush1.msra.mxu0 0.0
        %649 = vmatprep.subr.mxu0 0.0
        %650 = vmatpush1.msra.mxu0 0.0
        %651 = vmatprep.subr.mxu0 0.0
        %652 = vmatpush1.msra.mxu0 0.0
        %653 = vmatprep.mubr.f32.mxu0 0.0
        %654 = vmatmul.mubr.f32.gmra.mrb[0].mxu0 %v575
        %v655 = vpop.f32.mrb[0].mxu0
        %v656 = vadd.f32 0.0, %v655
        %v657 = vpop.f32.mrb[0].mxu0
        %658 = vmatprep.mubr.f32.mxu0 0.0
        %659 = vmatmul.mubr.f32.gmra.mrb[0].mxu0 %v578
        %v660 = vpop.f32.mrb[0].mxu0
        %v661 = vadd.f32 0.0, %v660
        %v662 = vpop.f32.mrb[0].mxu0
        %663 = vmatprep.mubr.f32.mxu0 0.0
        %664 = vmatmul.mubr.f32.gmra.mrb[0].mxu0 %v581
        %v665 = vpop.f32.mrb[0].mxu0
        %v666 = vadd.f32 0.0, %v665
        %v667 = vpop.f32.mrb[0].mxu0
        %668 = vmatprep.mubr.f32.mxu0 0.0
        %669 = vmatmul.mubr.f32.gmra.mrb[0].mxu0 %v584
        %v670 = vpop.f32.mrb[0].mxu0
        %v671 = vadd.f32 0.0, %v670
        %v672 = vpop.f32.mrb[0].mxu0
        %673 = vmatprep.mubr.f32.mxu0 0.0
        %674 = vmatmul.mubr.f32.gmra.mrb[0].mxu0 %v587
        %v675 = vpop.f32.mrb[0].mxu0
        %v676 = vadd.f32 0.0, %v675
        %v677 = vpop.f32.mrb[0].mxu0
        %678 = vdwg.mxu0
        %s679 = scalar_lea.vmem [#allocation2], 40
        %680 = vst.msk [vmem:[%s679] sm:$0xff] %vm474, %v656
        %681 = vst.msk [vmem:[%s679 + $0x8] sm:$0xff] %vm474, %v661
        %682 = vst.msk [vmem:[%s679 + $0x10] sm:$0xff] %vm474, %v666
        %683 = vst.msk [vmem:[%s679 + $0x18] sm:$0xff] %vm474, %v671
        %684 = vst.msk [vmem:[%s679 + $0x20] sm:$0x3] %vm479, %v676
        %s685 = scalar_lea.vmem %s184, 32 [#allocation3]
        %v686 = vld [vmem:[%s685] sm:$0xff]
        %v687 = vld [vmem:[%s685 + $0x8] sm:$0xff]
        %688 = vmatprep.subr.mxu0 0.0
        %689 = vmatpush1.msra.mxu0 %v686
        %690 = vmatprep.subr.mxu0 0.0
        %691 = vmatpush1.msra.mxu0 %v687
        %692 = vmatprep.subr.mxu0 0.0
        %693 = vmatpush1.msra.mxu0 0.0
        %694 = vmatprep.subr.mxu0 0.0
        %695 = vmatpush1.msra.mxu0 0.0
        %696 = vmatprep.subr.mxu0 0.0
        %697 = vmatpush1.msra.mxu0 0.0
        %698 = vmatprep.subr.mxu0 0.0
        %699 = vmatpush1.msra.mxu0 0.0
        %700 = vmatprep.subr.mxu0 0.0
        %701 = vmatpush1.msra.mxu0 0.0
        %702 = vmatprep.subr.mxu0 0.0
        %703 = vmatpush1.msra.mxu0 0.0
        %704 = vmatprep.subr.mxu0 0.0
        %705 = vmatpush1.msra.mxu0 0.0
        %706 = vmatprep.subr.mxu0 0.0
        %707 = vmatpush1.msra.mxu0 0.0
        %708 = vmatprep.subr.mxu0 0.0
        %709 = vmatpush1.msra.mxu0 0.0
        %710 = vmatprep.subr.mxu0 0.0
        %711 = vmatpush1.msra.mxu0 0.0
        %712 = vmatprep.subr.mxu0 0.0
        %713 = vmatpush1.msra.mxu0 0.0
        %714 = vmatprep.subr.mxu0 0.0
        %715 = vmatpush1.msra.mxu0 0.0
        %716 = vmatprep.subr.mxu0 0.0
        %717 = vmatpush1.msra.mxu0 0.0
        %718 = vmatprep.subr.mxu0 0.0
        %719 = vmatpush1.msra.mxu0 0.0
        %720 = vmatprep.subr.mxu0 0.0
        %721 = vmatpush1.msra.mxu0 0.0
        %722 = vmatprep.subr.mxu0 0.0
        %723 = vmatpush1.msra.mxu0 0.0
        %724 = vmatprep.subr.mxu0 0.0
        %725 = vmatpush1.msra.mxu0 0.0
        %726 = vmatprep.subr.mxu0 0.0
        %727 = vmatpush1.msra.mxu0 0.0
        %728 = vmatprep.subr.mxu0 0.0
        %729 = vmatpush1.msra.mxu0 0.0
        %730 = vmatprep.subr.mxu0 0.0
        %731 = vmatpush1.msra.mxu0 0.0
        %732 = vmatprep.subr.mxu0 0.0
        %733 = vmatpush1.msra.mxu0 0.0
        %734 = vmatprep.subr.mxu0 0.0
        %735 = vmatpush1.msra.mxu0 0.0
        %736 = vmatprep.subr.mxu0 0.0
        %737 = vmatpush1.msra.mxu0 0.0
        %738 = vmatprep.subr.mxu0 0.0
        %739 = vmatpush1.msra.mxu0 0.0
        %740 = vmatprep.subr.mxu0 0.0
        %741 = vmatpush1.msra.mxu0 0.0
        %742 = vmatprep.subr.mxu0 0.0
        %743 = vmatpush1.msra.mxu0 0.0
        %744 = vmatprep.subr.mxu0 0.0
        %745 = vmatpush1.msra.mxu0 0.0
        %746 = vmatprep.subr.mxu0 0.0
        %747 = vmatpush1.msra.mxu0 0.0
        %748 = vmatprep.subr.mxu0 0.0
        %749 = vmatpush1.msra.mxu0 0.0
        %750 = vmatprep.subr.mxu0 0.0
        %751 = vmatpush1.msra.mxu0 0.0
        %752 = vmatprep.mubr.f32.mxu0 0.0
        %753 = vmatmul.mubr.f32.gmra.mrb[0].mxu0 %v265
        %v754 = vpop.f32.mrb[0].mxu0
        %v755 = vadd.f32 0.0, %v754
        %v756 = vpop.f32.mrb[0].mxu0
        %757 = vmatprep.mubr.f32.mxu0 0.0
        %758 = vmatmul.mubr.f32.gmra.mrb[0].mxu0 %v268
        %v759 = vpop.f32.mrb[0].mxu0
        %v760 = vadd.f32 0.0, %v759
        %v761 = vpop.f32.mrb[0].mxu0
        %762 = vmatprep.mubr.f32.mxu0 0.0
        %763 = vmatmul.mubr.f32.gmra.mrb[0].mxu0 %v271
        %v764 = vpop.f32.mrb[0].mxu0
        %v765 = vadd.f32 0.0, %v764
        %v766 = vpop.f32.mrb[0].mxu0
        %767 = vmatprep.mubr.f32.mxu0 0.0
        %768 = vmatmul.mubr.f32.gmra.mrb[0].mxu0 %v274
        %v769 = vpop.f32.mrb[0].mxu0
        %v770 = vadd.f32 0.0, %v769
        %v771 = vpop.f32.mrb[0].mxu0
        %772 = vmatprep.mubr.f32.mxu0 0.0
        %773 = vmatmul.mubr.f32.gmra.mrb[0].mxu0 %v277
        %v774 = vpop.f32.mrb[0].mxu0
        %v775 = vadd.f32 0.0, %v774
        %v776 = vpop.f32.mrb[0].mxu0
        %777 = vdwg.mxu0
        %v779 = vsel %vm263, %v755, 0
        %v782 = vsel %vm263, %v760, 0
        %v785 = vsel %vm263, %v765, 0
        %v788 = vsel %vm263, %v770, 0
        %v791 = vsel %vm263, %v775, 0
        %793 = vmatprep.subr.mxu0 0.0
        %794 = vmatpush1.msra.mxu0 %v259
        %795 = vmatprep.subr.mxu0 0.0
        %796 = vmatpush1.msra.mxu0 %v260
        %797 = vmatprep.subr.mxu0 0.0
        %798 = vmatpush1.msra.mxu0 0.0
        %799 = vmatprep.subr.mxu0 0.0
        %800 = vmatpush1.msra.mxu0 0.0
        %801 = vmatprep.subr.mxu0 0.0
        %802 = vmatpush1.msra.mxu0 0.0
        %803 = vmatprep.subr.mxu0 0.0
        %804 = vmatpush1.msra.mxu0 0.0
        %805 = vmatprep.subr.mxu0 0.0
        %806 = vmatpush1.msra.mxu0 0.0
        %807 = vmatprep.subr.mxu0 0.0
        %808 = vmatpush1.msra.mxu0 0.0
        %809 = vmatprep.subr.mxu0 0.0
        %810 = vmatpush1.msra.mxu0 0.0
        %811 = vmatprep.subr.mxu0 0.0
        %812 = vmatpush1.msra.mxu0 0.0
        %813 = vmatprep.subr.mxu0 0.0
        %814 = vmatpush1.msra.mxu0 0.0
        %815 = vmatprep.subr.mxu0 0.0
        %816 = vmatpush1.msra.mxu0 0.0
        %817 = vmatprep.subr.mxu0 0.0
        %818 = vmatpush1.msra.mxu0 0.0
        %819 = vmatprep.subr.mxu0 0.0
        %820 = vmatpush1.msra.mxu0 0.0
        %821 = vmatprep.subr.mxu0 0.0
        %822 = vmatpush1.msra.mxu0 0.0
        %823 = vmatprep.subr.mxu0 0.0
        %824 = vmatpush1.msra.mxu0 0.0
        %825 = vmatprep.subr.mxu0 0.0
        %826 = vmatpush1.msra.mxu0 0.0
        %827 = vmatprep.subr.mxu0 0.0
        %828 = vmatpush1.msra.mxu0 0.0
        %829 = vmatprep.subr.mxu0 0.0
        %830 = vmatpush1.msra.mxu0 0.0
        %831 = vmatprep.subr.mxu0 0.0
        %832 = vmatpush1.msra.mxu0 0.0
        %833 = vmatprep.subr.mxu0 0.0
        %834 = vmatpush1.msra.mxu0 0.0
        %835 = vmatprep.subr.mxu0 0.0
        %836 = vmatpush1.msra.mxu0 0.0
        %837 = vmatprep.subr.mxu0 0.0
        %838 = vmatpush1.msra.mxu0 0.0
        %839 = vmatprep.subr.mxu0 0.0
        %840 = vmatpush1.msra.mxu0 0.0
        %841 = vmatprep.subr.mxu0 0.0
        %842 = vmatpush1.msra.mxu0 0.0
        %843 = vmatprep.subr.mxu0 0.0
        %844 = vmatpush1.msra.mxu0 0.0
        %845 = vmatprep.subr.mxu0 0.0
        %846 = vmatpush1.msra.mxu0 0.0
        %847 = vmatprep.subr.mxu0 0.0
        %848 = vmatpush1.msra.mxu0 0.0
        %849 = vmatprep.subr.mxu0 0.0
        %850 = vmatpush1.msra.mxu0 0.0
        %851 = vmatprep.subr.mxu0 0.0
        %852 = vmatpush1.msra.mxu0 0.0
        %853 = vmatprep.subr.mxu0 0.0
        %854 = vmatpush1.msra.mxu0 0.0
        %855 = vmatprep.subr.mxu0 0.0
        %856 = vmatpush1.msra.mxu0 0.0
        %857 = vmatprep.mubr.f32.mxu0 0.0
        %858 = vmatmul.mubr.f32.gmra.mrb[0].mxu0 %v779
        %v859 = vpop.f32.mrb[0].mxu0
        %v860 = vadd.f32 0.0, %v859
        %v861 = vpop.f32.mrb[0].mxu0
        %862 = vmatprep.mubr.f32.mxu0 0.0
        %863 = vmatmul.mubr.f32.gmra.mrb[0].mxu0 %v782
        %v864 = vpop.f32.mrb[0].mxu0
        %v865 = vadd.f32 0.0, %v864
        %v866 = vpop.f32.mrb[0].mxu0
        %867 = vmatprep.mubr.f32.mxu0 0.0
        %868 = vmatmul.mubr.f32.gmra.mrb[0].mxu0 %v785
        %v869 = vpop.f32.mrb[0].mxu0
        %v870 = vadd.f32 0.0, %v869
        %v871 = vpop.f32.mrb[0].mxu0
        %872 = vmatprep.mubr.f32.mxu0 0.0
        %873 = vmatmul.mubr.f32.gmra.mrb[0].mxu0 %v788
        %v874 = vpop.f32.mrb[0].mxu0
        %v875 = vadd.f32 0.0, %v874
        %v876 = vpop.f32.mrb[0].mxu0
        %877 = vmatprep.mubr.f32.mxu0 0.0
        %878 = vmatmul.mubr.f32.gmra.mrb[0].mxu0 %v791
        %v879 = vpop.f32.mrb[0].mxu0
        %v880 = vadd.f32 0.0, %v879
        %v881 = vpop.f32.mrb[0].mxu0
        %882 = vdwg.mxu0
        %s883 = scalar_lea.vmem [#allocation2], 80
        %884 = vst.msk [vmem:[%s883] sm:$0xff] %vm474, %v860
        %885 = vst.msk [vmem:[%s883 + $0x8] sm:$0xff] %vm474, %v865
        %886 = vst.msk [vmem:[%s883 + $0x10] sm:$0xff] %vm474, %v870
        %887 = vst.msk [vmem:[%s883 + $0x18] sm:$0xff] %vm474, %v875
        %888 = vst.msk [vmem:[%s883 + $0x20] sm:$0x3] %vm479, %v880
        %s889 = scalar_lea.vmem %s184, 48 [#allocation3]
        %v890 = vld [vmem:[%s889] sm:$0xff]
        %v891 = vld [vmem:[%s889 + $0x8] sm:$0xff]
        %892 = vmatprep.subr.mxu0 0.0
        %893 = vmatpush1.msra.mxu0 %v890
        %894 = vmatprep.subr.mxu0 0.0
        %895 = vmatpush1.msra.mxu0 %v891
        %896 = vmatprep.subr.mxu0 0.0
        %897 = vmatpush1.msra.mxu0 0.0
        %898 = vmatprep.subr.mxu0 0.0
        %899 = vmatpush1.msra.mxu0 0.0
        %900 = vmatprep.subr.mxu0 0.0
        %901 = vmatpush1.msra.mxu0 0.0
        %902 = vmatprep.subr.mxu0 0.0
        %903 = vmatpush1.msra.mxu0 0.0
        %904 = vmatprep.subr.mxu0 0.0
        %905 = vmatpush1.msra.mxu0 0.0
        %906 = vmatprep.subr.mxu0 0.0
        %907 = vmatpush1.msra.mxu0 0.0
        %908 = vmatprep.subr.mxu0 0.0
        %909 = vmatpush1.msra.mxu0 0.0
        %910 = vmatprep.subr.mxu0 0.0
        %911 = vmatpush1.msra.mxu0 0.0
        %912 = vmatprep.subr.mxu0 0.0
        %913 = vmatpush1.msra.mxu0 0.0
        %914 = vmatprep.subr.mxu0 0.0
        %915 = vmatpush1.msra.mxu0 0.0
        %916 = vmatprep.subr.mxu0 0.0
        %917 = vmatpush1.msra.mxu0 0.0
        %918 = vmatprep.subr.mxu0 0.0
        %919 = vmatpush1.msra.mxu0 0.0
        %920 = vmatprep.subr.mxu0 0.0
        %921 = vmatpush1.msra.mxu0 0.0
        %922 = vmatprep.subr.mxu0 0.0
        %923 = vmatpush1.msra.mxu0 0.0
        %924 = vmatprep.subr.mxu0 0.0
        %925 = vmatpush1.msra.mxu0 0.0
        %926 = vmatprep.subr.mxu0 0.0
        %927 = vmatpush1.msra.mxu0 0.0
        %928 = vmatprep.subr.mxu0 0.0
        %929 = vmatpush1.msra.mxu0 0.0
        %930 = vmatprep.subr.mxu0 0.0
        %931 = vmatpush1.msra.mxu0 0.0
        %932 = vmatprep.subr.mxu0 0.0
        %933 = vmatpush1.msra.mxu0 0.0
        %934 = vmatprep.subr.mxu0 0.0
        %935 = vmatpush1.msra.mxu0 0.0
        %936 = vmatprep.subr.mxu0 0.0
        %937 = vmatpush1.msra.mxu0 0.0
        %938 = vmatprep.subr.mxu0 0.0
        %939 = vmatpush1.msra.mxu0 0.0
        %940 = vmatprep.subr.mxu0 0.0
        %941 = vmatpush1.msra.mxu0 0.0
        %942 = vmatprep.subr.mxu0 0.0
        %943 = vmatpush1.msra.mxu0 0.0
        %944 = vmatprep.subr.mxu0 0.0
        %945 = vmatpush1.msra.mxu0 0.0
        %946 = vmatprep.subr.mxu0 0.0
        %947 = vmatpush1.msra.mxu0 0.0
        %948 = vmatprep.subr.mxu0 0.0
        %949 = vmatpush1.msra.mxu0 0.0
        %950 = vmatprep.subr.mxu0 0.0
        %951 = vmatpush1.msra.mxu0 0.0
        %952 = vmatprep.subr.mxu0 0.0
        %953 = vmatpush1.msra.mxu0 0.0
        %954 = vmatprep.subr.mxu0 0.0
        %955 = vmatpush1.msra.mxu0 0.0
        %956 = vmatprep.mubr.f32.mxu0 0.0
        %957 = vmatmul.mubr.f32.gmra.mrb[0].mxu0 %v265
        %v958 = vpop.f32.mrb[0].mxu0
        %v959 = vadd.f32 0.0, %v958
        %v960 = vpop.f32.mrb[0].mxu0
        %961 = vmatprep.mubr.f32.mxu0 0.0
        %962 = vmatmul.mubr.f32.gmra.mrb[0].mxu0 %v268
        %v963 = vpop.f32.mrb[0].mxu0
        %v964 = vadd.f32 0.0, %v963
        %v965 = vpop.f32.mrb[0].mxu0
        %966 = vmatprep.mubr.f32.mxu0 0.0
        %967 = vmatmul.mubr.f32.gmra.mrb[0].mxu0 %v271
        %v968 = vpop.f32.mrb[0].mxu0
        %v969 = vadd.f32 0.0, %v968
        %v970 = vpop.f32.mrb[0].mxu0
        %971 = vmatprep.mubr.f32.mxu0 0.0
        %972 = vmatmul.mubr.f32.gmra.mrb[0].mxu0 %v274
        %v973 = vpop.f32.mrb[0].mxu0
        %v974 = vadd.f32 0.0, %v973
        %v975 = vpop.f32.mrb[0].mxu0
        %976 = vmatprep.mubr.f32.mxu0 0.0
        %977 = vmatmul.mubr.f32.gmra.mrb[0].mxu0 %v277
        %v978 = vpop.f32.mrb[0].mxu0
        %v979 = vadd.f32 0.0, %v978
        %v980 = vpop.f32.mrb[0].mxu0
        %981 = vdwg.mxu0
        %v983 = vsel %vm263, %v959, 0
        %v986 = vsel %vm263, %v964, 0
        %v989 = vsel %vm263, %v969, 0
        %v992 = vsel %vm263, %v974, 0
        %v995 = vsel %vm263, %v979, 0
        %997 = vmatprep.subr.mxu0 0.0
        %998 = vmatpush1.msra.mxu0 %v259
        %999 = vmatprep.subr.mxu0 0.0
        %1000 = vmatpush1.msra.mxu0 %v260
        %1001 = vmatprep.subr.mxu0 0.0
        %1002 = vmatpush1.msra.mxu0 0.0
        %1003 = vmatprep.subr.mxu0 0.0
        %1004 = vmatpush1.msra.mxu0 0.0
        %1005 = vmatprep.subr.mxu0 0.0
        %1006 = vmatpush1.msra.mxu0 0.0
        %1007 = vmatprep.subr.mxu0 0.0
        %1008 = vmatpush1.msra.mxu0 0.0
        %1009 = vmatprep.subr.mxu0 0.0
        %1010 = vmatpush1.msra.mxu0 0.0
        %1011 = vmatprep.subr.mxu0 0.0
        %1012 = vmatpush1.msra.mxu0 0.0
        %1013 = vmatprep.subr.mxu0 0.0
        %1014 = vmatpush1.msra.mxu0 0.0
        %1015 = vmatprep.subr.mxu0 0.0
        %1016 = vmatpush1.msra.mxu0 0.0
        %1017 = vmatprep.subr.mxu0 0.0
        %1018 = vmatpush1.msra.mxu0 0.0
        %1019 = vmatprep.subr.mxu0 0.0
        %1020 = vmatpush1.msra.mxu0 0.0
        %1021 = vmatprep.subr.mxu0 0.0
        %1022 = vmatpush1.msra.mxu0 0.0
        %1023 = vmatprep.subr.mxu0 0.0
        %1024 = vmatpush1.msra.mxu0 0.0
        %1025 = vmatprep.subr.mxu0 0.0
        %1026 = vmatpush1.msra.mxu0 0.0
        %1027 = vmatprep.subr.mxu0 0.0
        %1028 = vmatpush1.msra.mxu0 0.0
        %1029 = vmatprep.subr.mxu0 0.0
        %1030 = vmatpush1.msra.mxu0 0.0
        %1031 = vmatprep.subr.mxu0 0.0
        %1032 = vmatpush1.msra.mxu0 0.0
        %1033 = vmatprep.subr.mxu0 0.0
        %1034 = vmatpush1.msra.mxu0 0.0
        %1035 = vmatprep.subr.mxu0 0.0
        %1036 = vmatpush1.msra.mxu0 0.0
        %1037 = vmatprep.subr.mxu0 0.0
        %1038 = vmatpush1.msra.mxu0 0.0
        %1039 = vmatprep.subr.mxu0 0.0
        %1040 = vmatpush1.msra.mxu0 0.0
        %1041 = vmatprep.subr.mxu0 0.0
        %1042 = vmatpush1.msra.mxu0 0.0
        %1043 = vmatprep.subr.mxu0 0.0
        %1044 = vmatpush1.msra.mxu0 0.0
        %1045 = vmatprep.subr.mxu0 0.0
        %1046 = vmatpush1.msra.mxu0 0.0
        %1047 = vmatprep.subr.mxu0 0.0
        %1048 = vmatpush1.msra.mxu0 0.0
        %1049 = vmatprep.subr.mxu0 0.0
        %1050 = vmatpush1.msra.mxu0 0.0
        %1051 = vmatprep.subr.mxu0 0.0
        %1052 = vmatpush1.msra.mxu0 0.0
        %1053 = vmatprep.subr.mxu0 0.0
        %1054 = vmatpush1.msra.mxu0 0.0
        %1055 = vmatprep.subr.mxu0 0.0
        %1056 = vmatpush1.msra.mxu0 0.0
        %1057 = vmatprep.subr.mxu0 0.0
        %1058 = vmatpush1.msra.mxu0 0.0
        %1059 = vmatprep.subr.mxu0 0.0
        %1060 = vmatpush1.msra.mxu0 0.0
        %1061 = vmatprep.mubr.f32.mxu0 0.0
        %1062 = vmatmul.mubr.f32.gmra.mrb[0].mxu0 %v983
        %v1063 = vpop.f32.mrb[0].mxu0
        %v1064 = vadd.f32 0.0, %v1063
        %v1065 = vpop.f32.mrb[0].mxu0
        %1066 = vmatprep.mubr.f32.mxu0 0.0
        %1067 = vmatmul.mubr.f32.gmra.mrb[0].mxu0 %v986
        %v1068 = vpop.f32.mrb[0].mxu0
        %v1069 = vadd.f32 0.0, %v1068
        %v1070 = vpop.f32.mrb[0].mxu0
        %1071 = vmatprep.mubr.f32.mxu0 0.0
        %1072 = vmatmul.mubr.f32.gmra.mrb[0].mxu0 %v989
        %v1073 = vpop.f32.mrb[0].mxu0
        %v1074 = vadd.f32 0.0, %v1073
        %v1075 = vpop.f32.mrb[0].mxu0
        %1076 = vmatprep.mubr.f32.mxu0 0.0
        %1077 = vmatmul.mubr.f32.gmra.mrb[0].mxu0 %v992
        %v1078 = vpop.f32.mrb[0].mxu0
        %v1079 = vadd.f32 0.0, %v1078
        %v1080 = vpop.f32.mrb[0].mxu0
        %1081 = vmatprep.mubr.f32.mxu0 0.0
        %1082 = vmatmul.mubr.f32.gmra.mrb[0].mxu0 %v995
        %v1083 = vpop.f32.mrb[0].mxu0
        %v1084 = vadd.f32 0.0, %v1083
        %v1085 = vpop.f32.mrb[0].mxu0
        %1086 = vdwg.mxu0
        %s1087 = scalar_lea.vmem [#allocation2], 120
        %1088 = vst.msk [vmem:[%s1087] sm:$0xff] %vm474, %v1064
        %1089 = vst.msk [vmem:[%s1087 + $0x8] sm:$0xff] %vm474, %v1069
        %1090 = vst.msk [vmem:[%s1087 + $0x10] sm:$0xff] %vm474, %v1074
        %1091 = vst.msk [vmem:[%s1087 + $0x18] sm:$0xff] %vm474, %v1079
        %1092 = vst.msk [vmem:[%s1087 + $0x20] sm:$0x3] %vm479, %v1084
        %s1093 = sld [smem:[#allocation8]]
        %v1094 = vstv %s1093
        %s1095 = sld [smem:[#allocation8 + $0x1]]
        %v1096 = vstv %s1095
        %s1097 = sld [smem:[#allocation8 + $0x2]]
        %v1098 = vstv %s1097
        %s1099 = sld [smem:[#allocation8 + $0x3]]
        %v1100 = vstv %s1099
        %v1101 = vld [vmem:[#allocation2] sm:$0xff]
        %v1102 = vld [vmem:[#allocation2 + $0x8] sm:$0xff]
        %v1103 = vld [vmem:[#allocation2 + $0x10] sm:$0xff]
        %v1104 = vld [vmem:[#allocation2 + $0x18] sm:$0xff]
        %s1105 = sld [smem:[#allocation7]]
        %v1106 = vstv %s1105
        %v1107 = vmul.f32 %v1106, %v1101
        %v1108 = vmul.f32 %v1106, %v1102
        %v1109 = vmul.f32 %v1106, %v1103
        %v1110 = vmul.f32 %v1106, %v1104
        %v1111 = vadd.f32 %v1094, %v1107
        %v1112 = vadd.f32 %v1094, %v1108
        %v1113 = vadd.f32 %v1094, %v1109
        %v1114 = vadd.f32 %v1094, %v1110
        %s1115 = sld [smem:[#allocation7 + $0x24]]
        %v1116 = vstv %s1115
        %v1117 = vmul.f32 %v1116, %v1101
        %v1118 = vmul.f32 %v1116, %v1102
        %v1119 = vmul.f32 %v1116, %v1103
        %v1120 = vmul.f32 %v1116, %v1104
        %v1121 = vadd.f32 %v1096, %v1117
        %v1122 = vadd.f32 %v1096, %v1118
        %v1123 = vadd.f32 %v1096, %v1119
        %v1124 = vadd.f32 %v1096, %v1120
        %s1125 = sld [smem:[#allocation7 + $0x48]]
        %v1126 = vstv %s1125
        %v1127 = vmul.f32 %v1126, %v1101
        %v1128 = vmul.f32 %v1126, %v1102
        %v1129 = vmul.f32 %v1126, %v1103
        %v1130 = vmul.f32 %v1126, %v1104
        %v1131 = vadd.f32 %v1098, %v1127
        %v1132 = vadd.f32 %v1098, %v1128
        %v1133 = vadd.f32 %v1098, %v1129
        %v1134 = vadd.f32 %v1098, %v1130
        %s1135 = sld [smem:[#allocation7 + $0x6c]]
        %v1136 = vstv %s1135
        %v1137 = vmul.f32 %v1136, %v1101
        %v1138 = vmul.f32 %v1136, %v1102
        %v1139 = vmul.f32 %v1136, %v1103
        %v1140 = vmul.f32 %v1136, %v1104
        %v1141 = vadd.f32 %v1100, %v1137
        %v1142 = vadd.f32 %v1100, %v1138
        %v1143 = vadd.f32 %v1100, %v1139
        %v1144 = vadd.f32 %v1100, %v1140
        %s1145 = sld [smem:[#allocation7 + $0x1]]
        %v1146 = vstv %s1145
        %v1147 = vmul.f32 %v1146, %v1101
        %v1148 = vmul.f32 %v1146, %v1102
        %v1149 = vmul.f32 %v1146, %v1103
        %v1150 = vmul.f32 %v1146, %v1104
        %1155 = vrot.lane.b32.xlu0 %v1147, 127
        %v1156 = vpop.permute.xlu0 %1155
        %1157 = vrot.lane.b32.xlu0 %v1148, 127
        %v1158 = vpop.permute.xlu0 %1157
        %1159 = vrot.lane.b32.xlu0 %v1149, 127
        %v1160 = vpop.permute.xlu0 %1159
        %1161 = vrot.lane.b32.xlu0 %v1150, 127
        %v1162 = vpop.permute.xlu0 %1161
        %v1167 = vadd.f32 %v1111, %v1156
        %v1168 = vadd.f32 %v1112, %v1158
        %v1169 = vadd.f32 %v1113, %v1160
        %v1170 = vadd.f32 %v1114, %v1162
        %s1171 = sld [smem:[#allocation7 + $0x25]]
        %v1172 = vstv %s1171
        %v1173 = vmul.f32 %v1172, %v1101
        %v1174 = vmul.f32 %v1172, %v1102
        %v1175 = vmul.f32 %v1172, %v1103
        %v1176 = vmul.f32 %v1172, %v1104
        %1181 = vrot.lane.b32.xlu0 %v1173, 127
        %v1182 = vpop.permute.xlu0 %1181
        %1183 = vrot.lane.b32.xlu0 %v1174, 127
        %v1184 = vpop.permute.xlu0 %1183
        %1185 = vrot.lane.b32.xlu0 %v1175, 127
        %v1186 = vpop.permute.xlu0 %1185
        %1187 = vrot.lane.b32.xlu0 %v1176, 127
        %v1188 = vpop.permute.xlu0 %1187
        %v1193 = vadd.f32 %v1121, %v1182
        %v1194 = vadd.f32 %v1122, %v1184
        %v1195 = vadd.f32 %v1123, %v1186
        %v1196 = vadd.f32 %v1124, %v1188
        %s1197 = sld [smem:[#allocation7 + $0x49]]
        %v1198 = vstv %s1197
        %v1199 = vmul.f32 %v1198, %v1101
        %v1200 = vmul.f32 %v1198, %v1102
        %v1201 = vmul.f32 %v1198, %v1103
        %v1202 = vmul.f32 %v1198, %v1104
        %1207 = vrot.lane.b32.xlu0 %v1199, 127
        %v1208 = vpop.permute.xlu0 %1207
        %1209 = vrot.lane.b32.xlu0 %v1200, 127
        %v1210 = vpop.permute.xlu0 %1209
        %1211 = vrot.lane.b32.xlu0 %v1201, 127
        %v1212 = vpop.permute.xlu0 %1211
        %1213 = vrot.lane.b32.xlu0 %v1202, 127
        %v1214 = vpop.permute.xlu0 %1213
        %v1219 = vadd.f32 %v1131, %v1208
        %v1220 = vadd.f32 %v1132, %v1210
        %v1221 = vadd.f32 %v1133, %v1212
        %v1222 = vadd.f32 %v1134, %v1214
        %s1223 = sld [smem:[#allocation7 + $0x6d]]
        %v1224 = vstv %s1223
        %v1225 = vmul.f32 %v1224, %v1101
        %v1226 = vmul.f32 %v1224, %v1102
        %v1227 = vmul.f32 %v1224, %v1103
        %v1228 = vmul.f32 %v1224, %v1104
        %1233 = vrot.lane.b32.xlu0 %v1225, 127
        %v1234 = vpop.permute.xlu0 %1233
        %1235 = vrot.lane.b32.xlu0 %v1226, 127
        %v1236 = vpop.permute.xlu0 %1235
        %1237 = vrot.lane.b32.xlu0 %v1227, 127
        %v1238 = vpop.permute.xlu0 %1237
        %1239 = vrot.lane.b32.xlu0 %v1228, 127
        %v1240 = vpop.permute.xlu0 %1239
        %v1245 = vadd.f32 %v1141, %v1234
        %v1246 = vadd.f32 %v1142, %v1236
        %v1247 = vadd.f32 %v1143, %v1238
        %v1248 = vadd.f32 %v1144, %v1240
        %s1249 = sld [smem:[#allocation7 + $0x2]]
        %v1250 = vstv %s1249
        %v1251 = vmul.f32 %v1250, %v1101
        %v1252 = vmul.f32 %v1250, %v1102
        %v1253 = vmul.f32 %v1250, %v1103
        %v1254 = vmul.f32 %v1250, %v1104
        %1259 = vrot.lane.b32.xlu0 %v1251, 126
        %v1260 = vpop.permute.xlu0 %1259
        %1261 = vrot.lane.b32.xlu0 %v1252, 126
        %v1262 = vpop.permute.xlu0 %1261
        %1263 = vrot.lane.b32.xlu0 %v1253, 126
        %v1264 = vpop.permute.xlu0 %1263
        %1265 = vrot.lane.b32.xlu0 %v1254, 126
        %v1266 = vpop.permute.xlu0 %1265
        %v1271 = vadd.f32 %v1167, %v1260
        %v1272 = vadd.f32 %v1168, %v1262
        %v1273 = vadd.f32 %v1169, %v1264
        %v1274 = vadd.f32 %v1170, %v1266
        %s1275 = sld [smem:[#allocation7 + $0x26]]
        %v1276 = vstv %s1275
        %v1277 = vmul.f32 %v1276, %v1101
        %v1278 = vmul.f32 %v1276, %v1102
        %v1279 = vmul.f32 %v1276, %v1103
        %v1280 = vmul.f32 %v1276, %v1104
        %1285 = vrot.lane.b32.xlu0 %v1277, 126
        %v1286 = vpop.permute.xlu0 %1285
        %1287 = vrot.lane.b32.xlu0 %v1278, 126
        %v1288 = vpop.permute.xlu0 %1287
        %1289 = vrot.lane.b32.xlu0 %v1279, 126
        %v1290 = vpop.permute.xlu0 %1289
        %1291 = vrot.lane.b32.xlu0 %v1280, 126
        %v1292 = vpop.permute.xlu0 %1291
        %v1297 = vadd.f32 %v1193, %v1286
        %v1298 = vadd.f32 %v1194, %v1288
        %v1299 = vadd.f32 %v1195, %v1290
        %v1300 = vadd.f32 %v1196, %v1292
        %s1301 = sld [smem:[#allocation7 + $0x4a]]
        %v1302 = vstv %s1301
        %v1303 = vmul.f32 %v1302, %v1101
        %v1304 = vmul.f32 %v1302, %v1102
        %v1305 = vmul.f32 %v1302, %v1103
        %v1306 = vmul.f32 %v1302, %v1104
        %1311 = vrot.lane.b32.xlu0 %v1303, 126
        %v1312 = vpop.permute.xlu0 %1311
        %1313 = vrot.lane.b32.xlu0 %v1304, 126
        %v1314 = vpop.permute.xlu0 %1313
        %1315 = vrot.lane.b32.xlu0 %v1305, 126
        %v1316 = vpop.permute.xlu0 %1315
        %1317 = vrot.lane.b32.xlu0 %v1306, 126
        %v1318 = vpop.permute.xlu0 %1317
        %v1323 = vadd.f32 %v1219, %v1312
        %v1324 = vadd.f32 %v1220, %v1314
        %v1325 = vadd.f32 %v1221, %v1316
        %v1326 = vadd.f32 %v1222, %v1318
        %s1327 = sld [smem:[#allocation7 + $0x6e]]
        %v1328 = vstv %s1327
        %v1329 = vmul.f32 %v1328, %v1101
        %v1330 = vmul.f32 %v1328, %v1102
        %v1331 = vmul.f32 %v1328, %v1103
        %v1332 = vmul.f32 %v1328, %v1104
        %1337 = vrot.lane.b32.xlu0 %v1329, 126
        %v1338 = vpop.permute.xlu0 %1337
        %1339 = vrot.lane.b32.xlu0 %v1330, 126
        %v1340 = vpop.permute.xlu0 %1339
        %1341 = vrot.lane.b32.xlu0 %v1331, 126
        %v1342 = vpop.permute.xlu0 %1341
        %1343 = vrot.lane.b32.xlu0 %v1332, 126
        %v1344 = vpop.permute.xlu0 %1343
        %v1349 = vadd.f32 %v1245, %v1338
        %v1350 = vadd.f32 %v1246, %v1340
        %v1351 = vadd.f32 %v1247, %v1342
        %v1352 = vadd.f32 %v1248, %v1344
        %v1353 = vld [vmem:[#allocation2 + $0x1] sm:$0xff]
        %v1354 = vld [vmem:[#allocation2 + $0x9] sm:$0xff]
        %v1355 = vld [vmem:[#allocation2 + $0x11] sm:$0xff]
        %v1356 = vld [vmem:[#allocation2 + $0x19] sm:$0xff]
        %s1357 = sld [smem:[#allocation7 + $0x3]]
        %v1358 = vstv %s1357
        %v1359 = vmul.f32 %v1358, %v1353
        %v1360 = vmul.f32 %v1358, %v1354
        %v1361 = vmul.f32 %v1358, %v1355
        %v1362 = vmul.f32 %v1358, %v1356
        %v1363 = vadd.f32 %v1271, %v1359
        %v1364 = vadd.f32 %v1272, %v1360
        %v1365 = vadd.f32 %v1273, %v1361
        %v1366 = vadd.f32 %v1274, %v1362
        %s1367 = sld [smem:[#allocation7 + $0x27]]
        %v1368 = vstv %s1367
        %v1369 = vmul.f32 %v1368, %v1353
        %v1370 = vmul.f32 %v1368, %v1354
        %v1371 = vmul.f32 %v1368, %v1355
        %v1372 = vmul.f32 %v1368, %v1356
        %v1373 = vadd.f32 %v1297, %v1369
        %v1374 = vadd.f32 %v1298, %v1370
        %v1375 = vadd.f32 %v1299, %v1371
        %v1376 = vadd.f32 %v1300, %v1372
        %s1377 = sld [smem:[#allocation7 + $0x4b]]
        %v1378 = vstv %s1377
        %v1379 = vmul.f32 %v1378, %v1353
        %v1380 = vmul.f32 %v1378, %v1354
        %v1381 = vmul.f32 %v1378, %v1355
        %v1382 = vmul.f32 %v1378, %v1356
        %v1383 = vadd.f32 %v1323, %v1379
        %v1384 = vadd.f32 %v1324, %v1380
        %v1385 = vadd.f32 %v1325, %v1381
        %v1386 = vadd.f32 %v1326, %v1382
        %s1387 = sld [smem:[#allocation7 + $0x6f]]
        %v1388 = vstv %s1387
        %v1389 = vmul.f32 %v1388, %v1353
        %v1390 = vmul.f32 %v1388, %v1354
        %v1391 = vmul.f32 %v1388, %v1355
        %v1392 = vmul.f32 %v1388, %v1356
        %v1393 = vadd.f32 %v1349, %v1389
        %v1394 = vadd.f32 %v1350, %v1390
        %v1395 = vadd.f32 %v1351, %v1391
        %v1396 = vadd.f32 %v1352, %v1392
        %s1397 = sld [smem:[#allocation7 + $0x4]]
        %v1398 = vstv %s1397
        %v1399 = vmul.f32 %v1398, %v1353
        %v1400 = vmul.f32 %v1398, %v1354
        %v1401 = vmul.f32 %v1398, %v1355
        %v1402 = vmul.f32 %v1398, %v1356
        %1407 = vrot.lane.b32.xlu0 %v1399, 127
        %v1408 = vpop.permute.xlu0 %1407
        %1409 = vrot.lane.b32.xlu0 %v1400, 127
        %v1410 = vpop.permute.xlu0 %1409
        %1411 = vrot.lane.b32.xlu0 %v1401, 127
        %v1412 = vpop.permute.xlu0 %1411
        %1413 = vrot.lane.b32.xlu0 %v1402, 127
        %v1414 = vpop.permute.xlu0 %1413
        %v1419 = vadd.f32 %v1363, %v1408
        %v1420 = vadd.f32 %v1364, %v1410
        %v1421 = vadd.f32 %v1365, %v1412
        %v1422 = vadd.f32 %v1366, %v1414
        %s1423 = sld [smem:[#allocation7 + $0x28]]
        %v1424 = vstv %s1423
        %v1425 = vmul.f32 %v1424, %v1353
        %v1426 = vmul.f32 %v1424, %v1354
        %v1427 = vmul.f32 %v1424, %v1355
        %v1428 = vmul.f32 %v1424, %v1356
        %1433 = vrot.lane.b32.xlu0 %v1425, 127
        %v1434 = vpop.permute.xlu0 %1433
        %1435 = vrot.lane.b32.xlu0 %v1426, 127
        %v1436 = vpop.permute.xlu0 %1435
        %1437 = vrot.lane.b32.xlu0 %v1427, 127
        %v1438 = vpop.permute.xlu0 %1437
        %1439 = vrot.lane.b32.xlu0 %v1428, 127
        %v1440 = vpop.permute.xlu0 %1439
        %v1445 = vadd.f32 %v1373, %v1434
        %v1446 = vadd.f32 %v1374, %v1436
        %v1447 = vadd.f32 %v1375, %v1438
        %v1448 = vadd.f32 %v1376, %v1440
        %s1449 = sld [smem:[#allocation7 + $0x4c]]
        %v1450 = vstv %s1449
        %v1451 = vmul.f32 %v1450, %v1353
        %v1452 = vmul.f32 %v1450, %v1354
        %v1453 = vmul.f32 %v1450, %v1355
        %v1454 = vmul.f32 %v1450, %v1356
        %1459 = vrot.lane.b32.xlu0 %v1451, 127
        %v1460 = vpop.permute.xlu0 %1459
        %1461 = vrot.lane.b32.xlu0 %v1452, 127
        %v1462 = vpop.permute.xlu0 %1461
        %1463 = vrot.lane.b32.xlu0 %v1453, 127
        %v1464 = vpop.permute.xlu0 %1463
        %1465 = vrot.lane.b32.xlu0 %v1454, 127
        %v1466 = vpop.permute.xlu0 %1465
        %v1471 = vadd.f32 %v1383, %v1460
        %v1472 = vadd.f32 %v1384, %v1462
        %v1473 = vadd.f32 %v1385, %v1464
        %v1474 = vadd.f32 %v1386, %v1466
        %s1475 = sld [smem:[#allocation7 + $0x70]]
        %v1476 = vstv %s1475
        %v1477 = vmul.f32 %v1476, %v1353
        %v1478 = vmul.f32 %v1476, %v1354
        %v1479 = vmul.f32 %v1476, %v1355
        %v1480 = vmul.f32 %v1476, %v1356
        %1485 = vrot.lane.b32.xlu0 %v1477, 127
        %v1486 = vpop.permute.xlu0 %1485
        %1487 = vrot.lane.b32.xlu0 %v1478, 127
        %v1488 = vpop.permute.xlu0 %1487
        %1489 = vrot.lane.b32.xlu0 %v1479, 127
        %v1490 = vpop.permute.xlu0 %1489
        %1491 = vrot.lane.b32.xlu0 %v1480, 127
        %v1492 = vpop.permute.xlu0 %1491
        %v1497 = vadd.f32 %v1393, %v1486
        %v1498 = vadd.f32 %v1394, %v1488
        %v1499 = vadd.f32 %v1395, %v1490
        %v1500 = vadd.f32 %v1396, %v1492
        %s1501 = sld [smem:[#allocation7 + $0x5]]
        %v1502 = vstv %s1501
        %v1503 = vmul.f32 %v1502, %v1353
        %v1504 = vmul.f32 %v1502, %v1354
        %v1505 = vmul.f32 %v1502, %v1355
        %v1506 = vmul.f32 %v1502, %v1356
        %1511 = vrot.lane.b32.xlu0 %v1503, 126
        %v1512 = vpop.permute.xlu0 %1511
        %1513 = vrot.lane.b32.xlu0 %v1504, 126
        %v1514 = vpop.permute.xlu0 %1513
        %1515 = vrot.lane.b32.xlu0 %v1505, 126
        %v1516 = vpop.permute.xlu0 %1515
        %1517 = vrot.lane.b32.xlu0 %v1506, 126
        %v1518 = vpop.permute.xlu0 %1517
        %v1523 = vadd.f32 %v1419, %v1512
        %v1524 = vadd.f32 %v1420, %v1514
        %v1525 = vadd.f32 %v1421, %v1516
        %v1526 = vadd.f32 %v1422, %v1518
        %s1527 = sld [smem:[#allocation7 + $0x29]]
        %v1528 = vstv %s1527
        %v1529 = vmul.f32 %v1528, %v1353
        %v1530 = vmul.f32 %v1528, %v1354
        %v1531 = vmul.f32 %v1528, %v1355
        %v1532 = vmul.f32 %v1528, %v1356
        %1537 = vrot.lane.b32.xlu0 %v1529, 126
        %v1538 = vpop.permute.xlu0 %1537
        %1539 = vrot.lane.b32.xlu0 %v1530, 126
        %v1540 = vpop.permute.xlu0 %1539
        %1541 = vrot.lane.b32.xlu0 %v1531, 126
        %v1542 = vpop.permute.xlu0 %1541
        %1543 = vrot.lane.b32.xlu0 %v1532, 126
        %v1544 = vpop.permute.xlu0 %1543
        %v1549 = vadd.f32 %v1445, %v1538
        %v1550 = vadd.f32 %v1446, %v1540
        %v1551 = vadd.f32 %v1447, %v1542
        %v1552 = vadd.f32 %v1448, %v1544
        %s1553 = sld [smem:[#allocation7 + $0x4d]]
        %v1554 = vstv %s1553
        %v1555 = vmul.f32 %v1554, %v1353
        %v1556 = vmul.f32 %v1554, %v1354
        %v1557 = vmul.f32 %v1554, %v1355
        %v1558 = vmul.f32 %v1554, %v1356
        %1563 = vrot.lane.b32.xlu0 %v1555, 126
        %v1564 = vpop.permute.xlu0 %1563
        %1565 = vrot.lane.b32.xlu0 %v1556, 126
        %v1566 = vpop.permute.xlu0 %1565
        %1567 = vrot.lane.b32.xlu0 %v1557, 126
        %v1568 = vpop.permute.xlu0 %1567
        %1569 = vrot.lane.b32.xlu0 %v1558, 126
        %v1570 = vpop.permute.xlu0 %1569
        %v1575 = vadd.f32 %v1471, %v1564
        %v1576 = vadd.f32 %v1472, %v1566
        %v1577 = vadd.f32 %v1473, %v1568
        %v1578 = vadd.f32 %v1474, %v1570
        %s1579 = sld [smem:[#allocation7 + $0x71]]
        %v1580 = vstv %s1579
        %v1581 = vmul.f32 %v1580, %v1353
        %v1582 = vmul.f32 %v1580, %v1354
        %v1583 = vmul.f32 %v1580, %v1355
        %v1584 = vmul.f32 %v1580, %v1356
        %1589 = vrot.lane.b32.xlu0 %v1581, 126
        %v1590 = vpop.permute.xlu0 %1589
        %1591 = vrot.lane.b32.xlu0 %v1582, 126
        %v1592 = vpop.permute.xlu0 %1591
        %1593 = vrot.lane.b32.xlu0 %v1583, 126
        %v1594 = vpop.permute.xlu0 %1593
        %1595 = vrot.lane.b32.xlu0 %v1584, 126
        %v1596 = vpop.permute.xlu0 %1595
        %v1601 = vadd.f32 %v1497, %v1590
        %v1602 = vadd.f32 %v1498, %v1592
        %v1603 = vadd.f32 %v1499, %v1594
        %v1604 = vadd.f32 %v1500, %v1596
        %v1605 = vld [vmem:[#allocation2 + $0x2] sm:$0xff]
        %v1606 = vld [vmem:[#allocation2 + $0xa] sm:$0xff]
        %v1607 = vld [vmem:[#allocation2 + $0x12] sm:$0xff]
        %v1608 = vld [vmem:[#allocation2 + $0x1a] sm:$0xff]
        %s1609 = sld [smem:[#allocation7 + $0x6]]
        %v1610 = vstv %s1609
        %v1611 = vmul.f32 %v1610, %v1605
        %v1612 = vmul.f32 %v1610, %v1606
        %v1613 = vmul.f32 %v1610, %v1607
        %v1614 = vmul.f32 %v1610, %v1608
        %v1615 = vadd.f32 %v1523, %v1611
        %v1616 = vadd.f32 %v1524, %v1612
        %v1617 = vadd.f32 %v1525, %v1613
        %v1618 = vadd.f32 %v1526, %v1614
        %s1619 = sld [smem:[#allocation7 + $0x2a]]
        %v1620 = vstv %s1619
        %v1621 = vmul.f32 %v1620, %v1605
        %v1622 = vmul.f32 %v1620, %v1606
        %v1623 = vmul.f32 %v1620, %v1607
        %v1624 = vmul.f32 %v1620, %v1608
        %v1625 = vadd.f32 %v1549, %v1621
        %v1626 = vadd.f32 %v1550, %v1622
        %v1627 = vadd.f32 %v1551, %v1623
        %v1628 = vadd.f32 %v1552, %v1624
        %s1629 = sld [smem:[#allocation7 + $0x4e]]
        %v1630 = vstv %s1629
        %v1631 = vmul.f32 %v1630, %v1605
        %v1632 = vmul.f32 %v1630, %v1606
        %v1633 = vmul.f32 %v1630, %v1607
        %v1634 = vmul.f32 %v1630, %v1608
        %v1635 = vadd.f32 %v1575, %v1631
        %v1636 = vadd.f32 %v1576, %v1632
        %v1637 = vadd.f32 %v1577, %v1633
        %v1638 = vadd.f32 %v1578, %v1634
        %s1639 = sld [smem:[#allocation7 + $0x72]]
        %v1640 = vstv %s1639
        %v1641 = vmul.f32 %v1640, %v1605
        %v1642 = vmul.f32 %v1640, %v1606
        %v1643 = vmul.f32 %v1640, %v1607
        %v1644 = vmul.f32 %v1640, %v1608
        %v1645 = vadd.f32 %v1601, %v1641
        %v1646 = vadd.f32 %v1602, %v1642
        %v1647 = vadd.f32 %v1603, %v1643
        %v1648 = vadd.f32 %v1604, %v1644
        %s1649 = sld [smem:[#allocation7 + $0x7]]
        %v1650 = vstv %s1649
        %v1651 = vmul.f32 %v1650, %v1605
        %v1652 = vmul.f32 %v1650, %v1606
        %v1653 = vmul.f32 %v1650, %v1607
        %v1654 = vmul.f32 %v1650, %v1608
        %1659 = vrot.lane.b32.xlu0 %v1651, 127
        %v1660 = vpop.permute.xlu0 %1659
        %1661 = vrot.lane.b32.xlu0 %v1652, 127
        %v1662 = vpop.permute.xlu0 %1661
        %1663 = vrot.lane.b32.xlu0 %v1653, 127
        %v1664 = vpop.permute.xlu0 %1663
        %1665 = vrot.lane.b32.xlu0 %v1654, 127
        %v1666 = vpop.permute.xlu0 %1665
        %v1671 = vadd.f32 %v1615, %v1660
        %v1672 = vadd.f32 %v1616, %v1662
        %v1673 = vadd.f32 %v1617, %v1664
        %v1674 = vadd.f32 %v1618, %v1666
        %s1675 = sld [smem:[#allocation7 + $0x2b]]
        %v1676 = vstv %s1675
        %v1677 = vmul.f32 %v1676, %v1605
        %v1678 = vmul.f32 %v1676, %v1606
        %v1679 = vmul.f32 %v1676, %v1607
        %v1680 = vmul.f32 %v1676, %v1608
        %1685 = vrot.lane.b32.xlu0 %v1677, 127
        %v1686 = vpop.permute.xlu0 %1685
        %1687 = vrot.lane.b32.xlu0 %v1678, 127
        %v1688 = vpop.permute.xlu0 %1687
        %1689 = vrot.lane.b32.xlu0 %v1679, 127
        %v1690 = vpop.permute.xlu0 %1689
        %1691 = vrot.lane.b32.xlu0 %v1680, 127
        %v1692 = vpop.permute.xlu0 %1691
        %v1697 = vadd.f32 %v1625, %v1686
        %v1698 = vadd.f32 %v1626, %v1688
        %v1699 = vadd.f32 %v1627, %v1690
        %v1700 = vadd.f32 %v1628, %v1692
        %s1701 = sld [smem:[#allocation7 + $0x4f]]
        %v1702 = vstv %s1701
        %v1703 = vmul.f32 %v1702, %v1605
        %v1704 = vmul.f32 %v1702, %v1606
        %v1705 = vmul.f32 %v1702, %v1607
        %v1706 = vmul.f32 %v1702, %v1608
        %1711 = vrot.lane.b32.xlu0 %v1703, 127
        %v1712 = vpop.permute.xlu0 %1711
        %1713 = vrot.lane.b32.xlu0 %v1704, 127
        %v1714 = vpop.permute.xlu0 %1713
        %1715 = vrot.lane.b32.xlu0 %v1705, 127
        %v1716 = vpop.permute.xlu0 %1715
        %1717 = vrot.lane.b32.xlu0 %v1706, 127
        %v1718 = vpop.permute.xlu0 %1717
        %v1723 = vadd.f32 %v1635, %v1712
        %v1724 = vadd.f32 %v1636, %v1714
        %v1725 = vadd.f32 %v1637, %v1716
        %v1726 = vadd.f32 %v1638, %v1718
        %s1727 = sld [smem:[#allocation7 + $0x73]]
        %v1728 = vstv %s1727
        %v1729 = vmul.f32 %v1728, %v1605
        %v1730 = vmul.f32 %v1728, %v1606
        %v1731 = vmul.f32 %v1728, %v1607
        %v1732 = vmul.f32 %v1728, %v1608
        %1737 = vrot.lane.b32.xlu0 %v1729, 127
        %v1738 = vpop.permute.xlu0 %1737
        %1739 = vrot.lane.b32.xlu0 %v1730, 127
        %v1740 = vpop.permute.xlu0 %1739
        %1741 = vrot.lane.b32.xlu0 %v1731, 127
        %v1742 = vpop.permute.xlu0 %1741
        %1743 = vrot.lane.b32.xlu0 %v1732, 127
        %v1744 = vpop.permute.xlu0 %1743
        %v1749 = vadd.f32 %v1645, %v1738
        %v1750 = vadd.f32 %v1646, %v1740
        %v1751 = vadd.f32 %v1647, %v1742
        %v1752 = vadd.f32 %v1648, %v1744
        %s1753 = sld [smem:[#allocation7 + $0x8]]
        %v1754 = vstv %s1753
        %v1755 = vmul.f32 %v1754, %v1605
        %v1756 = vmul.f32 %v1754, %v1606
        %v1757 = vmul.f32 %v1754, %v1607
        %v1758 = vmul.f32 %v1754, %v1608
        %1763 = vrot.lane.b32.xlu0 %v1755, 126
        %v1764 = vpop.permute.xlu0 %1763
        %1765 = vrot.lane.b32.xlu0 %v1756, 126
        %v1766 = vpop.permute.xlu0 %1765
        %1767 = vrot.lane.b32.xlu0 %v1757, 126
        %v1768 = vpop.permute.xlu0 %1767
        %1769 = vrot.lane.b32.xlu0 %v1758, 126
        %v1770 = vpop.permute.xlu0 %1769
        %v1775 = vadd.f32 %v1671, %v1764
        %v1776 = vadd.f32 %v1672, %v1766
        %v1777 = vadd.f32 %v1673, %v1768
        %v1778 = vadd.f32 %v1674, %v1770
        %s1779 = sld [smem:[#allocation7 + $0x2c]]
        %v1780 = vstv %s1779
        %v1781 = vmul.f32 %v1780, %v1605
        %v1782 = vmul.f32 %v1780, %v1606
        %v1783 = vmul.f32 %v1780, %v1607
        %v1784 = vmul.f32 %v1780, %v1608
        %1789 = vrot.lane.b32.xlu0 %v1781, 126
        %v1790 = vpop.permute.xlu0 %1789
        %1791 = vrot.lane.b32.xlu0 %v1782, 126
        %v1792 = vpop.permute.xlu0 %1791
        %1793 = vrot.lane.b32.xlu0 %v1783, 126
        %v1794 = vpop.permute.xlu0 %1793
        %1795 = vrot.lane.b32.xlu0 %v1784, 126
        %v1796 = vpop.permute.xlu0 %1795
        %v1801 = vadd.f32 %v1697, %v1790
        %v1802 = vadd.f32 %v1698, %v1792
        %v1803 = vadd.f32 %v1699, %v1794
        %v1804 = vadd.f32 %v1700, %v1796
        %s1805 = sld [smem:[#allocation7 + $0x50]]
        %v1806 = vstv %s1805
        %v1807 = vmul.f32 %v1806, %v1605
        %v1808 = vmul.f32 %v1806, %v1606
        %v1809 = vmul.f32 %v1806, %v1607
        %v1810 = vmul.f32 %v1806, %v1608
        %1815 = vrot.lane.b32.xlu0 %v1807, 126
        %v1816 = vpop.permute.xlu0 %1815
        %1817 = vrot.lane.b32.xlu0 %v1808, 126
        %v1818 = vpop.permute.xlu0 %1817
        %1819 = vrot.lane.b32.xlu0 %v1809, 126
        %v1820 = vpop.permute.xlu0 %1819
        %1821 = vrot.lane.b32.xlu0 %v1810, 126
        %v1822 = vpop.permute.xlu0 %1821
        %v1827 = vadd.f32 %v1723, %v1816
        %v1828 = vadd.f32 %v1724, %v1818
        %v1829 = vadd.f32 %v1725, %v1820
        %v1830 = vadd.f32 %v1726, %v1822
        %s1831 = sld [smem:[#allocation7 + $0x74]]
        %v1832 = vstv %s1831
        %v1833 = vmul.f32 %v1832, %v1605
        %v1834 = vmul.f32 %v1832, %v1606
        %v1835 = vmul.f32 %v1832, %v1607
        %v1836 = vmul.f32 %v1832, %v1608
        %1841 = vrot.lane.b32.xlu0 %v1833, 126
        %v1842 = vpop.permute.xlu0 %1841
        %1843 = vrot.lane.b32.xlu0 %v1834, 126
        %v1844 = vpop.permute.xlu0 %1843
        %1845 = vrot.lane.b32.xlu0 %v1835, 126
        %v1846 = vpop.permute.xlu0 %1845
        %1847 = vrot.lane.b32.xlu0 %v1836, 126
        %v1848 = vpop.permute.xlu0 %1847
        %v1853 = vadd.f32 %v1749, %v1842
        %v1854 = vadd.f32 %v1750, %v1844
        %v1855 = vadd.f32 %v1751, %v1846
        %v1856 = vadd.f32 %v1752, %v1848
        %v1857 = vld [vmem:[%s679] sm:$0xff]
        %v1858 = vld [vmem:[%s679 + $0x8] sm:$0xff]
        %v1859 = vld [vmem:[%s679 + $0x10] sm:$0xff]
        %v1860 = vld [vmem:[%s679 + $0x18] sm:$0xff]
        %s1861 = sld [smem:[#allocation7 + $0x9]]
        %v1862 = vstv %s1861
        %v1863 = vmul.f32 %v1862, %v1857
        %v1864 = vmul.f32 %v1862, %v1858
        %v1865 = vmul.f32 %v1862, %v1859
        %v1866 = vmul.f32 %v1862, %v1860
        %v1867 = vadd.f32 %v1775, %v1863
        %v1868 = vadd.f32 %v1776, %v1864
        %v1869 = vadd.f32 %v1777, %v1865
        %v1870 = vadd.f32 %v1778, %v1866
        %s1871 = sld [smem:[#allocation7 + $0x2d]]
        %v1872 = vstv %s1871
        %v1873 = vmul.f32 %v1872, %v1857
        %v1874 = vmul.f32 %v1872, %v1858
        %v1875 = vmul.f32 %v1872, %v1859
        %v1876 = vmul.f32 %v1872, %v1860
        %v1877 = vadd.f32 %v1801, %v1873
        %v1878 = vadd.f32 %v1802, %v1874
        %v1879 = vadd.f32 %v1803, %v1875
        %v1880 = vadd.f32 %v1804, %v1876
        %s1881 = sld [smem:[#allocation7 + $0x51]]
        %v1882 = vstv %s1881
        %v1883 = vmul.f32 %v1882, %v1857
        %v1884 = vmul.f32 %v1882, %v1858
        %v1885 = vmul.f32 %v1882, %v1859
        %v1886 = vmul.f32 %v1882, %v1860
        %v1887 = vadd.f32 %v1827, %v1883
        %v1888 = vadd.f32 %v1828, %v1884
        %v1889 = vadd.f32 %v1829, %v1885
        %v1890 = vadd.f32 %v1830, %v1886
        %s1891 = sld [smem:[#allocation7 + $0x75]]
        %v1892 = vstv %s1891
        %v1893 = vmul.f32 %v1892, %v1857
        %v1894 = vmul.f32 %v1892, %v1858
        %v1895 = vmul.f32 %v1892, %v1859
        %v1896 = vmul.f32 %v1892, %v1860
        %v1897 = vadd.f32 %v1853, %v1893
        %v1898 = vadd.f32 %v1854, %v1894
        %v1899 = vadd.f32 %v1855, %v1895
        %v1900 = vadd.f32 %v1856, %v1896
        %s1901 = sld [smem:[#allocation7 + $0xa]]
        %v1902 = vstv %s1901
        %v1903 = vmul.f32 %v1902, %v1857
        %v1904 = vmul.f32 %v1902, %v1858
        %v1905 = vmul.f32 %v1902, %v1859
        %v1906 = vmul.f32 %v1902, %v1860
        %1911 = vrot.lane.b32.xlu0 %v1903, 127
        %v1912 = vpop.permute.xlu0 %1911
        %1913 = vrot.lane.b32.xlu0 %v1904, 127
        %v1914 = vpop.permute.xlu0 %1913
        %1915 = vrot.lane.b32.xlu0 %v1905, 127
        %v1916 = vpop.permute.xlu0 %1915
        %1917 = vrot.lane.b32.xlu0 %v1906, 127
        %v1918 = vpop.permute.xlu0 %1917
        %v1923 = vadd.f32 %v1867, %v1912
        %v1924 = vadd.f32 %v1868, %v1914
        %v1925 = vadd.f32 %v1869, %v1916
        %v1926 = vadd.f32 %v1870, %v1918
        %s1927 = sld [smem:[#allocation7 + $0x2e]]
        %v1928 = vstv %s1927
        %v1929 = vmul.f32 %v1928, %v1857
        %v1930 = vmul.f32 %v1928, %v1858
        %v1931 = vmul.f32 %v1928, %v1859
        %v1932 = vmul.f32 %v1928, %v1860
        %1937 = vrot.lane.b32.xlu0 %v1929, 127
        %v1938 = vpop.permute.xlu0 %1937
        %1939 = vrot.lane.b32.xlu0 %v1930, 127
        %v1940 = vpop.permute.xlu0 %1939
        %1941 = vrot.lane.b32.xlu0 %v1931, 127
        %v1942 = vpop.permute.xlu0 %1941
        %1943 = vrot.lane.b32.xlu0 %v1932, 127
        %v1944 = vpop.permute.xlu0 %1943
        %v1949 = vadd.f32 %v1877, %v1938
        %v1950 = vadd.f32 %v1878, %v1940
        %v1951 = vadd.f32 %v1879, %v1942
        %v1952 = vadd.f32 %v1880, %v1944
        %s1953 = sld [smem:[#allocation7 + $0x52]]
        %v1954 = vstv %s1953
        %v1955 = vmul.f32 %v1954, %v1857
        %v1956 = vmul.f32 %v1954, %v1858
        %v1957 = vmul.f32 %v1954, %v1859
        %v1958 = vmul.f32 %v1954, %v1860
        %1963 = vrot.lane.b32.xlu0 %v1955, 127
        %v1964 = vpop.permute.xlu0 %1963
        %1965 = vrot.lane.b32.xlu0 %v1956, 127
        %v1966 = vpop.permute.xlu0 %1965
        %1967 = vrot.lane.b32.xlu0 %v1957, 127
        %v1968 = vpop.permute.xlu0 %1967
        %1969 = vrot.lane.b32.xlu0 %v1958, 127
        %v1970 = vpop.permute.xlu0 %1969
        %v1975 = vadd.f32 %v1887, %v1964
        %v1976 = vadd.f32 %v1888, %v1966
        %v1977 = vadd.f32 %v1889, %v1968
        %v1978 = vadd.f32 %v1890, %v1970
        %s1979 = sld [smem:[#allocation7 + $0x76]]
        %v1980 = vstv %s1979
        %v1981 = vmul.f32 %v1980, %v1857
        %v1982 = vmul.f32 %v1980, %v1858
        %v1983 = vmul.f32 %v1980, %v1859
        %v1984 = vmul.f32 %v1980, %v1860
        %1989 = vrot.lane.b32.xlu0 %v1981, 127
        %v1990 = vpop.permute.xlu0 %1989
        %1991 = vrot.lane.b32.xlu0 %v1982, 127
        %v1992 = vpop.permute.xlu0 %1991
        %1993 = vrot.lane.b32.xlu0 %v1983, 127
        %v1994 = vpop.permute.xlu0 %1993
        %1995 = vrot.lane.b32.xlu0 %v1984, 127
        %v1996 = vpop.permute.xlu0 %1995
        %v2001 = vadd.f32 %v1897, %v1990
        %v2002 = vadd.f32 %v1898, %v1992
        %v2003 = vadd.f32 %v1899, %v1994
        %v2004 = vadd.f32 %v1900, %v1996
        %s2005 = sld [smem:[#allocation7 + $0xb]]
        %v2006 = vstv %s2005
        %v2007 = vmul.f32 %v2006, %v1857
        %v2008 = vmul.f32 %v2006, %v1858
        %v2009 = vmul.f32 %v2006, %v1859
        %v2010 = vmul.f32 %v2006, %v1860
        %2015 = vrot.lane.b32.xlu0 %v2007, 126
        %v2016 = vpop.permute.xlu0 %2015
        %2017 = vrot.lane.b32.xlu0 %v2008, 126
        %v2018 = vpop.permute.xlu0 %2017
        %2019 = vrot.lane.b32.xlu0 %v2009, 126
        %v2020 = vpop.permute.xlu0 %2019
        %2021 = vrot.lane.b32.xlu0 %v2010, 126
        %v2022 = vpop.permute.xlu0 %2021
        %v2027 = vadd.f32 %v1923, %v2016
        %v2028 = vadd.f32 %v1924, %v2018
        %v2029 = vadd.f32 %v1925, %v2020
        %v2030 = vadd.f32 %v1926, %v2022
        %s2031 = sld [smem:[#allocation7 + $0x2f]]
        %v2032 = vstv %s2031
        %v2033 = vmul.f32 %v2032, %v1857
        %v2034 = vmul.f32 %v2032, %v1858
        %v2035 = vmul.f32 %v2032, %v1859
        %v2036 = vmul.f32 %v2032, %v1860
        %2041 = vrot.lane.b32.xlu0 %v2033, 126
        %v2042 = vpop.permute.xlu0 %2041
        %2043 = vrot.lane.b32.xlu0 %v2034, 126
        %v2044 = vpop.permute.xlu0 %2043
        %2045 = vrot.lane.b32.xlu0 %v2035, 126
        %v2046 = vpop.permute.xlu0 %2045
        %2047 = vrot.lane.b32.xlu0 %v2036, 126
        %v2048 = vpop.permute.xlu0 %2047
        %v2053 = vadd.f32 %v1949, %v2042
        %v2054 = vadd.f32 %v1950, %v2044
        %v2055 = vadd.f32 %v1951, %v2046
        %v2056 = vadd.f32 %v1952, %v2048
        %s2057 = sld [smem:[#allocation7 + $0x53]]
        %v2058 = vstv %s2057
        %v2059 = vmul.f32 %v2058, %v1857
        %v2060 = vmul.f32 %v2058, %v1858
        %v2061 = vmul.f32 %v2058, %v1859
        %v2062 = vmul.f32 %v2058, %v1860
        %2067 = vrot.lane.b32.xlu0 %v2059, 126
        %v2068 = vpop.permute.xlu0 %2067
        %2069 = vrot.lane.b32.xlu0 %v2060, 126
        %v2070 = vpop.permute.xlu0 %2069
        %2071 = vrot.lane.b32.xlu0 %v2061, 126
        %v2072 = vpop.permute.xlu0 %2071
        %2073 = vrot.lane.b32.xlu0 %v2062, 126
        %v2074 = vpop.permute.xlu0 %2073
        %v2079 = vadd.f32 %v1975, %v2068
        %v2080 = vadd.f32 %v1976, %v2070
        %v2081 = vadd.f32 %v1977, %v2072
        %v2082 = vadd.f32 %v1978, %v2074
        %s2083 = sld [smem:[#allocation7 + $0x77]]
        %v2084 = vstv %s2083
        %v2085 = vmul.f32 %v2084, %v1857
        %v2086 = vmul.f32 %v2084, %v1858
        %v2087 = vmul.f32 %v2084, %v1859
        %v2088 = vmul.f32 %v2084, %v1860
        %2093 = vrot.lane.b32.xlu0 %v2085, 126
        %v2094 = vpop.permute.xlu0 %2093
        %2095 = vrot.lane.b32.xlu0 %v2086, 126
        %v2096 = vpop.permute.xlu0 %2095
        %2097 = vrot.lane.b32.xlu0 %v2087, 126
        %v2098 = vpop.permute.xlu0 %2097
        %2099 = vrot.lane.b32.xlu0 %v2088, 126
        %v2100 = vpop.permute.xlu0 %2099
        %v2105 = vadd.f32 %v2001, %v2094
        %v2106 = vadd.f32 %v2002, %v2096
        %v2107 = vadd.f32 %v2003, %v2098
        %v2108 = vadd.f32 %v2004, %v2100
        %v2109 = vld [vmem:[%s679 + $0x1] sm:$0xff]
        %v2110 = vld [vmem:[%s679 + $0x9] sm:$0xff]
        %v2111 = vld [vmem:[%s679 + $0x11] sm:$0xff]
        %v2112 = vld [vmem:[%s679 + $0x19] sm:$0xff]
        %s2113 = sld [smem:[#allocation7 + $0xc]]
        %v2114 = vstv %s2113
        %v2115 = vmul.f32 %v2114, %v2109
        %v2116 = vmul.f32 %v2114, %v2110
        %v2117 = vmul.f32 %v2114, %v2111
        %v2118 = vmul.f32 %v2114, %v2112
        %v2119 = vadd.f32 %v2027, %v2115
        %v2120 = vadd.f32 %v2028, %v2116
        %v2121 = vadd.f32 %v2029, %v2117
        %v2122 = vadd.f32 %v2030, %v2118
        %s2123 = sld [smem:[#allocation7 + $0x30]]
        %v2124 = vstv %s2123
        %v2125 = vmul.f32 %v2124, %v2109
        %v2126 = vmul.f32 %v2124, %v2110
        %v2127 = vmul.f32 %v2124, %v2111
        %v2128 = vmul.f32 %v2124, %v2112
        %v2129 = vadd.f32 %v2053, %v2125
        %v2130 = vadd.f32 %v2054, %v2126
        %v2131 = vadd.f32 %v2055, %v2127
        %v2132 = vadd.f32 %v2056, %v2128
        %s2133 = sld [smem:[#allocation7 + $0x54]]
        %v2134 = vstv %s2133
        %v2135 = vmul.f32 %v2134, %v2109
        %v2136 = vmul.f32 %v2134, %v2110
        %v2137 = vmul.f32 %v2134, %v2111
        %v2138 = vmul.f32 %v2134, %v2112
        %v2139 = vadd.f32 %v2079, %v2135
        %v2140 = vadd.f32 %v2080, %v2136
        %v2141 = vadd.f32 %v2081, %v2137
        %v2142 = vadd.f32 %v2082, %v2138
        %s2143 = sld [smem:[#allocation7 + $0x78]]
        %v2144 = vstv %s2143
        %v2145 = vmul.f32 %v2144, %v2109
        %v2146 = vmul.f32 %v2144, %v2110
        %v2147 = vmul.f32 %v2144, %v2111
        %v2148 = vmul.f32 %v2144, %v2112
        %v2149 = vadd.f32 %v2105, %v2145
        %v2150 = vadd.f32 %v2106, %v2146
        %v2151 = vadd.f32 %v2107, %v2147
        %v2152 = vadd.f32 %v2108, %v2148
        %s2153 = sld [smem:[#allocation7 + $0xd]]
        %v2154 = vstv %s2153
        %v2155 = vmul.f32 %v2154, %v2109
        %v2156 = vmul.f32 %v2154, %v2110
        %v2157 = vmul.f32 %v2154, %v2111
        %v2158 = vmul.f32 %v2154, %v2112
        %2163 = vrot.lane.b32.xlu0 %v2155, 127
        %v2164 = vpop.permute.xlu0 %2163
        %2165 = vrot.lane.b32.xlu0 %v2156, 127
        %v2166 = vpop.permute.xlu0 %2165
        %2167 = vrot.lane.b32.xlu0 %v2157, 127
        %v2168 = vpop.permute.xlu0 %2167
        %2169 = vrot.lane.b32.xlu0 %v2158, 127
        %v2170 = vpop.permute.xlu0 %2169
        %v2175 = vadd.f32 %v2119, %v2164
        %v2176 = vadd.f32 %v2120, %v2166
        %v2177 = vadd.f32 %v2121, %v2168
        %v2178 = vadd.f32 %v2122, %v2170
        %s2179 = sld [smem:[#allocation7 + $0x31]]
        %v2180 = vstv %s2179
        %v2181 = vmul.f32 %v2180, %v2109
        %v2182 = vmul.f32 %v2180, %v2110
        %v2183 = vmul.f32 %v2180, %v2111
        %v2184 = vmul.f32 %v2180, %v2112
        %2189 = vrot.lane.b32.xlu0 %v2181, 127
        %v2190 = vpop.permute.xlu0 %2189
        %2191 = vrot.lane.b32.xlu0 %v2182, 127
        %v2192 = vpop.permute.xlu0 %2191
        %2193 = vrot.lane.b32.xlu0 %v2183, 127
        %v2194 = vpop.permute.xlu0 %2193
        %2195 = vrot.lane.b32.xlu0 %v2184, 127
        %v2196 = vpop.permute.xlu0 %2195
        %v2201 = vadd.f32 %v2129, %v2190
        %v2202 = vadd.f32 %v2130, %v2192
        %v2203 = vadd.f32 %v2131, %v2194
        %v2204 = vadd.f32 %v2132, %v2196
        %s2205 = sld [smem:[#allocation7 + $0x55]]
        %v2206 = vstv %s2205
        %v2207 = vmul.f32 %v2206, %v2109
        %v2208 = vmul.f32 %v2206, %v2110
        %v2209 = vmul.f32 %v2206, %v2111
        %v2210 = vmul.f32 %v2206, %v2112
        %2215 = vrot.lane.b32.xlu0 %v2207, 127
        %v2216 = vpop.permute.xlu0 %2215
        %2217 = vrot.lane.b32.xlu0 %v2208, 127
        %v2218 = vpop.permute.xlu0 %2217
        %2219 = vrot.lane.b32.xlu0 %v2209, 127
        %v2220 = vpop.permute.xlu0 %2219
        %2221 = vrot.lane.b32.xlu0 %v2210, 127
        %v2222 = vpop.permute.xlu0 %2221
        %v2227 = vadd.f32 %v2139, %v2216
        %v2228 = vadd.f32 %v2140, %v2218
        %v2229 = vadd.f32 %v2141, %v2220
        %v2230 = vadd.f32 %v2142, %v2222
        %s2231 = sld [smem:[#allocation7 + $0x79]]
        %v2232 = vstv %s2231
        %v2233 = vmul.f32 %v2232, %v2109
        %v2234 = vmul.f32 %v2232, %v2110
        %v2235 = vmul.f32 %v2232, %v2111
        %v2236 = vmul.f32 %v2232, %v2112
        %2241 = vrot.lane.b32.xlu0 %v2233, 127
        %v2242 = vpop.permute.xlu0 %2241
        %2243 = vrot.lane.b32.xlu0 %v2234, 127
        %v2244 = vpop.permute.xlu0 %2243
        %2245 = vrot.lane.b32.xlu0 %v2235, 127
        %v2246 = vpop.permute.xlu0 %2245
        %2247 = vrot.lane.b32.xlu0 %v2236, 127
        %v2248 = vpop.permute.xlu0 %2247
        %v2253 = vadd.f32 %v2149, %v2242
        %v2254 = vadd.f32 %v2150, %v2244
        %v2255 = vadd.f32 %v2151, %v2246
        %v2256 = vadd.f32 %v2152, %v2248
        %s2257 = sld [smem:[#allocation7 + $0xe]]
        %v2258 = vstv %s2257
        %v2259 = vmul.f32 %v2258, %v2109
        %v2260 = vmul.f32 %v2258, %v2110
        %v2261 = vmul.f32 %v2258, %v2111
        %v2262 = vmul.f32 %v2258, %v2112
        %2267 = vrot.lane.b32.xlu0 %v2259, 126
        %v2268 = vpop.permute.xlu0 %2267
        %2269 = vrot.lane.b32.xlu0 %v2260, 126
        %v2270 = vpop.permute.xlu0 %2269
        %2271 = vrot.lane.b32.xlu0 %v2261, 126
        %v2272 = vpop.permute.xlu0 %2271
        %2273 = vrot.lane.b32.xlu0 %v2262, 126
        %v2274 = vpop.permute.xlu0 %2273
        %v2279 = vadd.f32 %v2175, %v2268
        %v2280 = vadd.f32 %v2176, %v2270
        %v2281 = vadd.f32 %v2177, %v2272
        %v2282 = vadd.f32 %v2178, %v2274
        %s2283 = sld [smem:[#allocation7 + $0x32]]
        %v2284 = vstv %s2283
        %v2285 = vmul.f32 %v2284, %v2109
        %v2286 = vmul.f32 %v2284, %v2110
        %v2287 = vmul.f32 %v2284, %v2111
        %v2288 = vmul.f32 %v2284, %v2112
        %2293 = vrot.lane.b32.xlu0 %v2285, 126
        %v2294 = vpop.permute.xlu0 %2293
        %2295 = vrot.lane.b32.xlu0 %v2286, 126
        %v2296 = vpop.permute.xlu0 %2295
        %2297 = vrot.lane.b32.xlu0 %v2287, 126
        %v2298 = vpop.permute.xlu0 %2297
        %2299 = vrot.lane.b32.xlu0 %v2288, 126
        %v2300 = vpop.permute.xlu0 %2299
        %v2305 = vadd.f32 %v2201, %v2294
        %v2306 = vadd.f32 %v2202, %v2296
        %v2307 = vadd.f32 %v2203, %v2298
        %v2308 = vadd.f32 %v2204, %v2300
        %s2309 = sld [smem:[#allocation7 + $0x56]]
        %v2310 = vstv %s2309
        %v2311 = vmul.f32 %v2310, %v2109
        %v2312 = vmul.f32 %v2310, %v2110
        %v2313 = vmul.f32 %v2310, %v2111
        %v2314 = vmul.f32 %v2310, %v2112
        %2319 = vrot.lane.b32.xlu0 %v2311, 126
        %v2320 = vpop.permute.xlu0 %2319
        %2321 = vrot.lane.b32.xlu0 %v2312, 126
        %v2322 = vpop.permute.xlu0 %2321
        %2323 = vrot.lane.b32.xlu0 %v2313, 126
        %v2324 = vpop.permute.xlu0 %2323
        %2325 = vrot.lane.b32.xlu0 %v2314, 126
        %v2326 = vpop.permute.xlu0 %2325
        %v2331 = vadd.f32 %v2227, %v2320
        %v2332 = vadd.f32 %v2228, %v2322
        %v2333 = vadd.f32 %v2229, %v2324
        %v2334 = vadd.f32 %v2230, %v2326
        %s2335 = sld [smem:[#allocation7 + $0x7a]]
        %v2336 = vstv %s2335
        %v2337 = vmul.f32 %v2336, %v2109
        %v2338 = vmul.f32 %v2336, %v2110
        %v2339 = vmul.f32 %v2336, %v2111
        %v2340 = vmul.f32 %v2336, %v2112
        %2345 = vrot.lane.b32.xlu0 %v2337, 126
        %v2346 = vpop.permute.xlu0 %2345
        %2347 = vrot.lane.b32.xlu0 %v2338, 126
        %v2348 = vpop.permute.xlu0 %2347
        %2349 = vrot.lane.b32.xlu0 %v2339, 126
        %v2350 = vpop.permute.xlu0 %2349
        %2351 = vrot.lane.b32.xlu0 %v2340, 126
        %v2352 = vpop.permute.xlu0 %2351
        %v2357 = vadd.f32 %v2253, %v2346
        %v2358 = vadd.f32 %v2254, %v2348
        %v2359 = vadd.f32 %v2255, %v2350
        %v2360 = vadd.f32 %v2256, %v2352
        %v2361 = vld [vmem:[%s679 + $0x2] sm:$0xff]
        %v2362 = vld [vmem:[%s679 + $0xa] sm:$0xff]
        %v2363 = vld [vmem:[%s679 + $0x12] sm:$0xff]
        %v2364 = vld [vmem:[%s679 + $0x1a] sm:$0xff]
        %s2365 = sld [smem:[#allocation7 + $0xf]]
        %v2366 = vstv %s2365
        %v2367 = vmul.f32 %v2366, %v2361
        %v2368 = vmul.f32 %v2366, %v2362
        %v2369 = vmul.f32 %v2366, %v2363
        %v2370 = vmul.f32 %v2366, %v2364
        %v2371 = vadd.f32 %v2279, %v2367
        %v2372 = vadd.f32 %v2280, %v2368
        %v2373 = vadd.f32 %v2281, %v2369
        %v2374 = vadd.f32 %v2282, %v2370
        %s2375 = sld [smem:[#allocation7 + $0x33]]
        %v2376 = vstv %s2375
        %v2377 = vmul.f32 %v2376, %v2361
        %v2378 = vmul.f32 %v2376, %v2362
        %v2379 = vmul.f32 %v2376, %v2363
        %v2380 = vmul.f32 %v2376, %v2364
        %v2381 = vadd.f32 %v2305, %v2377
        %v2382 = vadd.f32 %v2306, %v2378
        %v2383 = vadd.f32 %v2307, %v2379
        %v2384 = vadd.f32 %v2308, %v2380
        %s2385 = sld [smem:[#allocation7 + $0x57]]
        %v2386 = vstv %s2385
        %v2387 = vmul.f32 %v2386, %v2361
        %v2388 = vmul.f32 %v2386, %v2362
        %v2389 = vmul.f32 %v2386, %v2363
        %v2390 = vmul.f32 %v2386, %v2364
        %v2391 = vadd.f32 %v2331, %v2387
        %v2392 = vadd.f32 %v2332, %v2388
        %v2393 = vadd.f32 %v2333, %v2389
        %v2394 = vadd.f32 %v2334, %v2390
        %s2395 = sld [smem:[#allocation7 + $0x7b]]
        %v2396 = vstv %s2395
        %v2397 = vmul.f32 %v2396, %v2361
        %v2398 = vmul.f32 %v2396, %v2362
        %v2399 = vmul.f32 %v2396, %v2363
        %v2400 = vmul.f32 %v2396, %v2364
        %v2401 = vadd.f32 %v2357, %v2397
        %v2402 = vadd.f32 %v2358, %v2398
        %v2403 = vadd.f32 %v2359, %v2399
        %v2404 = vadd.f32 %v2360, %v2400
        %s2405 = sld [smem:[#allocation7 + $0x10]]
        %v2406 = vstv %s2405
        %v2407 = vmul.f32 %v2406, %v2361
        %v2408 = vmul.f32 %v2406, %v2362
        %v2409 = vmul.f32 %v2406, %v2363
        %v2410 = vmul.f32 %v2406, %v2364
        %2415 = vrot.lane.b32.xlu0 %v2407, 127
        %v2416 = vpop.permute.xlu0 %2415
        %2417 = vrot.lane.b32.xlu0 %v2408, 127
        %v2418 = vpop.permute.xlu0 %2417
        %2419 = vrot.lane.b32.xlu0 %v2409, 127
        %v2420 = vpop.permute.xlu0 %2419
        %2421 = vrot.lane.b32.xlu0 %v2410, 127
        %v2422 = vpop.permute.xlu0 %2421
        %v2427 = vadd.f32 %v2371, %v2416
        %v2428 = vadd.f32 %v2372, %v2418
        %v2429 = vadd.f32 %v2373, %v2420
        %v2430 = vadd.f32 %v2374, %v2422
        %s2431 = sld [smem:[#allocation7 + $0x34]]
        %v2432 = vstv %s2431
        %v2433 = vmul.f32 %v2432, %v2361
        %v2434 = vmul.f32 %v2432, %v2362
        %v2435 = vmul.f32 %v2432, %v2363
        %v2436 = vmul.f32 %v2432, %v2364
        %2441 = vrot.lane.b32.xlu0 %v2433, 127
        %v2442 = vpop.permute.xlu0 %2441
        %2443 = vrot.lane.b32.xlu0 %v2434, 127
        %v2444 = vpop.permute.xlu0 %2443
        %2445 = vrot.lane.b32.xlu0 %v2435, 127
        %v2446 = vpop.permute.xlu0 %2445
        %2447 = vrot.lane.b32.xlu0 %v2436, 127
        %v2448 = vpop.permute.xlu0 %2447
        %v2453 = vadd.f32 %v2381, %v2442
        %v2454 = vadd.f32 %v2382, %v2444
        %v2455 = vadd.f32 %v2383, %v2446
        %v2456 = vadd.f32 %v2384, %v2448
        %s2457 = sld [smem:[#allocation7 + $0x58]]
        %v2458 = vstv %s2457
        %v2459 = vmul.f32 %v2458, %v2361
        %v2460 = vmul.f32 %v2458, %v2362
        %v2461 = vmul.f32 %v2458, %v2363
        %v2462 = vmul.f32 %v2458, %v2364
        %2467 = vrot.lane.b32.xlu0 %v2459, 127
        %v2468 = vpop.permute.xlu0 %2467
        %2469 = vrot.lane.b32.xlu0 %v2460, 127
        %v2470 = vpop.permute.xlu0 %2469
        %2471 = vrot.lane.b32.xlu0 %v2461, 127
        %v2472 = vpop.permute.xlu0 %2471
        %2473 = vrot.lane.b32.xlu0 %v2462, 127
        %v2474 = vpop.permute.xlu0 %2473
        %v2479 = vadd.f32 %v2391, %v2468
        %v2480 = vadd.f32 %v2392, %v2470
        %v2481 = vadd.f32 %v2393, %v2472
        %v2482 = vadd.f32 %v2394, %v2474
        %s2483 = sld [smem:[#allocation7 + $0x7c]]
        %v2484 = vstv %s2483
        %v2485 = vmul.f32 %v2484, %v2361
        %v2486 = vmul.f32 %v2484, %v2362
        %v2487 = vmul.f32 %v2484, %v2363
        %v2488 = vmul.f32 %v2484, %v2364
        %2493 = vrot.lane.b32.xlu0 %v2485, 127
        %v2494 = vpop.permute.xlu0 %2493
        %2495 = vrot.lane.b32.xlu0 %v2486, 127
        %v2496 = vpop.permute.xlu0 %2495
        %2497 = vrot.lane.b32.xlu0 %v2487, 127
        %v2498 = vpop.permute.xlu0 %2497
        %2499 = vrot.lane.b32.xlu0 %v2488, 127
        %v2500 = vpop.permute.xlu0 %2499
        %v2505 = vadd.f32 %v2401, %v2494
        %v2506 = vadd.f32 %v2402, %v2496
        %v2507 = vadd.f32 %v2403, %v2498
        %v2508 = vadd.f32 %v2404, %v2500
        %s2509 = sld [smem:[#allocation7 + $0x11]]
        %v2510 = vstv %s2509
        %v2511 = vmul.f32 %v2510, %v2361
        %v2512 = vmul.f32 %v2510, %v2362
        %v2513 = vmul.f32 %v2510, %v2363
        %v2514 = vmul.f32 %v2510, %v2364
        %2519 = vrot.lane.b32.xlu0 %v2511, 126
        %v2520 = vpop.permute.xlu0 %2519
        %2521 = vrot.lane.b32.xlu0 %v2512, 126
        %v2522 = vpop.permute.xlu0 %2521
        %2523 = vrot.lane.b32.xlu0 %v2513, 126
        %v2524 = vpop.permute.xlu0 %2523
        %2525 = vrot.lane.b32.xlu0 %v2514, 126
        %v2526 = vpop.permute.xlu0 %2525
        %v2531 = vadd.f32 %v2427, %v2520
        %v2532 = vadd.f32 %v2428, %v2522
        %v2533 = vadd.f32 %v2429, %v2524
        %v2534 = vadd.f32 %v2430, %v2526
        %s2535 = sld [smem:[#allocation7 + $0x35]]
        %v2536 = vstv %s2535
        %v2537 = vmul.f32 %v2536, %v2361
        %v2538 = vmul.f32 %v2536, %v2362
        %v2539 = vmul.f32 %v2536, %v2363
        %v2540 = vmul.f32 %v2536, %v2364
        %2545 = vrot.lane.b32.xlu0 %v2537, 126
        %v2546 = vpop.permute.xlu0 %2545
        %2547 = vrot.lane.b32.xlu0 %v2538, 126
        %v2548 = vpop.permute.xlu0 %2547
        %2549 = vrot.lane.b32.xlu0 %v2539, 126
        %v2550 = vpop.permute.xlu0 %2549
        %2551 = vrot.lane.b32.xlu0 %v2540, 126
        %v2552 = vpop.permute.xlu0 %2551
        %v2557 = vadd.f32 %v2453, %v2546
        %v2558 = vadd.f32 %v2454, %v2548
        %v2559 = vadd.f32 %v2455, %v2550
        %v2560 = vadd.f32 %v2456, %v2552
        %s2561 = sld [smem:[#allocation7 + $0x59]]
        %v2562 = vstv %s2561
        %v2563 = vmul.f32 %v2562, %v2361
        %v2564 = vmul.f32 %v2562, %v2362
        %v2565 = vmul.f32 %v2562, %v2363
        %v2566 = vmul.f32 %v2562, %v2364
        %2571 = vrot.lane.b32.xlu0 %v2563, 126
        %v2572 = vpop.permute.xlu0 %2571
        %2573 = vrot.lane.b32.xlu0 %v2564, 126
        %v2574 = vpop.permute.xlu0 %2573
        %2575 = vrot.lane.b32.xlu0 %v2565, 126
        %v2576 = vpop.permute.xlu0 %2575
        %2577 = vrot.lane.b32.xlu0 %v2566, 126
        %v2578 = vpop.permute.xlu0 %2577
        %v2583 = vadd.f32 %v2479, %v2572
        %v2584 = vadd.f32 %v2480, %v2574
        %v2585 = vadd.f32 %v2481, %v2576
        %v2586 = vadd.f32 %v2482, %v2578
        %s2587 = sld [smem:[#allocation7 + $0x7d]]
        %v2588 = vstv %s2587
        %v2589 = vmul.f32 %v2588, %v2361
        %v2590 = vmul.f32 %v2588, %v2362
        %v2591 = vmul.f32 %v2588, %v2363
        %v2592 = vmul.f32 %v2588, %v2364
        %2597 = vrot.lane.b32.xlu0 %v2589, 126
        %v2598 = vpop.permute.xlu0 %2597
        %2599 = vrot.lane.b32.xlu0 %v2590, 126
        %v2600 = vpop.permute.xlu0 %2599
        %2601 = vrot.lane.b32.xlu0 %v2591, 126
        %v2602 = vpop.permute.xlu0 %2601
        %2603 = vrot.lane.b32.xlu0 %v2592, 126
        %v2604 = vpop.permute.xlu0 %2603
        %v2609 = vadd.f32 %v2505, %v2598
        %v2610 = vadd.f32 %v2506, %v2600
        %v2611 = vadd.f32 %v2507, %v2602
        %v2612 = vadd.f32 %v2508, %v2604
        %v2613 = vld [vmem:[%s883] sm:$0xff]
        %v2614 = vld [vmem:[%s883 + $0x8] sm:$0xff]
        %v2615 = vld [vmem:[%s883 + $0x10] sm:$0xff]
        %v2616 = vld [vmem:[%s883 + $0x18] sm:$0xff]
        %s2617 = sld [smem:[#allocation7 + $0x12]]
        %v2618 = vstv %s2617
        %v2619 = vmul.f32 %v2618, %v2613
        %v2620 = vmul.f32 %v2618, %v2614
        %v2621 = vmul.f32 %v2618, %v2615
        %v2622 = vmul.f32 %v2618, %v2616
        %v2623 = vadd.f32 %v2531, %v2619
        %v2624 = vadd.f32 %v2532, %v2620
        %v2625 = vadd.f32 %v2533, %v2621
        %v2626 = vadd.f32 %v2534, %v2622
        %s2627 = sld [smem:[#allocation7 + $0x36]]
        %v2628 = vstv %s2627
        %v2629 = vmul.f32 %v2628, %v2613
        %v2630 = vmul.f32 %v2628, %v2614
        %v2631 = vmul.f32 %v2628, %v2615
        %v2632 = vmul.f32 %v2628, %v2616
        %v2633 = vadd.f32 %v2557, %v2629
        %v2634 = vadd.f32 %v2558, %v2630
        %v2635 = vadd.f32 %v2559, %v2631
        %v2636 = vadd.f32 %v2560, %v2632
        %s2637 = sld [smem:[#allocation7 + $0x5a]]
        %v2638 = vstv %s2637
        %v2639 = vmul.f32 %v2638, %v2613
        %v2640 = vmul.f32 %v2638, %v2614
        %v2641 = vmul.f32 %v2638, %v2615
        %v2642 = vmul.f32 %v2638, %v2616
        %v2643 = vadd.f32 %v2583, %v2639
        %v2644 = vadd.f32 %v2584, %v2640
        %v2645 = vadd.f32 %v2585, %v2641
        %v2646 = vadd.f32 %v2586, %v2642
        %s2647 = sld [smem:[#allocation7 + $0x7e]]
        %v2648 = vstv %s2647
        %v2649 = vmul.f32 %v2648, %v2613
        %v2650 = vmul.f32 %v2648, %v2614
        %v2651 = vmul.f32 %v2648, %v2615
        %v2652 = vmul.f32 %v2648, %v2616
        %v2653 = vadd.f32 %v2609, %v2649
        %v2654 = vadd.f32 %v2610, %v2650
        %v2655 = vadd.f32 %v2611, %v2651
        %v2656 = vadd.f32 %v2612, %v2652
        %s2657 = sld [smem:[#allocation7 + $0x13]]
        %v2658 = vstv %s2657
        %v2659 = vmul.f32 %v2658, %v2613
        %v2660 = vmul.f32 %v2658, %v2614
        %v2661 = vmul.f32 %v2658, %v2615
        %v2662 = vmul.f32 %v2658, %v2616
        %2667 = vrot.lane.b32.xlu0 %v2659, 127
        %v2668 = vpop.permute.xlu0 %2667
        %2669 = vrot.lane.b32.xlu0 %v2660, 127
        %v2670 = vpop.permute.xlu0 %2669
        %2671 = vrot.lane.b32.xlu0 %v2661, 127
        %v2672 = vpop.permute.xlu0 %2671
        %2673 = vrot.lane.b32.xlu0 %v2662, 127
        %v2674 = vpop.permute.xlu0 %2673
        %v2679 = vadd.f32 %v2623, %v2668
        %v2680 = vadd.f32 %v2624, %v2670
        %v2681 = vadd.f32 %v2625, %v2672
        %v2682 = vadd.f32 %v2626, %v2674
        %s2683 = sld [smem:[#allocation7 + $0x37]]
        %v2684 = vstv %s2683
        %v2685 = vmul.f32 %v2684, %v2613
        %v2686 = vmul.f32 %v2684, %v2614
        %v2687 = vmul.f32 %v2684, %v2615
        %v2688 = vmul.f32 %v2684, %v2616
        %2693 = vrot.lane.b32.xlu0 %v2685, 127
        %v2694 = vpop.permute.xlu0 %2693
        %2695 = vrot.lane.b32.xlu0 %v2686, 127
        %v2696 = vpop.permute.xlu0 %2695
        %2697 = vrot.lane.b32.xlu0 %v2687, 127
        %v2698 = vpop.permute.xlu0 %2697
        %2699 = vrot.lane.b32.xlu0 %v2688, 127
        %v2700 = vpop.permute.xlu0 %2699
        %v2705 = vadd.f32 %v2633, %v2694
        %v2706 = vadd.f32 %v2634, %v2696
        %v2707 = vadd.f32 %v2635, %v2698
        %v2708 = vadd.f32 %v2636, %v2700
        %s2709 = sld [smem:[#allocation7 + $0x5b]]
        %v2710 = vstv %s2709
        %v2711 = vmul.f32 %v2710, %v2613
        %v2712 = vmul.f32 %v2710, %v2614
        %v2713 = vmul.f32 %v2710, %v2615
        %v2714 = vmul.f32 %v2710, %v2616
        %2719 = vrot.lane.b32.xlu0 %v2711, 127
        %v2720 = vpop.permute.xlu0 %2719
        %2721 = vrot.lane.b32.xlu0 %v2712, 127
        %v2722 = vpop.permute.xlu0 %2721
        %2723 = vrot.lane.b32.xlu0 %v2713, 127
        %v2724 = vpop.permute.xlu0 %2723
        %2725 = vrot.lane.b32.xlu0 %v2714, 127
        %v2726 = vpop.permute.xlu0 %2725
        %v2731 = vadd.f32 %v2643, %v2720
        %v2732 = vadd.f32 %v2644, %v2722
        %v2733 = vadd.f32 %v2645, %v2724
        %v2734 = vadd.f32 %v2646, %v2726
        %s2735 = sld [smem:[#allocation7 + $0x7f]]
        %v2736 = vstv %s2735
        %v2737 = vmul.f32 %v2736, %v2613
        %v2738 = vmul.f32 %v2736, %v2614
        %v2739 = vmul.f32 %v2736, %v2615
        %v2740 = vmul.f32 %v2736, %v2616
        %2745 = vrot.lane.b32.xlu0 %v2737, 127
        %v2746 = vpop.permute.xlu0 %2745
        %2747 = vrot.lane.b32.xlu0 %v2738, 127
        %v2748 = vpop.permute.xlu0 %2747
        %2749 = vrot.lane.b32.xlu0 %v2739, 127
        %v2750 = vpop.permute.xlu0 %2749
        %2751 = vrot.lane.b32.xlu0 %v2740, 127
        %v2752 = vpop.permute.xlu0 %2751
        %v2757 = vadd.f32 %v2653, %v2746
        %v2758 = vadd.f32 %v2654, %v2748
        %v2759 = vadd.f32 %v2655, %v2750
        %v2760 = vadd.f32 %v2656, %v2752
        %s2761 = sld [smem:[#allocation7 + $0x14]]
        %v2762 = vstv %s2761
        %v2763 = vmul.f32 %v2762, %v2613
        %v2764 = vmul.f32 %v2762, %v2614
        %v2765 = vmul.f32 %v2762, %v2615
        %v2766 = vmul.f32 %v2762, %v2616
        %2771 = vrot.lane.b32.xlu0 %v2763, 126
        %v2772 = vpop.permute.xlu0 %2771
        %2773 = vrot.lane.b32.xlu0 %v2764, 126
        %v2774 = vpop.permute.xlu0 %2773
        %2775 = vrot.lane.b32.xlu0 %v2765, 126
        %v2776 = vpop.permute.xlu0 %2775
        %2777 = vrot.lane.b32.xlu0 %v2766, 126
        %v2778 = vpop.permute.xlu0 %2777
        %v2783 = vadd.f32 %v2679, %v2772
        %v2784 = vadd.f32 %v2680, %v2774
        %v2785 = vadd.f32 %v2681, %v2776
        %v2786 = vadd.f32 %v2682, %v2778
        %s2787 = sld [smem:[#allocation7 + $0x38]]
        %v2788 = vstv %s2787
        %v2789 = vmul.f32 %v2788, %v2613
        %v2790 = vmul.f32 %v2788, %v2614
        %v2791 = vmul.f32 %v2788, %v2615
        %v2792 = vmul.f32 %v2788, %v2616
        %2797 = vrot.lane.b32.xlu0 %v2789, 126
        %v2798 = vpop.permute.xlu0 %2797
        %2799 = vrot.lane.b32.xlu0 %v2790, 126
        %v2800 = vpop.permute.xlu0 %2799
        %2801 = vrot.lane.b32.xlu0 %v2791, 126
        %v2802 = vpop.permute.xlu0 %2801
        %2803 = vrot.lane.b32.xlu0 %v2792, 126
        %v2804 = vpop.permute.xlu0 %2803
        %v2809 = vadd.f32 %v2705, %v2798
        %v2810 = vadd.f32 %v2706, %v2800
        %v2811 = vadd.f32 %v2707, %v2802
        %v2812 = vadd.f32 %v2708, %v2804
        %s2813 = sld [smem:[#allocation7 + $0x5c]]
        %v2814 = vstv %s2813
        %v2815 = vmul.f32 %v2814, %v2613
        %v2816 = vmul.f32 %v2814, %v2614
        %v2817 = vmul.f32 %v2814, %v2615
        %v2818 = vmul.f32 %v2814, %v2616
        %2823 = vrot.lane.b32.xlu0 %v2815, 126
        %v2824 = vpop.permute.xlu0 %2823
        %2825 = vrot.lane.b32.xlu0 %v2816, 126
        %v2826 = vpop.permute.xlu0 %2825
        %2827 = vrot.lane.b32.xlu0 %v2817, 126
        %v2828 = vpop.permute.xlu0 %2827
        %2829 = vrot.lane.b32.xlu0 %v2818, 126
        %v2830 = vpop.permute.xlu0 %2829
        %v2835 = vadd.f32 %v2731, %v2824
        %v2836 = vadd.f32 %v2732, %v2826
        %v2837 = vadd.f32 %v2733, %v2828
        %v2838 = vadd.f32 %v2734, %v2830
        %s2839 = sld [smem:[#allocation7 + $0x80]]
        %v2840 = vstv %s2839
        %v2841 = vmul.f32 %v2840, %v2613
        %v2842 = vmul.f32 %v2840, %v2614
        %v2843 = vmul.f32 %v2840, %v2615
        %v2844 = vmul.f32 %v2840, %v2616
        %2849 = vrot.lane.b32.xlu0 %v2841, 126
        %v2850 = vpop.permute.xlu0 %2849
        %2851 = vrot.lane.b32.xlu0 %v2842, 126
        %v2852 = vpop.permute.xlu0 %2851
        %2853 = vrot.lane.b32.xlu0 %v2843, 126
        %v2854 = vpop.permute.xlu0 %2853
        %2855 = vrot.lane.b32.xlu0 %v2844, 126
        %v2856 = vpop.permute.xlu0 %2855
        %v2861 = vadd.f32 %v2757, %v2850
        %v2862 = vadd.f32 %v2758, %v2852
        %v2863 = vadd.f32 %v2759, %v2854
        %v2864 = vadd.f32 %v2760, %v2856
        %v2865 = vld [vmem:[%s883 + $0x1] sm:$0xff]
        %v2866 = vld [vmem:[%s883 + $0x9] sm:$0xff]
        %v2867 = vld [vmem:[%s883 + $0x11] sm:$0xff]
        %v2868 = vld [vmem:[%s883 + $0x19] sm:$0xff]
        %s2869 = sld [smem:[#allocation7 + $0x15]]
        %v2870 = vstv %s2869
        %v2871 = vmul.f32 %v2870, %v2865
        %v2872 = vmul.f32 %v2870, %v2866
        %v2873 = vmul.f32 %v2870, %v2867
        %v2874 = vmul.f32 %v2870, %v2868
        %v2875 = vadd.f32 %v2783, %v2871
        %v2876 = vadd.f32 %v2784, %v2872
        %v2877 = vadd.f32 %v2785, %v2873
        %v2878 = vadd.f32 %v2786, %v2874
        %s2879 = sld [smem:[#allocation7 + $0x39]]
        %v2880 = vstv %s2879
        %v2881 = vmul.f32 %v2880, %v2865
        %v2882 = vmul.f32 %v2880, %v2866
        %v2883 = vmul.f32 %v2880, %v2867
        %v2884 = vmul.f32 %v2880, %v2868
        %v2885 = vadd.f32 %v2809, %v2881
        %v2886 = vadd.f32 %v2810, %v2882
        %v2887 = vadd.f32 %v2811, %v2883
        %v2888 = vadd.f32 %v2812, %v2884
        %s2889 = sld [smem:[#allocation7 + $0x5d]]
        %v2890 = vstv %s2889
        %v2891 = vmul.f32 %v2890, %v2865
        %v2892 = vmul.f32 %v2890, %v2866
        %v2893 = vmul.f32 %v2890, %v2867
        %v2894 = vmul.f32 %v2890, %v2868
        %v2895 = vadd.f32 %v2835, %v2891
        %v2896 = vadd.f32 %v2836, %v2892
        %v2897 = vadd.f32 %v2837, %v2893
        %v2898 = vadd.f32 %v2838, %v2894
        %s2899 = sld [smem:[#allocation7 + $0x81]]
        %v2900 = vstv %s2899
        %v2901 = vmul.f32 %v2900, %v2865
        %v2902 = vmul.f32 %v2900, %v2866
        %v2903 = vmul.f32 %v2900, %v2867
        %v2904 = vmul.f32 %v2900, %v2868
        %v2905 = vadd.f32 %v2861, %v2901
        %v2906 = vadd.f32 %v2862, %v2902
        %v2907 = vadd.f32 %v2863, %v2903
        %v2908 = vadd.f32 %v2864, %v2904
        %s2909 = sld [smem:[#allocation7 + $0x16]]
        %v2910 = vstv %s2909
        %v2911 = vmul.f32 %v2910, %v2865
        %v2912 = vmul.f32 %v2910, %v2866
        %v2913 = vmul.f32 %v2910, %v2867
        %v2914 = vmul.f32 %v2910, %v2868
        %2919 = vrot.lane.b32.xlu0 %v2911, 127
        %v2920 = vpop.permute.xlu0 %2919
        %2921 = vrot.lane.b32.xlu0 %v2912, 127
        %v2922 = vpop.permute.xlu0 %2921
        %2923 = vrot.lane.b32.xlu0 %v2913, 127
        %v2924 = vpop.permute.xlu0 %2923
        %2925 = vrot.lane.b32.xlu0 %v2914, 127
        %v2926 = vpop.permute.xlu0 %2925
        %v2931 = vadd.f32 %v2875, %v2920
        %v2932 = vadd.f32 %v2876, %v2922
        %v2933 = vadd.f32 %v2877, %v2924
        %v2934 = vadd.f32 %v2878, %v2926
        %s2935 = sld [smem:[#allocation7 + $0x3a]]
        %v2936 = vstv %s2935
        %v2937 = vmul.f32 %v2936, %v2865
        %v2938 = vmul.f32 %v2936, %v2866
        %v2939 = vmul.f32 %v2936, %v2867
        %v2940 = vmul.f32 %v2936, %v2868
        %2945 = vrot.lane.b32.xlu0 %v2937, 127
        %v2946 = vpop.permute.xlu0 %2945
        %2947 = vrot.lane.b32.xlu0 %v2938, 127
        %v2948 = vpop.permute.xlu0 %2947
        %2949 = vrot.lane.b32.xlu0 %v2939, 127
        %v2950 = vpop.permute.xlu0 %2949
        %2951 = vrot.lane.b32.xlu0 %v2940, 127
        %v2952 = vpop.permute.xlu0 %2951
        %v2957 = vadd.f32 %v2885, %v2946
        %v2958 = vadd.f32 %v2886, %v2948
        %v2959 = vadd.f32 %v2887, %v2950
        %v2960 = vadd.f32 %v2888, %v2952
        %s2961 = sld [smem:[#allocation7 + $0x5e]]
        %v2962 = vstv %s2961
        %v2963 = vmul.f32 %v2962, %v2865
        %v2964 = vmul.f32 %v2962, %v2866
        %v2965 = vmul.f32 %v2962, %v2867
        %v2966 = vmul.f32 %v2962, %v2868
        %2971 = vrot.lane.b32.xlu0 %v2963, 127
        %v2972 = vpop.permute.xlu0 %2971
        %2973 = vrot.lane.b32.xlu0 %v2964, 127
        %v2974 = vpop.permute.xlu0 %2973
        %2975 = vrot.lane.b32.xlu0 %v2965, 127
        %v2976 = vpop.permute.xlu0 %2975
        %2977 = vrot.lane.b32.xlu0 %v2966, 127
        %v2978 = vpop.permute.xlu0 %2977
        %v2983 = vadd.f32 %v2895, %v2972
        %v2984 = vadd.f32 %v2896, %v2974
        %v2985 = vadd.f32 %v2897, %v2976
        %v2986 = vadd.f32 %v2898, %v2978
        %s2987 = sld [smem:[#allocation7 + $0x82]]
        %v2988 = vstv %s2987
        %v2989 = vmul.f32 %v2988, %v2865
        %v2990 = vmul.f32 %v2988, %v2866
        %v2991 = vmul.f32 %v2988, %v2867
        %v2992 = vmul.f32 %v2988, %v2868
        %2997 = vrot.lane.b32.xlu0 %v2989, 127
        %v2998 = vpop.permute.xlu0 %2997
        %2999 = vrot.lane.b32.xlu0 %v2990, 127
        %v3000 = vpop.permute.xlu0 %2999
        %3001 = vrot.lane.b32.xlu0 %v2991, 127
        %v3002 = vpop.permute.xlu0 %3001
        %3003 = vrot.lane.b32.xlu0 %v2992, 127
        %v3004 = vpop.permute.xlu0 %3003
        %v3009 = vadd.f32 %v2905, %v2998
        %v3010 = vadd.f32 %v2906, %v3000
        %v3011 = vadd.f32 %v2907, %v3002
        %v3012 = vadd.f32 %v2908, %v3004
        %s3013 = sld [smem:[#allocation7 + $0x17]]
        %v3014 = vstv %s3013
        %v3015 = vmul.f32 %v3014, %v2865
        %v3016 = vmul.f32 %v3014, %v2866
        %v3017 = vmul.f32 %v3014, %v2867
        %v3018 = vmul.f32 %v3014, %v2868
        %3023 = vrot.lane.b32.xlu0 %v3015, 126
        %v3024 = vpop.permute.xlu0 %3023
        %3025 = vrot.lane.b32.xlu0 %v3016, 126
        %v3026 = vpop.permute.xlu0 %3025
        %3027 = vrot.lane.b32.xlu0 %v3017, 126
        %v3028 = vpop.permute.xlu0 %3027
        %3029 = vrot.lane.b32.xlu0 %v3018, 126
        %v3030 = vpop.permute.xlu0 %3029
        %v3035 = vadd.f32 %v2931, %v3024
        %v3036 = vadd.f32 %v2932, %v3026
        %v3037 = vadd.f32 %v2933, %v3028
        %v3038 = vadd.f32 %v2934, %v3030
        %s3039 = sld [smem:[#allocation7 + $0x3b]]
        %v3040 = vstv %s3039
        %v3041 = vmul.f32 %v3040, %v2865
        %v3042 = vmul.f32 %v3040, %v2866
        %v3043 = vmul.f32 %v3040, %v2867
        %v3044 = vmul.f32 %v3040, %v2868
        %3049 = vrot.lane.b32.xlu0 %v3041, 126
        %v3050 = vpop.permute.xlu0 %3049
        %3051 = vrot.lane.b32.xlu0 %v3042, 126
        %v3052 = vpop.permute.xlu0 %3051
        %3053 = vrot.lane.b32.xlu0 %v3043, 126
        %v3054 = vpop.permute.xlu0 %3053
        %3055 = vrot.lane.b32.xlu0 %v3044, 126
        %v3056 = vpop.permute.xlu0 %3055
        %v3061 = vadd.f32 %v2957, %v3050
        %v3062 = vadd.f32 %v2958, %v3052
        %v3063 = vadd.f32 %v2959, %v3054
        %v3064 = vadd.f32 %v2960, %v3056
        %s3065 = sld [smem:[#allocation7 + $0x5f]]
        %v3066 = vstv %s3065
        %v3067 = vmul.f32 %v3066, %v2865
        %v3068 = vmul.f32 %v3066, %v2866
        %v3069 = vmul.f32 %v3066, %v2867
        %v3070 = vmul.f32 %v3066, %v2868
        %3075 = vrot.lane.b32.xlu0 %v3067, 126
        %v3076 = vpop.permute.xlu0 %3075
        %3077 = vrot.lane.b32.xlu0 %v3068, 126
        %v3078 = vpop.permute.xlu0 %3077
        %3079 = vrot.lane.b32.xlu0 %v3069, 126
        %v3080 = vpop.permute.xlu0 %3079
        %3081 = vrot.lane.b32.xlu0 %v3070, 126
        %v3082 = vpop.permute.xlu0 %3081
        %v3087 = vadd.f32 %v2983, %v3076
        %v3088 = vadd.f32 %v2984, %v3078
        %v3089 = vadd.f32 %v2985, %v3080
        %v3090 = vadd.f32 %v2986, %v3082
        %s3091 = sld [smem:[#allocation7 + $0x83]]
        %v3092 = vstv %s3091
        %v3093 = vmul.f32 %v3092, %v2865
        %v3094 = vmul.f32 %v3092, %v2866
        %v3095 = vmul.f32 %v3092, %v2867
        %v3096 = vmul.f32 %v3092, %v2868
        %3101 = vrot.lane.b32.xlu0 %v3093, 126
        %v3102 = vpop.permute.xlu0 %3101
        %3103 = vrot.lane.b32.xlu0 %v3094, 126
        %v3104 = vpop.permute.xlu0 %3103
        %3105 = vrot.lane.b32.xlu0 %v3095, 126
        %v3106 = vpop.permute.xlu0 %3105
        %3107 = vrot.lane.b32.xlu0 %v3096, 126
        %v3108 = vpop.permute.xlu0 %3107
        %v3113 = vadd.f32 %v3009, %v3102
        %v3114 = vadd.f32 %v3010, %v3104
        %v3115 = vadd.f32 %v3011, %v3106
        %v3116 = vadd.f32 %v3012, %v3108
        %v3117 = vld [vmem:[%s883 + $0x2] sm:$0xff]
        %v3118 = vld [vmem:[%s883 + $0xa] sm:$0xff]
        %v3119 = vld [vmem:[%s883 + $0x12] sm:$0xff]
        %v3120 = vld [vmem:[%s883 + $0x1a] sm:$0xff]
        %s3121 = sld [smem:[#allocation7 + $0x18]]
        %v3122 = vstv %s3121
        %v3123 = vmul.f32 %v3122, %v3117
        %v3124 = vmul.f32 %v3122, %v3118
        %v3125 = vmul.f32 %v3122, %v3119
        %v3126 = vmul.f32 %v3122, %v3120
        %v3127 = vadd.f32 %v3035, %v3123
        %v3128 = vadd.f32 %v3036, %v3124
        %v3129 = vadd.f32 %v3037, %v3125
        %v3130 = vadd.f32 %v3038, %v3126
        %s3131 = sld [smem:[#allocation7 + $0x3c]]
        %v3132 = vstv %s3131
        %v3133 = vmul.f32 %v3132, %v3117
        %v3134 = vmul.f32 %v3132, %v3118
        %v3135 = vmul.f32 %v3132, %v3119
        %v3136 = vmul.f32 %v3132, %v3120
        %v3137 = vadd.f32 %v3061, %v3133
        %v3138 = vadd.f32 %v3062, %v3134
        %v3139 = vadd.f32 %v3063, %v3135
        %v3140 = vadd.f32 %v3064, %v3136
        %s3141 = sld [smem:[#allocation7 + $0x60]]
        %v3142 = vstv %s3141
        %v3143 = vmul.f32 %v3142, %v3117
        %v3144 = vmul.f32 %v3142, %v3118
        %v3145 = vmul.f32 %v3142, %v3119
        %v3146 = vmul.f32 %v3142, %v3120
        %v3147 = vadd.f32 %v3087, %v3143
        %v3148 = vadd.f32 %v3088, %v3144
        %v3149 = vadd.f32 %v3089, %v3145
        %v3150 = vadd.f32 %v3090, %v3146
        %s3151 = sld [smem:[#allocation7 + $0x84]]
        %v3152 = vstv %s3151
        %v3153 = vmul.f32 %v3152, %v3117
        %v3154 = vmul.f32 %v3152, %v3118
        %v3155 = vmul.f32 %v3152, %v3119
        %v3156 = vmul.f32 %v3152, %v3120
        %v3157 = vadd.f32 %v3113, %v3153
        %v3158 = vadd.f32 %v3114, %v3154
        %v3159 = vadd.f32 %v3115, %v3155
        %v3160 = vadd.f32 %v3116, %v3156
        %s3161 = sld [smem:[#allocation7 + $0x19]]
        %v3162 = vstv %s3161
        %v3163 = vmul.f32 %v3162, %v3117
        %v3164 = vmul.f32 %v3162, %v3118
        %v3165 = vmul.f32 %v3162, %v3119
        %v3166 = vmul.f32 %v3162, %v3120
        %3171 = vrot.lane.b32.xlu0 %v3163, 127
        %v3172 = vpop.permute.xlu0 %3171
        %3173 = vrot.lane.b32.xlu0 %v3164, 127
        %v3174 = vpop.permute.xlu0 %3173
        %3175 = vrot.lane.b32.xlu0 %v3165, 127
        %v3176 = vpop.permute.xlu0 %3175
        %3177 = vrot.lane.b32.xlu0 %v3166, 127
        %v3178 = vpop.permute.xlu0 %3177
        %v3183 = vadd.f32 %v3127, %v3172
        %v3184 = vadd.f32 %v3128, %v3174
        %v3185 = vadd.f32 %v3129, %v3176
        %v3186 = vadd.f32 %v3130, %v3178
        %s3187 = sld [smem:[#allocation7 + $0x3d]]
        %v3188 = vstv %s3187
        %v3189 = vmul.f32 %v3188, %v3117
        %v3190 = vmul.f32 %v3188, %v3118
        %v3191 = vmul.f32 %v3188, %v3119
        %v3192 = vmul.f32 %v3188, %v3120
        %3197 = vrot.lane.b32.xlu0 %v3189, 127
        %v3198 = vpop.permute.xlu0 %3197
        %3199 = vrot.lane.b32.xlu0 %v3190, 127
        %v3200 = vpop.permute.xlu0 %3199
        %3201 = vrot.lane.b32.xlu0 %v3191, 127
        %v3202 = vpop.permute.xlu0 %3201
        %3203 = vrot.lane.b32.xlu0 %v3192, 127
        %v3204 = vpop.permute.xlu0 %3203
        %v3209 = vadd.f32 %v3137, %v3198
        %v3210 = vadd.f32 %v3138, %v3200
        %v3211 = vadd.f32 %v3139, %v3202
        %v3212 = vadd.f32 %v3140, %v3204
        %s3213 = sld [smem:[#allocation7 + $0x61]]
        %v3214 = vstv %s3213
        %v3215 = vmul.f32 %v3214, %v3117
        %v3216 = vmul.f32 %v3214, %v3118
        %v3217 = vmul.f32 %v3214, %v3119
        %v3218 = vmul.f32 %v3214, %v3120
        %3223 = vrot.lane.b32.xlu0 %v3215, 127
        %v3224 = vpop.permute.xlu0 %3223
        %3225 = vrot.lane.b32.xlu0 %v3216, 127
        %v3226 = vpop.permute.xlu0 %3225
        %3227 = vrot.lane.b32.xlu0 %v3217, 127
        %v3228 = vpop.permute.xlu0 %3227
        %3229 = vrot.lane.b32.xlu0 %v3218, 127
        %v3230 = vpop.permute.xlu0 %3229
        %v3235 = vadd.f32 %v3147, %v3224
        %v3236 = vadd.f32 %v3148, %v3226
        %v3237 = vadd.f32 %v3149, %v3228
        %v3238 = vadd.f32 %v3150, %v3230
        %s3239 = sld [smem:[#allocation7 + $0x85]]
        %v3240 = vstv %s3239
        %v3241 = vmul.f32 %v3240, %v3117
        %v3242 = vmul.f32 %v3240, %v3118
        %v3243 = vmul.f32 %v3240, %v3119
        %v3244 = vmul.f32 %v3240, %v3120
        %3249 = vrot.lane.b32.xlu0 %v3241, 127
        %v3250 = vpop.permute.xlu0 %3249
        %3251 = vrot.lane.b32.xlu0 %v3242, 127
        %v3252 = vpop.permute.xlu0 %3251
        %3253 = vrot.lane.b32.xlu0 %v3243, 127
        %v3254 = vpop.permute.xlu0 %3253
        %3255 = vrot.lane.b32.xlu0 %v3244, 127
        %v3256 = vpop.permute.xlu0 %3255
        %v3261 = vadd.f32 %v3157, %v3250
        %v3262 = vadd.f32 %v3158, %v3252
        %v3263 = vadd.f32 %v3159, %v3254
        %v3264 = vadd.f32 %v3160, %v3256
        %s3265 = sld [smem:[#allocation7 + $0x1a]]
        %v3266 = vstv %s3265
        %v3267 = vmul.f32 %v3266, %v3117
        %v3268 = vmul.f32 %v3266, %v3118
        %v3269 = vmul.f32 %v3266, %v3119
        %v3270 = vmul.f32 %v3266, %v3120
        %3275 = vrot.lane.b32.xlu0 %v3267, 126
        %v3276 = vpop.permute.xlu0 %3275
        %3277 = vrot.lane.b32.xlu0 %v3268, 126
        %v3278 = vpop.permute.xlu0 %3277
        %3279 = vrot.lane.b32.xlu0 %v3269, 126
        %v3280 = vpop.permute.xlu0 %3279
        %3281 = vrot.lane.b32.xlu0 %v3270, 126
        %v3282 = vpop.permute.xlu0 %3281
        %v3287 = vadd.f32 %v3183, %v3276
        %v3288 = vadd.f32 %v3184, %v3278
        %v3289 = vadd.f32 %v3185, %v3280
        %v3290 = vadd.f32 %v3186, %v3282
        %s3291 = sld [smem:[#allocation7 + $0x3e]]
        %v3292 = vstv %s3291
        %v3293 = vmul.f32 %v3292, %v3117
        %v3294 = vmul.f32 %v3292, %v3118
        %v3295 = vmul.f32 %v3292, %v3119
        %v3296 = vmul.f32 %v3292, %v3120
        %3301 = vrot.lane.b32.xlu0 %v3293, 126
        %v3302 = vpop.permute.xlu0 %3301
        %3303 = vrot.lane.b32.xlu0 %v3294, 126
        %v3304 = vpop.permute.xlu0 %3303
        %3305 = vrot.lane.b32.xlu0 %v3295, 126
        %v3306 = vpop.permute.xlu0 %3305
        %3307 = vrot.lane.b32.xlu0 %v3296, 126
        %v3308 = vpop.permute.xlu0 %3307
        %v3313 = vadd.f32 %v3209, %v3302
        %v3314 = vadd.f32 %v3210, %v3304
        %v3315 = vadd.f32 %v3211, %v3306
        %v3316 = vadd.f32 %v3212, %v3308
        %s3317 = sld [smem:[#allocation7 + $0x62]]
        %v3318 = vstv %s3317
        %v3319 = vmul.f32 %v3318, %v3117
        %v3320 = vmul.f32 %v3318, %v3118
        %v3321 = vmul.f32 %v3318, %v3119
        %v3322 = vmul.f32 %v3318, %v3120
        %3327 = vrot.lane.b32.xlu0 %v3319, 126
        %v3328 = vpop.permute.xlu0 %3327
        %3329 = vrot.lane.b32.xlu0 %v3320, 126
        %v3330 = vpop.permute.xlu0 %3329
        %3331 = vrot.lane.b32.xlu0 %v3321, 126
        %v3332 = vpop.permute.xlu0 %3331
        %3333 = vrot.lane.b32.xlu0 %v3322, 126
        %v3334 = vpop.permute.xlu0 %3333
        %v3339 = vadd.f32 %v3235, %v3328
        %v3340 = vadd.f32 %v3236, %v3330
        %v3341 = vadd.f32 %v3237, %v3332
        %v3342 = vadd.f32 %v3238, %v3334
        %s3343 = sld [smem:[#allocation7 + $0x86]]
        %v3344 = vstv %s3343
        %v3345 = vmul.f32 %v3344, %v3117
        %v3346 = vmul.f32 %v3344, %v3118
        %v3347 = vmul.f32 %v3344, %v3119
        %v3348 = vmul.f32 %v3344, %v3120
        %3353 = vrot.lane.b32.xlu0 %v3345, 126
        %v3354 = vpop.permute.xlu0 %3353
        %3355 = vrot.lane.b32.xlu0 %v3346, 126
        %v3356 = vpop.permute.xlu0 %3355
        %3357 = vrot.lane.b32.xlu0 %v3347, 126
        %v3358 = vpop.permute.xlu0 %3357
        %3359 = vrot.lane.b32.xlu0 %v3348, 126
        %v3360 = vpop.permute.xlu0 %3359
        %v3365 = vadd.f32 %v3261, %v3354
        %v3366 = vadd.f32 %v3262, %v3356
        %v3367 = vadd.f32 %v3263, %v3358
        %v3368 = vadd.f32 %v3264, %v3360
        %v3369 = vld [vmem:[%s1087] sm:$0xff]
        %v3370 = vld [vmem:[%s1087 + $0x8] sm:$0xff]
        %v3371 = vld [vmem:[%s1087 + $0x10] sm:$0xff]
        %v3372 = vld [vmem:[%s1087 + $0x18] sm:$0xff]
        %s3373 = sld [smem:[#allocation7 + $0x1b]]
        %v3374 = vstv %s3373
        %v3375 = vmul.f32 %v3374, %v3369
        %v3376 = vmul.f32 %v3374, %v3370
        %v3377 = vmul.f32 %v3374, %v3371
        %v3378 = vmul.f32 %v3374, %v3372
        %v3379 = vadd.f32 %v3287, %v3375
        %v3380 = vadd.f32 %v3288, %v3376
        %v3381 = vadd.f32 %v3289, %v3377
        %v3382 = vadd.f32 %v3290, %v3378
        %s3383 = sld [smem:[#allocation7 + $0x3f]]
        %v3384 = vstv %s3383
        %v3385 = vmul.f32 %v3384, %v3369
        %v3386 = vmul.f32 %v3384, %v3370
        %v3387 = vmul.f32 %v3384, %v3371
        %v3388 = vmul.f32 %v3384, %v3372
        %v3389 = vadd.f32 %v3313, %v3385
        %v3390 = vadd.f32 %v3314, %v3386
        %v3391 = vadd.f32 %v3315, %v3387
        %v3392 = vadd.f32 %v3316, %v3388
        %s3393 = sld [smem:[#allocation7 + $0x63]]
        %v3394 = vstv %s3393
        %v3395 = vmul.f32 %v3394, %v3369
        %v3396 = vmul.f32 %v3394, %v3370
        %v3397 = vmul.f32 %v3394, %v3371
        %v3398 = vmul.f32 %v3394, %v3372
        %v3399 = vadd.f32 %v3339, %v3395
        %v3400 = vadd.f32 %v3340, %v3396
        %v3401 = vadd.f32 %v3341, %v3397
        %v3402 = vadd.f32 %v3342, %v3398
        %s3403 = sld [smem:[#allocation7 + $0x87]]
        %v3404 = vstv %s3403
        %v3405 = vmul.f32 %v3404, %v3369
        %v3406 = vmul.f32 %v3404, %v3370
        %v3407 = vmul.f32 %v3404, %v3371
        %v3408 = vmul.f32 %v3404, %v3372
        %v3409 = vadd.f32 %v3365, %v3405
        %v3410 = vadd.f32 %v3366, %v3406
        %v3411 = vadd.f32 %v3367, %v3407
        %v3412 = vadd.f32 %v3368, %v3408
        %s3413 = sld [smem:[#allocation7 + $0x1c]]
        %v3414 = vstv %s3413
        %v3415 = vmul.f32 %v3414, %v3369
        %v3416 = vmul.f32 %v3414, %v3370
        %v3417 = vmul.f32 %v3414, %v3371
        %v3418 = vmul.f32 %v3414, %v3372
        %3423 = vrot.lane.b32.xlu0 %v3415, 127
        %v3424 = vpop.permute.xlu0 %3423
        %3425 = vrot.lane.b32.xlu0 %v3416, 127
        %v3426 = vpop.permute.xlu0 %3425
        %3427 = vrot.lane.b32.xlu0 %v3417, 127
        %v3428 = vpop.permute.xlu0 %3427
        %3429 = vrot.lane.b32.xlu0 %v3418, 127
        %v3430 = vpop.permute.xlu0 %3429
        %v3435 = vadd.f32 %v3379, %v3424
        %v3436 = vadd.f32 %v3380, %v3426
        %v3437 = vadd.f32 %v3381, %v3428
        %v3438 = vadd.f32 %v3382, %v3430
        %s3439 = sld [smem:[#allocation7 + $0x40]]
        %v3440 = vstv %s3439
        %v3441 = vmul.f32 %v3440, %v3369
        %v3442 = vmul.f32 %v3440, %v3370
        %v3443 = vmul.f32 %v3440, %v3371
        %v3444 = vmul.f32 %v3440, %v3372
        %3449 = vrot.lane.b32.xlu0 %v3441, 127
        %v3450 = vpop.permute.xlu0 %3449
        %3451 = vrot.lane.b32.xlu0 %v3442, 127
        %v3452 = vpop.permute.xlu0 %3451
        %3453 = vrot.lane.b32.xlu0 %v3443, 127
        %v3454 = vpop.permute.xlu0 %3453
        %3455 = vrot.lane.b32.xlu0 %v3444, 127
        %v3456 = vpop.permute.xlu0 %3455
        %v3461 = vadd.f32 %v3389, %v3450
        %v3462 = vadd.f32 %v3390, %v3452
        %v3463 = vadd.f32 %v3391, %v3454
        %v3464 = vadd.f32 %v3392, %v3456
        %s3465 = sld [smem:[#allocation7 + $0x64]]
        %v3466 = vstv %s3465
        %v3467 = vmul.f32 %v3466, %v3369
        %v3468 = vmul.f32 %v3466, %v3370
        %v3469 = vmul.f32 %v3466, %v3371
        %v3470 = vmul.f32 %v3466, %v3372
        %3475 = vrot.lane.b32.xlu0 %v3467, 127
        %v3476 = vpop.permute.xlu0 %3475
        %3477 = vrot.lane.b32.xlu0 %v3468, 127
        %v3478 = vpop.permute.xlu0 %3477
        %3479 = vrot.lane.b32.xlu0 %v3469, 127
        %v3480 = vpop.permute.xlu0 %3479
        %3481 = vrot.lane.b32.xlu0 %v3470, 127
        %v3482 = vpop.permute.xlu0 %3481
        %v3487 = vadd.f32 %v3399, %v3476
        %v3488 = vadd.f32 %v3400, %v3478
        %v3489 = vadd.f32 %v3401, %v3480
        %v3490 = vadd.f32 %v3402, %v3482
        %s3491 = sld [smem:[#allocation7 + $0x88]]
        %v3492 = vstv %s3491
        %v3493 = vmul.f32 %v3492, %v3369
        %v3494 = vmul.f32 %v3492, %v3370
        %v3495 = vmul.f32 %v3492, %v3371
        %v3496 = vmul.f32 %v3492, %v3372
        %3501 = vrot.lane.b32.xlu0 %v3493, 127
        %v3502 = vpop.permute.xlu0 %3501
        %3503 = vrot.lane.b32.xlu0 %v3494, 127
        %v3504 = vpop.permute.xlu0 %3503
        %3505 = vrot.lane.b32.xlu0 %v3495, 127
        %v3506 = vpop.permute.xlu0 %3505
        %3507 = vrot.lane.b32.xlu0 %v3496, 127
        %v3508 = vpop.permute.xlu0 %3507
        %v3513 = vadd.f32 %v3409, %v3502
        %v3514 = vadd.f32 %v3410, %v3504
        %v3515 = vadd.f32 %v3411, %v3506
        %v3516 = vadd.f32 %v3412, %v3508
        %s3517 = sld [smem:[#allocation7 + $0x1d]]
        %v3518 = vstv %s3517
        %v3519 = vmul.f32 %v3518, %v3369
        %v3520 = vmul.f32 %v3518, %v3370
        %v3521 = vmul.f32 %v3518, %v3371
        %v3522 = vmul.f32 %v3518, %v3372
        %3527 = vrot.lane.b32.xlu0 %v3519, 126
        %v3528 = vpop.permute.xlu0 %3527
        %3529 = vrot.lane.b32.xlu0 %v3520, 126
        %v3530 = vpop.permute.xlu0 %3529
        %3531 = vrot.lane.b32.xlu0 %v3521, 126
        %v3532 = vpop.permute.xlu0 %3531
        %3533 = vrot.lane.b32.xlu0 %v3522, 126
        %v3534 = vpop.permute.xlu0 %3533
        %v3539 = vadd.f32 %v3435, %v3528
        %v3540 = vadd.f32 %v3436, %v3530
        %v3541 = vadd.f32 %v3437, %v3532
        %v3542 = vadd.f32 %v3438, %v3534
        %s3543 = sld [smem:[#allocation7 + $0x41]]
        %v3544 = vstv %s3543
        %v3545 = vmul.f32 %v3544, %v3369
        %v3546 = vmul.f32 %v3544, %v3370
        %v3547 = vmul.f32 %v3544, %v3371
        %v3548 = vmul.f32 %v3544, %v3372
        %3553 = vrot.lane.b32.xlu0 %v3545, 126
        %v3554 = vpop.permute.xlu0 %3553
        %3555 = vrot.lane.b32.xlu0 %v3546, 126
        %v3556 = vpop.permute.xlu0 %3555
        %3557 = vrot.lane.b32.xlu0 %v3547, 126
        %v3558 = vpop.permute.xlu0 %3557
        %3559 = vrot.lane.b32.xlu0 %v3548, 126
        %v3560 = vpop.permute.xlu0 %3559
        %v3565 = vadd.f32 %v3461, %v3554
        %v3566 = vadd.f32 %v3462, %v3556
        %v3567 = vadd.f32 %v3463, %v3558
        %v3568 = vadd.f32 %v3464, %v3560
        %s3569 = sld [smem:[#allocation7 + $0x65]]
        %v3570 = vstv %s3569
        %v3571 = vmul.f32 %v3570, %v3369
        %v3572 = vmul.f32 %v3570, %v3370
        %v3573 = vmul.f32 %v3570, %v3371
        %v3574 = vmul.f32 %v3570, %v3372
        %3579 = vrot.lane.b32.xlu0 %v3571, 126
        %v3580 = vpop.permute.xlu0 %3579
        %3581 = vrot.lane.b32.xlu0 %v3572, 126
        %v3582 = vpop.permute.xlu0 %3581
        %3583 = vrot.lane.b32.xlu0 %v3573, 126
        %v3584 = vpop.permute.xlu0 %3583
        %3585 = vrot.lane.b32.xlu0 %v3574, 126
        %v3586 = vpop.permute.xlu0 %3585
        %v3591 = vadd.f32 %v3487, %v3580
        %v3592 = vadd.f32 %v3488, %v3582
        %v3593 = vadd.f32 %v3489, %v3584
        %v3594 = vadd.f32 %v3490, %v3586
        %s3595 = sld [smem:[#allocation7 + $0x89]]
        %v3596 = vstv %s3595
        %v3597 = vmul.f32 %v3596, %v3369
        %v3598 = vmul.f32 %v3596, %v3370
        %v3599 = vmul.f32 %v3596, %v3371
        %v3600 = vmul.f32 %v3596, %v3372
        %3605 = vrot.lane.b32.xlu0 %v3597, 126
        %v3606 = vpop.permute.xlu0 %3605
        %3607 = vrot.lane.b32.xlu0 %v3598, 126
        %v3608 = vpop.permute.xlu0 %3607
        %3609 = vrot.lane.b32.xlu0 %v3599, 126
        %v3610 = vpop.permute.xlu0 %3609
        %3611 = vrot.lane.b32.xlu0 %v3600, 126
        %v3612 = vpop.permute.xlu0 %3611
        %v3617 = vadd.f32 %v3513, %v3606
        %v3618 = vadd.f32 %v3514, %v3608
        %v3619 = vadd.f32 %v3515, %v3610
        %v3620 = vadd.f32 %v3516, %v3612
        %v3621 = vld [vmem:[%s1087 + $0x1] sm:$0xff]
        %v3622 = vld [vmem:[%s1087 + $0x9] sm:$0xff]
        %v3623 = vld [vmem:[%s1087 + $0x11] sm:$0xff]
        %v3624 = vld [vmem:[%s1087 + $0x19] sm:$0xff]
        %s3625 = sld [smem:[#allocation7 + $0x1e]]
        %v3626 = vstv %s3625
        %v3627 = vmul.f32 %v3626, %v3621
        %v3628 = vmul.f32 %v3626, %v3622
        %v3629 = vmul.f32 %v3626, %v3623
        %v3630 = vmul.f32 %v3626, %v3624
        %v3631 = vadd.f32 %v3539, %v3627
        %v3632 = vadd.f32 %v3540, %v3628
        %v3633 = vadd.f32 %v3541, %v3629
        %v3634 = vadd.f32 %v3542, %v3630
        %s3635 = sld [smem:[#allocation7 + $0x42]]
        %v3636 = vstv %s3635
        %v3637 = vmul.f32 %v3636, %v3621
        %v3638 = vmul.f32 %v3636, %v3622
        %v3639 = vmul.f32 %v3636, %v3623
        %v3640 = vmul.f32 %v3636, %v3624
        %v3641 = vadd.f32 %v3565, %v3637
        %v3642 = vadd.f32 %v3566, %v3638
        %v3643 = vadd.f32 %v3567, %v3639
        %v3644 = vadd.f32 %v3568, %v3640
        %s3645 = sld [smem:[#allocation7 + $0x66]]
        %v3646 = vstv %s3645
        %v3647 = vmul.f32 %v3646, %v3621
        %v3648 = vmul.f32 %v3646, %v3622
        %v3649 = vmul.f32 %v3646, %v3623
        %v3650 = vmul.f32 %v3646, %v3624
        %v3651 = vadd.f32 %v3591, %v3647
        %v3652 = vadd.f32 %v3592, %v3648
        %v3653 = vadd.f32 %v3593, %v3649
        %v3654 = vadd.f32 %v3594, %v3650
        %s3655 = sld [smem:[#allocation7 + $0x8a]]
        %v3656 = vstv %s3655
        %v3657 = vmul.f32 %v3656, %v3621
        %v3658 = vmul.f32 %v3656, %v3622
        %v3659 = vmul.f32 %v3656, %v3623
        %v3660 = vmul.f32 %v3656, %v3624
        %v3661 = vadd.f32 %v3617, %v3657
        %v3662 = vadd.f32 %v3618, %v3658
        %v3663 = vadd.f32 %v3619, %v3659
        %v3664 = vadd.f32 %v3620, %v3660
        %s3665 = sld [smem:[#allocation7 + $0x1f]]
        %v3666 = vstv %s3665
        %v3667 = vmul.f32 %v3666, %v3621
        %v3668 = vmul.f32 %v3666, %v3622
        %v3669 = vmul.f32 %v3666, %v3623
        %v3670 = vmul.f32 %v3666, %v3624
        %3675 = vrot.lane.b32.xlu0 %v3667, 127
        %v3676 = vpop.permute.xlu0 %3675
        %3677 = vrot.lane.b32.xlu0 %v3668, 127
        %v3678 = vpop.permute.xlu0 %3677
        %3679 = vrot.lane.b32.xlu0 %v3669, 127
        %v3680 = vpop.permute.xlu0 %3679
        %3681 = vrot.lane.b32.xlu0 %v3670, 127
        %v3682 = vpop.permute.xlu0 %3681
        %v3687 = vadd.f32 %v3631, %v3676
        %v3688 = vadd.f32 %v3632, %v3678
        %v3689 = vadd.f32 %v3633, %v3680
        %v3690 = vadd.f32 %v3634, %v3682
        %s3691 = sld [smem:[#allocation7 + $0x43]]
        %v3692 = vstv %s3691
        %v3693 = vmul.f32 %v3692, %v3621
        %v3694 = vmul.f32 %v3692, %v3622
        %v3695 = vmul.f32 %v3692, %v3623
        %v3696 = vmul.f32 %v3692, %v3624
        %3701 = vrot.lane.b32.xlu0 %v3693, 127
        %v3702 = vpop.permute.xlu0 %3701
        %3703 = vrot.lane.b32.xlu0 %v3694, 127
        %v3704 = vpop.permute.xlu0 %3703
        %3705 = vrot.lane.b32.xlu0 %v3695, 127
        %v3706 = vpop.permute.xlu0 %3705
        %3707 = vrot.lane.b32.xlu0 %v3696, 127
        %v3708 = vpop.permute.xlu0 %3707
        %v3713 = vadd.f32 %v3641, %v3702
        %v3714 = vadd.f32 %v3642, %v3704
        %v3715 = vadd.f32 %v3643, %v3706
        %v3716 = vadd.f32 %v3644, %v3708
        %s3717 = sld [smem:[#allocation7 + $0x67]]
        %v3718 = vstv %s3717
        %v3719 = vmul.f32 %v3718, %v3621
        %v3720 = vmul.f32 %v3718, %v3622
        %v3721 = vmul.f32 %v3718, %v3623
        %v3722 = vmul.f32 %v3718, %v3624
        %3727 = vrot.lane.b32.xlu0 %v3719, 127
        %v3728 = vpop.permute.xlu0 %3727
        %3729 = vrot.lane.b32.xlu0 %v3720, 127
        %v3730 = vpop.permute.xlu0 %3729
        %3731 = vrot.lane.b32.xlu0 %v3721, 127
        %v3732 = vpop.permute.xlu0 %3731
        %3733 = vrot.lane.b32.xlu0 %v3722, 127
        %v3734 = vpop.permute.xlu0 %3733
        %v3739 = vadd.f32 %v3651, %v3728
        %v3740 = vadd.f32 %v3652, %v3730
        %v3741 = vadd.f32 %v3653, %v3732
        %v3742 = vadd.f32 %v3654, %v3734
        %s3743 = sld [smem:[#allocation7 + $0x8b]]
        %v3744 = vstv %s3743
        %v3745 = vmul.f32 %v3744, %v3621
        %v3746 = vmul.f32 %v3744, %v3622
        %v3747 = vmul.f32 %v3744, %v3623
        %v3748 = vmul.f32 %v3744, %v3624
        %3753 = vrot.lane.b32.xlu0 %v3745, 127
        %v3754 = vpop.permute.xlu0 %3753
        %3755 = vrot.lane.b32.xlu0 %v3746, 127
        %v3756 = vpop.permute.xlu0 %3755
        %3757 = vrot.lane.b32.xlu0 %v3747, 127
        %v3758 = vpop.permute.xlu0 %3757
        %3759 = vrot.lane.b32.xlu0 %v3748, 127
        %v3760 = vpop.permute.xlu0 %3759
        %v3765 = vadd.f32 %v3661, %v3754
        %v3766 = vadd.f32 %v3662, %v3756
        %v3767 = vadd.f32 %v3663, %v3758
        %v3768 = vadd.f32 %v3664, %v3760
        %s3769 = sld [smem:[#allocation7 + $0x20]]
        %v3770 = vstv %s3769
        %v3771 = vmul.f32 %v3770, %v3621
        %v3772 = vmul.f32 %v3770, %v3622
        %v3773 = vmul.f32 %v3770, %v3623
        %v3774 = vmul.f32 %v3770, %v3624
        %3779 = vrot.lane.b32.xlu0 %v3771, 126
        %v3780 = vpop.permute.xlu0 %3779
        %3781 = vrot.lane.b32.xlu0 %v3772, 126
        %v3782 = vpop.permute.xlu0 %3781
        %3783 = vrot.lane.b32.xlu0 %v3773, 126
        %v3784 = vpop.permute.xlu0 %3783
        %3785 = vrot.lane.b32.xlu0 %v3774, 126
        %v3786 = vpop.permute.xlu0 %3785
        %v3791 = vadd.f32 %v3687, %v3780
        %v3792 = vadd.f32 %v3688, %v3782
        %v3793 = vadd.f32 %v3689, %v3784
        %v3794 = vadd.f32 %v3690, %v3786
        %s3795 = sld [smem:[#allocation7 + $0x44]]
        %v3796 = vstv %s3795
        %v3797 = vmul.f32 %v3796, %v3621
        %v3798 = vmul.f32 %v3796, %v3622
        %v3799 = vmul.f32 %v3796, %v3623
        %v3800 = vmul.f32 %v3796, %v3624
        %3805 = vrot.lane.b32.xlu0 %v3797, 126
        %v3806 = vpop.permute.xlu0 %3805
        %3807 = vrot.lane.b32.xlu0 %v3798, 126
        %v3808 = vpop.permute.xlu0 %3807
        %3809 = vrot.lane.b32.xlu0 %v3799, 126
        %v3810 = vpop.permute.xlu0 %3809
        %3811 = vrot.lane.b32.xlu0 %v3800, 126
        %v3812 = vpop.permute.xlu0 %3811
        %v3817 = vadd.f32 %v3713, %v3806
        %v3818 = vadd.f32 %v3714, %v3808
        %v3819 = vadd.f32 %v3715, %v3810
        %v3820 = vadd.f32 %v3716, %v3812
        %s3821 = sld [smem:[#allocation7 + $0x68]]
        %v3822 = vstv %s3821
        %v3823 = vmul.f32 %v3822, %v3621
        %v3824 = vmul.f32 %v3822, %v3622
        %v3825 = vmul.f32 %v3822, %v3623
        %v3826 = vmul.f32 %v3822, %v3624
        %3831 = vrot.lane.b32.xlu0 %v3823, 126
        %v3832 = vpop.permute.xlu0 %3831
        %3833 = vrot.lane.b32.xlu0 %v3824, 126
        %v3834 = vpop.permute.xlu0 %3833
        %3835 = vrot.lane.b32.xlu0 %v3825, 126
        %v3836 = vpop.permute.xlu0 %3835
        %3837 = vrot.lane.b32.xlu0 %v3826, 126
        %v3838 = vpop.permute.xlu0 %3837
        %v3843 = vadd.f32 %v3739, %v3832
        %v3844 = vadd.f32 %v3740, %v3834
        %v3845 = vadd.f32 %v3741, %v3836
        %v3846 = vadd.f32 %v3742, %v3838
        %s3847 = sld [smem:[#allocation7 + $0x8c]]
        %v3848 = vstv %s3847
        %v3849 = vmul.f32 %v3848, %v3621
        %v3850 = vmul.f32 %v3848, %v3622
        %v3851 = vmul.f32 %v3848, %v3623
        %v3852 = vmul.f32 %v3848, %v3624
        %3857 = vrot.lane.b32.xlu0 %v3849, 126
        %v3858 = vpop.permute.xlu0 %3857
        %3859 = vrot.lane.b32.xlu0 %v3850, 126
        %v3860 = vpop.permute.xlu0 %3859
        %3861 = vrot.lane.b32.xlu0 %v3851, 126
        %v3862 = vpop.permute.xlu0 %3861
        %3863 = vrot.lane.b32.xlu0 %v3852, 126
        %v3864 = vpop.permute.xlu0 %3863
        %v3869 = vadd.f32 %v3765, %v3858
        %v3870 = vadd.f32 %v3766, %v3860
        %v3871 = vadd.f32 %v3767, %v3862
        %v3872 = vadd.f32 %v3768, %v3864
        %v3873 = vld [vmem:[%s1087 + $0x2] sm:$0xff]
        %v3874 = vld [vmem:[%s1087 + $0xa] sm:$0xff]
        %v3875 = vld [vmem:[%s1087 + $0x12] sm:$0xff]
        %v3876 = vld [vmem:[%s1087 + $0x1a] sm:$0xff]
        %s3877 = sld [smem:[#allocation7 + $0x21]]
        %v3878 = vstv %s3877
        %v3879 = vmul.f32 %v3878, %v3873
        %v3880 = vmul.f32 %v3878, %v3874
        %v3881 = vmul.f32 %v3878, %v3875
        %v3882 = vmul.f32 %v3878, %v3876
        %v3883 = vadd.f32 %v3791, %v3879
        %v3884 = vadd.f32 %v3792, %v3880
        %v3885 = vadd.f32 %v3793, %v3881
        %v3886 = vadd.f32 %v3794, %v3882
        %s3887 = sld [smem:[#allocation7 + $0x45]]
        %v3888 = vstv %s3887
        %v3889 = vmul.f32 %v3888, %v3873
        %v3890 = vmul.f32 %v3888, %v3874
        %v3891 = vmul.f32 %v3888, %v3875
        %v3892 = vmul.f32 %v3888, %v3876
        %v3893 = vadd.f32 %v3817, %v3889
        %v3894 = vadd.f32 %v3818, %v3890
        %v3895 = vadd.f32 %v3819, %v3891
        %v3896 = vadd.f32 %v3820, %v3892
        %s3897 = sld [smem:[#allocation7 + $0x69]]
        %v3898 = vstv %s3897
        %v3899 = vmul.f32 %v3898, %v3873
        %v3900 = vmul.f32 %v3898, %v3874
        %v3901 = vmul.f32 %v3898, %v3875
        %v3902 = vmul.f32 %v3898, %v3876
        %v3903 = vadd.f32 %v3843, %v3899
        %v3904 = vadd.f32 %v3844, %v3900
        %v3905 = vadd.f32 %v3845, %v3901
        %v3906 = vadd.f32 %v3846, %v3902
        %s3907 = sld [smem:[#allocation7 + $0x8d]]
        %v3908 = vstv %s3907
        %v3909 = vmul.f32 %v3908, %v3873
        %v3910 = vmul.f32 %v3908, %v3874
        %v3911 = vmul.f32 %v3908, %v3875
        %v3912 = vmul.f32 %v3908, %v3876
        %v3913 = vadd.f32 %v3869, %v3909
        %v3914 = vadd.f32 %v3870, %v3910
        %v3915 = vadd.f32 %v3871, %v3911
        %v3916 = vadd.f32 %v3872, %v3912
        %s3917 = sld [smem:[#allocation7 + $0x22]]
        %v3918 = vstv %s3917
        %v3919 = vmul.f32 %v3918, %v3873
        %v3920 = vmul.f32 %v3918, %v3874
        %v3921 = vmul.f32 %v3918, %v3875
        %v3922 = vmul.f32 %v3918, %v3876
        %3927 = vrot.lane.b32.xlu0 %v3919, 127
        %v3928 = vpop.permute.xlu0 %3927
        %3929 = vrot.lane.b32.xlu0 %v3920, 127
        %v3930 = vpop.permute.xlu0 %3929
        %3931 = vrot.lane.b32.xlu0 %v3921, 127
        %v3932 = vpop.permute.xlu0 %3931
        %3933 = vrot.lane.b32.xlu0 %v3922, 127
        %v3934 = vpop.permute.xlu0 %3933
        %v3939 = vadd.f32 %v3883, %v3928
        %v3940 = vadd.f32 %v3884, %v3930
        %v3941 = vadd.f32 %v3885, %v3932
        %v3942 = vadd.f32 %v3886, %v3934
        %s3943 = sld [smem:[#allocation7 + $0x46]]
        %v3944 = vstv %s3943
        %v3945 = vmul.f32 %v3944, %v3873
        %v3946 = vmul.f32 %v3944, %v3874
        %v3947 = vmul.f32 %v3944, %v3875
        %v3948 = vmul.f32 %v3944, %v3876
        %3953 = vrot.lane.b32.xlu0 %v3945, 127
        %v3954 = vpop.permute.xlu0 %3953
        %3955 = vrot.lane.b32.xlu0 %v3946, 127
        %v3956 = vpop.permute.xlu0 %3955
        %3957 = vrot.lane.b32.xlu0 %v3947, 127
        %v3958 = vpop.permute.xlu0 %3957
        %3959 = vrot.lane.b32.xlu0 %v3948, 127
        %v3960 = vpop.permute.xlu0 %3959
        %v3965 = vadd.f32 %v3893, %v3954
        %v3966 = vadd.f32 %v3894, %v3956
        %v3967 = vadd.f32 %v3895, %v3958
        %v3968 = vadd.f32 %v3896, %v3960
        %s3969 = sld [smem:[#allocation7 + $0x6a]]
        %v3970 = vstv %s3969
        %v3971 = vmul.f32 %v3970, %v3873
        %v3972 = vmul.f32 %v3970, %v3874
        %v3973 = vmul.f32 %v3970, %v3875
        %v3974 = vmul.f32 %v3970, %v3876
        %3979 = vrot.lane.b32.xlu0 %v3971, 127
        %v3980 = vpop.permute.xlu0 %3979
        %3981 = vrot.lane.b32.xlu0 %v3972, 127
        %v3982 = vpop.permute.xlu0 %3981
        %3983 = vrot.lane.b32.xlu0 %v3973, 127
        %v3984 = vpop.permute.xlu0 %3983
        %3985 = vrot.lane.b32.xlu0 %v3974, 127
        %v3986 = vpop.permute.xlu0 %3985
        %v3991 = vadd.f32 %v3903, %v3980
        %v3992 = vadd.f32 %v3904, %v3982
        %v3993 = vadd.f32 %v3905, %v3984
        %v3994 = vadd.f32 %v3906, %v3986
        %s3995 = sld [smem:[#allocation7 + $0x8e]]
        %v3996 = vstv %s3995
        %v3997 = vmul.f32 %v3996, %v3873
        %v3998 = vmul.f32 %v3996, %v3874
        %v3999 = vmul.f32 %v3996, %v3875
        %v4000 = vmul.f32 %v3996, %v3876
        %4005 = vrot.lane.b32.xlu0 %v3997, 127
        %v4006 = vpop.permute.xlu0 %4005
        %4007 = vrot.lane.b32.xlu0 %v3998, 127
        %v4008 = vpop.permute.xlu0 %4007
        %4009 = vrot.lane.b32.xlu0 %v3999, 127
        %v4010 = vpop.permute.xlu0 %4009
        %4011 = vrot.lane.b32.xlu0 %v4000, 127
        %v4012 = vpop.permute.xlu0 %4011
        %v4017 = vadd.f32 %v3913, %v4006
        %v4018 = vadd.f32 %v3914, %v4008
        %v4019 = vadd.f32 %v3915, %v4010
        %v4020 = vadd.f32 %v3916, %v4012
        %s4021 = sld [smem:[#allocation7 + $0x23]]
        %v4022 = vstv %s4021
        %v4023 = vmul.f32 %v4022, %v3873
        %v4024 = vmul.f32 %v4022, %v3874
        %v4025 = vmul.f32 %v4022, %v3875
        %v4026 = vmul.f32 %v4022, %v3876
        %4031 = vrot.lane.b32.xlu0 %v4023, 126
        %v4032 = vpop.permute.xlu0 %4031
        %4033 = vrot.lane.b32.xlu0 %v4024, 126
        %v4034 = vpop.permute.xlu0 %4033
        %4035 = vrot.lane.b32.xlu0 %v4025, 126
        %v4036 = vpop.permute.xlu0 %4035
        %4037 = vrot.lane.b32.xlu0 %v4026, 126
        %v4038 = vpop.permute.xlu0 %4037
        %v4043 = vadd.f32 %v3939, %v4032
        %v4044 = vadd.f32 %v3940, %v4034
        %v4045 = vadd.f32 %v3941, %v4036
        %v4046 = vadd.f32 %v3942, %v4038
        %s4047 = sld [smem:[#allocation7 + $0x47]]
        %v4048 = vstv %s4047
        %v4049 = vmul.f32 %v4048, %v3873
        %v4050 = vmul.f32 %v4048, %v3874
        %v4051 = vmul.f32 %v4048, %v3875
        %v4052 = vmul.f32 %v4048, %v3876
        %4057 = vrot.lane.b32.xlu0 %v4049, 126
        %v4058 = vpop.permute.xlu0 %4057
        %4059 = vrot.lane.b32.xlu0 %v4050, 126
        %v4060 = vpop.permute.xlu0 %4059
        %4061 = vrot.lane.b32.xlu0 %v4051, 126
        %v4062 = vpop.permute.xlu0 %4061
        %4063 = vrot.lane.b32.xlu0 %v4052, 126
        %v4064 = vpop.permute.xlu0 %4063
        %v4069 = vadd.f32 %v3965, %v4058
        %v4070 = vadd.f32 %v3966, %v4060
        %v4071 = vadd.f32 %v3967, %v4062
        %v4072 = vadd.f32 %v3968, %v4064
        %s4073 = sld [smem:[#allocation7 + $0x6b]]
        %v4074 = vstv %s4073
        %v4075 = vmul.f32 %v4074, %v3873
        %v4076 = vmul.f32 %v4074, %v3874
        %v4077 = vmul.f32 %v4074, %v3875
        %v4078 = vmul.f32 %v4074, %v3876
        %4083 = vrot.lane.b32.xlu0 %v4075, 126
        %v4084 = vpop.permute.xlu0 %4083
        %4085 = vrot.lane.b32.xlu0 %v4076, 126
        %v4086 = vpop.permute.xlu0 %4085
        %4087 = vrot.lane.b32.xlu0 %v4077, 126
        %v4088 = vpop.permute.xlu0 %4087
        %4089 = vrot.lane.b32.xlu0 %v4078, 126
        %v4090 = vpop.permute.xlu0 %4089
        %v4095 = vadd.f32 %v3991, %v4084
        %v4096 = vadd.f32 %v3992, %v4086
        %v4097 = vadd.f32 %v3993, %v4088
        %v4098 = vadd.f32 %v3994, %v4090
        %s4099 = sld [smem:[#allocation7 + $0x8f]]
        %v4100 = vstv %s4099
        %v4101 = vmul.f32 %v4100, %v3873
        %v4102 = vmul.f32 %v4100, %v3874
        %v4103 = vmul.f32 %v4100, %v3875
        %v4104 = vmul.f32 %v4100, %v3876
        %4109 = vrot.lane.b32.xlu0 %v4101, 126
        %v4110 = vpop.permute.xlu0 %4109
        %4111 = vrot.lane.b32.xlu0 %v4102, 126
        %v4112 = vpop.permute.xlu0 %4111
        %4113 = vrot.lane.b32.xlu0 %v4103, 126
        %v4114 = vpop.permute.xlu0 %4113
        %4115 = vrot.lane.b32.xlu0 %v4104, 126
        %v4116 = vpop.permute.xlu0 %4115
        %v4121 = vadd.f32 %v4017, %v4110
        %v4122 = vadd.f32 %v4018, %v4112
        %v4123 = vadd.f32 %v4019, %v4114
        %v4124 = vadd.f32 %v4020, %v4116
        %vm4125 = vcmask 261120
        %4126 = vst.msk [vmem:[%s215] sm:$0xff] %vm4125, %v4043
        %4127 = vst.msk [vmem:[%s215 + $0x8] sm:$0xff] %vm4125, %v4044
        %4128 = vst.msk [vmem:[%s215 + $0x10] sm:$0xff] %vm4125, %v4045
        %4129 = vst.msk [vmem:[%s215 + $0x18] sm:$0xff] %vm4125, %v4046
        %s4130 = scalar_lea.vmem %s215, 32 [#allocation10]
        %4131 = vst.msk [vmem:[%s4130] sm:$0xff] %vm4125, %v4069
        %4132 = vst.msk [vmem:[%s4130 + $0x8] sm:$0xff] %vm4125, %v4070
        %4133 = vst.msk [vmem:[%s4130 + $0x10] sm:$0xff] %vm4125, %v4071
        %4134 = vst.msk [vmem:[%s4130 + $0x18] sm:$0xff] %vm4125, %v4072
        %s4135 = scalar_lea.vmem %s215, 64 [#allocation10]
        %4136 = vst.msk [vmem:[%s4135] sm:$0xff] %vm4125, %v4095
        %4137 = vst.msk [vmem:[%s4135 + $0x8] sm:$0xff] %vm4125, %v4096
        %4138 = vst.msk [vmem:[%s4135 + $0x10] sm:$0xff] %vm4125, %v4097
        %4139 = vst.msk [vmem:[%s4135 + $0x18] sm:$0xff] %vm4125, %v4098
        %s4140 = scalar_lea.vmem %s215, 96 [#allocation10]
        %4141 = vst.msk [vmem:[%s4140] sm:$0xff] %vm4125, %v4121
        %4142 = vst.msk [vmem:[%s4140 + $0x8] sm:$0xff] %vm4125, %v4122
        %4143 = vst.msk [vmem:[%s4140 + $0x10] sm:$0xff] %vm4125, %v4123
        %4144 = vst.msk [vmem:[%s4140 + $0x18] sm:$0xff] %vm4125, %v4124
        %s4145 = sand.u32 %s98, 1
        %s4146 = scalar_lea.sflag [#allocation5], %s4145
        %s4147 = sand.u32 %s98, 1
        %s4148 = smul.addr %s4147, 128
        %s4149 = scalar_lea.vmem [#allocation10], %s4148
        // Predicated region
        $region45: #{tpu_custom_call.1} parent=31 // pred_check
          %p4150 = pneg %p108
        $region46: #{tpu_custom_call.1} parent=31 // pred_check_branch
          %4152 = sbr.rel (%p4150) target = $region48
        $region47: #{tpu_custom_call.1} parent=31 // pred_region
          %s4154 = ssub.s32 2048, 2048
          %4155 = vsyncadd %s4146, %s4154
          %s4156 = smul.addr %s22, 16
          %s4157 = smul.addr %s4156, 128
          %s4158 = scalar_lea.hbm %s3, %s4157
          %s4159 = sshll.u32 %s4149, 4
          %s4160 = int_to_ptr.vmem [resolvable:$true] %s4159
          %4165 = dma.vmem_to_hbm [thread:$0]  %s4160, 2048, %s4158, %s4146, 128, 128, 8
        $region48: #{tpu_custom_call.1} parent=31 // pred_fallthru
          _
      $region32: #{tpu_custom_call.1} parent=5 // pred_fallthru
        _
      %p4166 = scmp.le.s32.totalorder 2, %s17
      // Predicated region
      $region49: #{tpu_custom_call.1} parent=5 // pred_check
        %p4167 = pneg %p4166
      $region50: #{tpu_custom_call.1} parent=5 // pred_check_branch
        %4169 = sbr.rel (%p4167) target = $region52
      $region51: #{tpu_custom_call.1} parent=5 // pred_region
        %s4170 = ssub.s32 %s17, 2
        // Predicated region
        $region53: #{tpu_custom_call.1} parent=51 // pred_check
          %p4171 = pneg %p114
        $region54: #{tpu_custom_call.1} parent=51 // pred_check_branch
          %4173 = sbr.rel (%p4171) target = $region56
        $region55: #{tpu_custom_call.1} parent=51 // pred_region
          %s4174 = sand.u32 %s99, 1
          %s4175 = scalar_lea.sflag [#allocation5], %s4174
          %s4176 = sand.u32 %s99, 1
          %s4177 = smul.addr %s4176, 128
          %s4178 = scalar_lea.vmem [#allocation10], %s4177
          %4179 = dma.done %s4175, 2048
        $region56: #{tpu_custom_call.1} parent=51 // pred_fallthru
          _
      $region52: #{tpu_custom_call.1} parent=5 // pred_fallthru
        _
    $region6: #{tpu_custom_call.1} parent=1 // loop_footer
      %s21 = sadd.s32 1, %s17
    $region7: #{tpu_custom_call.1} parent=1 // loop_footer_branch
      %16 = sbr.rel target = $region3
    $region8: #{tpu_custom_call.1} parent=1 // loop_exit
      _
    %4180 = vsyncpa [#allocation4], 1
    %s4181 = scalar_lea.sflag [#allocation4], 1
    %4182 = vsyncpa %s4181, 1
    %4183 = vsyncpa [#allocation5], 1
    %s4184 = scalar_lea.sflag [#allocation5], 1
    %4185 = vsyncpa %s4184, 1
    %4186 = vsyncpa [#allocation6], 1
    %s4187 = scalar_lea.sflag [#allocation6], 1
    %4188 = vsyncpa %s4187, 1
    %4189 = vsyncpa [#allocation9], 1

</llo_original>
